<compile_context>
chip_gen: v6e
topology: v6e:2x2x1
jax: 0.10.0
libtpu: 0.0.40
codegen_flags: <defaults>
</compile_context>

<pallas_src>
import numpy as np

import jax
import jax.numpy as jnp
from jax.experimental import pallas as pl
from jax.experimental.pallas import tpu as pltpu


# ---------------------------------------------------------------------------
# Fused VGG kernel: per grid step, one image runs conv1+pool1+conv2+conv3+pool2
# and the 3-layer classifier, entirely out of VMEM.
# ---------------------------------------------------------------------------
def vgg_kernel(x_ref,
               t1_ref, cb1_ref, s1e_ref, s1o_ref, r1e_ref, r1o_ref,
               t2_ref, cb2_ref,
               t3_ref, cb3_ref, s3e_ref, s3o_ref, r2e_ref, r2o_ref,
               w1_ref, fb1_ref, w2_ref, fb2_ref, w3_ref, fb3_ref,
               o_ref,
               xp1, xp2, xp3):
    f32 = jnp.float32

    # Zero the padded-input scratches (the halo rows/cols must be 0).  Cheap
    # (~20 KB of stores) and keeps the "parallel" grid semantics safe.
    xp1[...] = jnp.zeros((34, 34), f32)
    xp2[...] = jnp.zeros((18, 72), f32)
    xp3[...] = jnp.zeros((18, 144), f32)

    # ---- block1: Conv2d(1->4, 3x3, pad=1) + ReLU ---------------------------
    # xp1[i, u] holds input pixel (i-1, u-1); conv = 3 row-shifted matmuls
    # against block-Toeplitz matrices t1[kh] of shape (34, 32*4=128).
    xp1[1:33, 1:33] = x_ref[0]                                      # (32, 32)
    y = jnp.dot(xp1[0:32, :], t1_ref[0], preferred_element_type=f32)
    y = y + jnp.dot(xp1[1:33, :], t1_ref[1], preferred_element_type=f32)
    y = y + jnp.dot(xp1[2:34, :], t1_ref[2], preferred_element_type=f32)
    y = jnp.maximum(y + cb1_ref[...], 0.0)                          # (32, 128) = (h, w*4+c)

    # MaxPool 2x2: lane (w) pairing via 0/1 selection matmuls, row (h) pairing
    # via row-selection matmuls.
    p = jnp.maximum(jnp.dot(y, s1e_ref[...], preferred_element_type=f32),
                    jnp.dot(y, s1o_ref[...], preferred_element_type=f32))     # (32, 64)
    p = jnp.maximum(jnp.dot(r1e_ref[...], p, preferred_element_type=f32),
                    jnp.dot(r1o_ref[...], p, preferred_element_type=f32))     # (16, 64) = (h, w*4+c)

    # ---- block2: Conv2d(4->8)+ReLU, Conv2d(8->8)+ReLU, MaxPool 2x2 ---------
    xp2[1:17, 4:68] = p                                             # padded (18, 18*4)
    y = jnp.dot(xp2[0:16, :], t2_ref[0], preferred_element_type=f32)
    y = y + jnp.dot(xp2[1:17, :], t2_ref[1], preferred_element_type=f32)
    y = y + jnp.dot(xp2[2:18, :], t2_ref[2], preferred_element_type=f32)
    y = jnp.maximum(y + cb2_ref[...], 0.0)                          # (16, 128) = (h, w*8+c)

    xp3[1:17, 8:136] = y                                            # padded (18, 18*8)
    y = jnp.dot(xp3[0:16, :], t3_ref[0], preferred_element_type=f32)
    y = y + jnp.dot(xp3[1:17, :], t3_ref[1], preferred_element_type=f32)
    y = y + jnp.dot(xp3[2:18, :], t3_ref[2], preferred_element_type=f32)
    y = jnp.maximum(y + cb3_ref[...], 0.0)                          # (16, 128)

    p = jnp.maximum(jnp.dot(y, s3e_ref[...], preferred_element_type=f32),
                    jnp.dot(y, s3o_ref[...], preferred_element_type=f32))     # (16, 64)
    p = jnp.maximum(jnp.dot(r2e_ref[...], p, preferred_element_type=f32),
                    jnp.dot(r2o_ref[...], p, preferred_element_type=f32))     # (8, 64) = (h, w*8+c)

    # ---- classifier: Linear(512,512)+ReLU+[Dropout=id] x2, Linear(512,10) --
    # fc1 weight is pre-arranged as (8, 64, 512) chunks matching the (h, w*8+c)
    # feature layout, so no activation reshape/transpose is needed.
    feats = p.astype(jnp.bfloat16)                                  # (8, 64)
    h = fb1_ref[...]                                                # (1, 512) f32
    for r in range(8):
        h = h + jnp.dot(feats[r:r + 1, :], w1_ref[r],
                        preferred_element_type=f32)
    h = jnp.maximum(h, 0.0)                                         # ReLU (Dropout = identity)
    h = jnp.dot(h.astype(jnp.bfloat16), w2_ref[...],
                preferred_element_type=f32) + fb2_ref[...]
    h = jnp.maximum(h, 0.0)                                         # ReLU (Dropout = identity)
    out = jnp.dot(h.astype(jnp.bfloat16), w3_ref[...],
                  preferred_element_type=f32) + fb3_ref[...]        # (1, 128), logits in cols 0..9
    o_ref[0] = out


# ---------------------------------------------------------------------------
# Host-side parameter preparation (one-time; builds the kernel-friendly layouts).
# ---------------------------------------------------------------------------
def _toeplitz(w, W):
    """(3,3,Cin,Cout) conv weight -> (3, (W+2)*Cin, W*Cout) block-Toeplitz mats."""
    _, _, cin, cout = w.shape
    w_np = np.asarray(w, np.float32)
    t = np.zeros((3, (W + 2) * cin, W * cout), np.float32)
    for kh in range(3):
        for wo in range(W):
            for kw in range(3):
                u = wo + kw                       # padded-input column index
                t[kh, u * cin:(u + 1) * cin, wo * cout:(wo + 1) * cout] = w_np[kh, kw]
    return jnp.asarray(t)


def _wpool_select(W, C):
    """0/1 matrices selecting even / odd w positions of a (·, W*C) slab."""
    se = np.zeros((W * C, (W // 2) * C), np.float32)
    so = np.zeros_like(se)
    for w2 in range(W // 2):
        for c in range(C):
            se[(2 * w2) * C + c, w2 * C + c] = 1.0
            so[(2 * w2 + 1) * C + c, w2 * C + c] = 1.0
    return jnp.asarray(se), jnp.asarray(so)


def _hpool_select(H):
    """0/1 matrices selecting even / odd rows of an (H, ·) slab."""
    re = np.zeros((H // 2, H), np.float32)
    ro = np.zeros_like(re)
    for h2 in range(H // 2):
        re[h2, 2 * h2] = 1.0
        ro[h2, 2 * h2 + 1] = 1.0
    return jnp.asarray(re), jnp.asarray(ro)


def init_vgg_params(key, num_classes=10):
    """Synthetic params in 'natural' layouts:
       conv w: (3, 3, Cin, Cout);  fc w: (din, dout) with din in torch's
       NCHW-flatten (c, h, w) order."""
    std = 0.05
    conv, fc = [], []
    for cin, cout in [(1, 4), (4, 8), (8, 8)]:
        key, k1, k2 = jax.random.split(key, 3)
        conv.append((jax.random.normal(k1, (3, 3, cin, cout), jnp.float32) * std,
                     jax.random.normal(k2, (cout,), jnp.float32) * std))
    for din, dout in [(8 * 8 * 8, 512), (512, 512), (512, num_classes)]:
        key, k1, k2 = jax.random.split(key, 3)
        fc.append((jax.random.normal(k1, (din, dout), jnp.float32) * std,
                   jax.random.normal(k2, (dout,), jnp.float32) * std))
    return {"conv": conv, "fc": fc}


def prepare_params(params):
    (cw1, cb1), (cw2, cb2), (cw3, cb3) = params["conv"]
    (fw1, fb1), (fw2, fb2), (fw3, fb3) = params["fc"]

    # Conv layers as block-Toeplitz matrices + per-(w,c) bias rows.
    t1, t2, t3 = _toeplitz(cw1, 32), _toeplitz(cw2, 16), _toeplitz(cw3, 16)
    cbr1 = jnp.tile(cb1, (32,)).reshape(1, 128)
    cbr2 = jnp.tile(cb2, (16,)).reshape(1, 128)
    cbr3 = jnp.tile(cb3, (16,)).reshape(1, 128)

    # Max-pool selection matrices.
    s1e, s1o = _wpool_select(32, 4)
    r1e, r1o = _hpool_select(32)
    s3e, s3o = _wpool_select(16, 8)
    r2e, r2o = _hpool_select(16)

    # fc1 rows permuted from torch (c,h,w) order to the kernel's (h, w*8+c)
    # feature layout, split into 8 per-row chunks; fc weights in bfloat16.
    w1 = (fw1.reshape(8, 8, 8, 512).transpose(1, 2, 0, 3)
          .reshape(8, 64, 512).astype(jnp.bfloat16))
    w2 = fw2.astype(jnp.bfloat16)
    w3 = jnp.zeros((512, 128), jnp.float32).at[:, :10].set(fw3).astype(jnp.bfloat16)
    b1 = fb1.reshape(1, 512)
    b2 = fb2.reshape(1, 512)
    b3 = jnp.zeros((1, 128), jnp.float32).at[0, :10].set(fb3)

    return dict(t1=t1, cb1=cbr1, s1e=s1e, s1o=s1o, r1e=r1e, r1o=r1o,
                t2=t2, cb2=cbr2, t3=t3, cb3=cbr3,
                s3e=s3e, s3o=s3o, r2e=r2e, r2o=r2o,
                w1=w1, fb1=b1, w2=w2, fb2=b2, w3=w3, fb3=b3)


# ---------------------------------------------------------------------------
# Forward wrapper.
# ---------------------------------------------------------------------------
def _const_spec(a):
    nd = a.ndim
    return pl.BlockSpec(a.shape, lambda n, nd=nd: (0,) * nd)


def vgg_forward(params, x_nchw):
    N = x_nchw.shape[0]
    assert x_nchw.shape[1:] == (1, 32, 32), x_nchw.shape
    # Cin == 1, so NCHW -> (N, H, W) is a pure reshape (no transpose/copy).
    x = x_nchw.reshape(N, 32, 32).astype(jnp.float32)

    p = params
    consts = [p["t1"], p["cb1"], p["s1e"], p["s1o"], p["r1e"], p["r1o"],
              p["t2"], p["cb2"], p["t3"], p["cb3"],
              p["s3e"], p["s3o"], p["r2e"], p["r2o"],
              p["w1"], p["fb1"], p["w2"], p["fb2"], p["w3"], p["fb3"]]

    out = pl.pallas_call(
        vgg_kernel,
        out_shape=jax.ShapeDtypeStruct((N, 1, 128), jnp.float32),
        grid=(N,),
        in_specs=[pl.BlockSpec((1, 32, 32), lambda n: (n, 0, 0))]
                 + [_const_spec(a) for a in consts],
        out_specs=pl.BlockSpec((1, 1, 128), lambda n: (n, 0, 0)),
        scratch_shapes=[
            pltpu.VMEM((34, 34), jnp.float32),    # padded conv1 input
            pltpu.VMEM((18, 72), jnp.float32),    # padded conv2 input (= pool1 out)
            pltpu.VMEM((18, 144), jnp.float32),   # padded conv3 input (= conv2 out)
        ],
        compiler_params=pltpu.CompilerParams(
            dimension_semantics=("parallel",)),
    )(x, *consts)

    return out.reshape(N, 128)[:, :10]            # strip the lane padding


if __name__ == "__main__":
    key = jax.random.PRNGKey(0)
    key, pkey, xkey = jax.random.split(key, 3)
    params = prepare_params(init_vgg_params(pkey))
    x = jax.random.normal(xkey, (2, 1, 32, 32), jnp.float32)

    fwd = jax.jit(vgg_forward)
    out = jax.block_until_ready(fwd(params, x))
    assert out.shape == (2, 10), out.shape
    assert bool(jnp.all(jnp.isfinite(out)))
    print("KERNEL_OK")
</pallas_src>

<mosaic_0001>
module attributes {stable_mosaic.version = 11 : i64} {
  func.func @vgg_kernel(%arg0: i32, %arg1: memref<1x32x32xf32, #tpu.memory_space<vmem>>, %arg2: memref<3x34x128xf32, #tpu.memory_space<vmem>>, %arg3: memref<1x128xf32, #tpu.memory_space<vmem>>, %arg4: memref<128x64xf32, #tpu.memory_space<vmem>>, %arg5: memref<128x64xf32, #tpu.memory_space<vmem>>, %arg6: memref<16x32xf32, #tpu.memory_space<vmem>>, %arg7: memref<16x32xf32, #tpu.memory_space<vmem>>, %arg8: memref<3x72x128xf32, #tpu.memory_space<vmem>>, %arg9: memref<1x128xf32, #tpu.memory_space<vmem>>, %arg10: memref<3x144x128xf32, #tpu.memory_space<vmem>>, %arg11: memref<1x128xf32, #tpu.memory_space<vmem>>, %arg12: memref<128x64xf32, #tpu.memory_space<vmem>>, %arg13: memref<128x64xf32, #tpu.memory_space<vmem>>, %arg14: memref<8x16xf32, #tpu.memory_space<vmem>>, %arg15: memref<8x16xf32, #tpu.memory_space<vmem>>, %arg16: memref<8x64x512xbf16, #tpu.memory_space<vmem>>, %arg17: memref<1x512xf32, #tpu.memory_space<vmem>>, %arg18: memref<512x512xbf16, #tpu.memory_space<vmem>>, %arg19: memref<1x512xf32, #tpu.memory_space<vmem>>, %arg20: memref<512x128xbf16, #tpu.memory_space<vmem>>, %arg21: memref<1x128xf32, #tpu.memory_space<vmem>>, %arg22: memref<1x1x128xf32, #tpu.memory_space<vmem>>, %arg23: memref<34x34xf32, #tpu.memory_space<vmem>>, %arg24: memref<18x72xf32, #tpu.memory_space<vmem>>, %arg25: memref<18x144xf32, #tpu.memory_space<vmem>>) attributes {dimension_semantics = [#tpu.dimension_semantics<parallel>], iteration_bounds = array<i64: 2>, scalar_prefetch = 0 : i64, scratch_operands = 3 : i64, tpu.core_type = #tpu.core_type<tc>, window_params = [{transform_indices = @transform_0, window_bounds = array<i64: 1, 32, 32>}, {pipeline_mode = #tpu.pipeline_mode<synchronous>, transform_indices = @transform_1, window_bounds = array<i64: 3, 34, 128>}, {pipeline_mode = #tpu.pipeline_mode<synchronous>, transform_indices = @transform_2, window_bounds = array<i64: 1, 128>}, {pipeline_mode = #tpu.pipeline_mode<synchronous>, transform_indices = @transform_3, window_bounds = array<i64: 128, 64>}, {pipeline_mode = #tpu.pipeline_mode<synchronous>, transform_indices = @transform_4, window_bounds = array<i64: 128, 64>}, {pipeline_mode = #tpu.pipeline_mode<synchronous>, transform_indices = @transform_5, window_bounds = array<i64: 16, 32>}, {pipeline_mode = #tpu.pipeline_mode<synchronous>, transform_indices = @transform_6, window_bounds = array<i64: 16, 32>}, {pipeline_mode = #tpu.pipeline_mode<synchronous>, transform_indices = @transform_7, window_bounds = array<i64: 3, 72, 128>}, {pipeline_mode = #tpu.pipeline_mode<synchronous>, transform_indices = @transform_8, window_bounds = array<i64: 1, 128>}, {pipeline_mode = #tpu.pipeline_mode<synchronous>, transform_indices = @transform_9, window_bounds = array<i64: 3, 144, 128>}, {pipeline_mode = #tpu.pipeline_mode<synchronous>, transform_indices = @transform_10, window_bounds = array<i64: 1, 128>}, {pipeline_mode = #tpu.pipeline_mode<synchronous>, transform_indices = @transform_11, window_bounds = array<i64: 128, 64>}, {pipeline_mode = #tpu.pipeline_mode<synchronous>, transform_indices = @transform_12, window_bounds = array<i64: 128, 64>}, {pipeline_mode = #tpu.pipeline_mode<synchronous>, transform_indices = @transform_13, window_bounds = array<i64: 8, 16>}, {pipeline_mode = #tpu.pipeline_mode<synchronous>, transform_indices = @transform_14, window_bounds = array<i64: 8, 16>}, {pipeline_mode = #tpu.pipeline_mode<synchronous>, transform_indices = @transform_15, window_bounds = array<i64: 8, 64, 512>}, {pipeline_mode = #tpu.pipeline_mode<synchronous>, transform_indices = @transform_16, window_bounds = array<i64: 1, 512>}, {pipeline_mode = #tpu.pipeline_mode<synchronous>, transform_indices = @transform_17, window_bounds = array<i64: 512, 512>}, {pipeline_mode = #tpu.pipeline_mode<synchronous>, transform_indices = @transform_18, window_bounds = array<i64: 1, 512>}, {pipeline_mode = #tpu.pipeline_mode<synchronous>, transform_indices = @transform_19, window_bounds = array<i64: 512, 128>}, {pipeline_mode = #tpu.pipeline_mode<synchronous>, transform_indices = @transform_20, window_bounds = array<i64: 1, 128>}, {transform_indices = @transform_21, window_bounds = array<i64: 1, 1, 128>}]} {
    %cst = arith.constant 0.000000e+00 : f32
    %0 = vector.broadcast %cst : f32 to vector<34x34xf32>
    %c0 = arith.constant 0 : index
    %c0_0 = arith.constant 0 : index
    %1 = vector.load %arg23[%c0, %c0_0] : memref<34x34xf32, #tpu.memory_space<vmem>>, vector<34x34xf32>
    tpu.vector_store %arg23[%c0, %c0_0], %0 {strides = array<i32>} : memref<34x34xf32, #tpu.memory_space<vmem>>, vector<34x34xf32>,
    %cst_1 = arith.constant 0.000000e+00 : f32
    %2 = vector.broadcast %cst_1 : f32 to vector<18x72xf32>
    %c0_2 = arith.constant 0 : index
    %c0_3 = arith.constant 0 : index
    %3 = vector.load %arg24[%c0_2, %c0_3] : memref<18x72xf32, #tpu.memory_space<vmem>>, vector<18x72xf32>
    tpu.vector_store %arg24[%c0_2, %c0_3], %2 {strides = array<i32>} : memref<18x72xf32, #tpu.memory_space<vmem>>, vector<18x72xf32>,
    %cst_4 = arith.constant 0.000000e+00 : f32
    %4 = vector.broadcast %cst_4 : f32 to vector<18x144xf32>
    %c0_5 = arith.constant 0 : index
    %c0_6 = arith.constant 0 : index
    %5 = vector.load %arg25[%c0_5, %c0_6] : memref<18x144xf32, #tpu.memory_space<vmem>>, vector<18x144xf32>
    tpu.vector_store %arg25[%c0_5, %c0_6], %4 {strides = array<i32>} : memref<18x144xf32, #tpu.memory_space<vmem>>, vector<18x144xf32>,
    %c0_7 = arith.constant 0 : index
    %c0_8 = arith.constant 0 : index
    %c0_9 = arith.constant 0 : index
    %6 = vector.load %arg1[%c0_7, %c0_8, %c0_9] : memref<1x32x32xf32, #tpu.memory_space<vmem>>, vector<1x32x32xf32>
    %7 = vector.shape_cast %6 : vector<1x32x32xf32> to vector<32x32xf32>
    %c1 = arith.constant 1 : index
    %c1_10 = arith.constant 1 : index
    %8 = vector.load %arg23[%c1, %c1_10] : memref<34x34xf32, #tpu.memory_space<vmem>>, vector<32x32xf32>
    tpu.vector_store %arg23[%c1, %c1_10], %7 {strides = array<i32>} : memref<34x34xf32, #tpu.memory_space<vmem>>, vector<32x32xf32>,
    %c0_11 = arith.constant 0 : index
    %c0_12 = arith.constant 0 : index
    %9 = vector.load %arg23[%c0_11, %c0_12] : memref<34x34xf32, #tpu.memory_space<vmem>>, vector<32x34xf32>
    %c0_13 = arith.constant 0 : index
    %c0_14 = arith.constant 0 : index
    %c0_15 = arith.constant 0 : index
    %10 = vector.load %arg2[%c0_13, %c0_14, %c0_15] : memref<3x34x128xf32, #tpu.memory_space<vmem>>, vector<1x34x128xf32>
    %11 = vector.shape_cast %10 : vector<1x34x128xf32> to vector<34x128xf32>
    %cst_16 = arith.constant dense<0.000000e+00> : vector<32x128xf32>
    %12 = tpu.matmul %9, %11, %cst_16 {dimension_numbers = #tpu.dot_dimension_numbers<[1], [0], [0], [1], [0, 0, 1, 1], [], []>} : vector<32x34xf32>, vector<34x128xf32>, vector<32x128xf32> -> vector<32x128xf32>
    %c1_17 = arith.constant 1 : index
    %c0_18 = arith.constant 0 : index
    %13 = vector.load %arg23[%c1_17, %c0_18] : memref<34x34xf32, #tpu.memory_space<vmem>>, vector<32x34xf32>
    %c1_19 = arith.constant 1 : index
    %c0_20 = arith.constant 0 : index
    %c0_21 = arith.constant 0 : index
    %14 = vector.load %arg2[%c1_19, %c0_20, %c0_21] : memref<3x34x128xf32, #tpu.memory_space<vmem>>, vector<1x34x128xf32>
    %15 = vector.shape_cast %14 : vector<1x34x128xf32> to vector<34x128xf32>
    %cst_22 = arith.constant dense<0.000000e+00> : vector<32x128xf32>
    %16 = tpu.matmul %13, %15, %cst_22 {dimension_numbers = #tpu.dot_dimension_numbers<[1], [0], [0], [1], [0, 0, 1, 1], [], []>} : vector<32x34xf32>, vector<34x128xf32>, vector<32x128xf32> -> vector<32x128xf32>
    %17 = arith.addf %12, %16 : vector<32x128xf32>
    %c2 = arith.constant 2 : index
    %c0_23 = arith.constant 0 : index
    %18 = vector.load %arg23[%c2, %c0_23] : memref<34x34xf32, #tpu.memory_space<vmem>>, vector<32x34xf32>
    %c2_24 = arith.constant 2 : index
    %c0_25 = arith.constant 0 : index
    %c0_26 = arith.constant 0 : index
    %19 = vector.load %arg2[%c2_24, %c0_25, %c0_26] : memref<3x34x128xf32, #tpu.memory_space<vmem>>, vector<1x34x128xf32>
    %20 = vector.shape_cast %19 : vector<1x34x128xf32> to vector<34x128xf32>
    %cst_27 = arith.constant dense<0.000000e+00> : vector<32x128xf32>
    %21 = tpu.matmul %18, %20, %cst_27 {dimension_numbers = #tpu.dot_dimension_numbers<[1], [0], [0], [1], [0, 0, 1, 1], [], []>} : vector<32x34xf32>, vector<34x128xf32>, vector<32x128xf32> -> vector<32x128xf32>
    %22 = arith.addf %17, %21 : vector<32x128xf32>
    %c0_28 = arith.constant 0 : index
    %c0_29 = arith.constant 0 : index
    %23 = vector.load %arg3[%c0_28, %c0_29] : memref<1x128xf32, #tpu.memory_space<vmem>>, vector<1x128xf32>
    %24 = vector.broadcast %23 : vector<1x128xf32> to vector<32x128xf32>
    %25 = arith.addf %22, %24 : vector<32x128xf32>
    %cst_30 = arith.constant 0.000000e+00 : f32
    %26 = vector.broadcast %cst_30 : f32 to vector<32x128xf32>
    %27 = arith.maximumf %25, %26 : vector<32x128xf32>
    %c0_31 = arith.constant 0 : index
    %c0_32 = arith.constant 0 : index
    %28 = vector.load %arg4[%c0_31, %c0_32] : memref<128x64xf32, #tpu.memory_space<vmem>>, vector<128x64xf32>
    %cst_33 = arith.constant dense<0.000000e+00> : vector<32x64xf32>
    %29 = tpu.matmul %27, %28, %cst_33 {dimension_numbers = #tpu.dot_dimension_numbers<[1], [0], [0], [1], [0, 0, 1, 1], [], []>} : vector<32x128xf32>, vector<128x64xf32>, vector<32x64xf32> -> vector<32x64xf32>
    %c0_34 = arith.constant 0 : index
    %c0_35 = arith.constant 0 : index
    %30 = vector.load %arg5[%c0_34, %c0_35] : memref<128x64xf32, #tpu.memory_space<vmem>>, vector<128x64xf32>
    %cst_36 = arith.constant dense<0.000000e+00> : vector<32x64xf32>
    %31 = tpu.matmul %27, %30, %cst_36 {dimension_numbers = #tpu.dot_dimension_numbers<[1], [0], [0], [1], [0, 0, 1, 1], [], []>} : vector<32x128xf32>, vector<128x64xf32>, vector<32x64xf32> -> vector<32x64xf32>
    %32 = arith.maximumf %29, %31 : vector<32x64xf32>
    %c0_37 = arith.constant 0 : index
    %c0_38 = arith.constant 0 : index
    %33 = vector.load %arg6[%c0_37, %c0_38] : memref<16x32xf32, #tpu.memory_space<vmem>>, vector<16x32xf32>
    %cst_39 = arith.constant dense<0.000000e+00> : vector<16x64xf32>
    %34 = tpu.matmul %33, %32, %cst_39 {dimension_numbers = #tpu.dot_dimension_numbers<[1], [0], [0], [1], [0, 0, 1, 1], [], []>} : vector<16x32xf32>, vector<32x64xf32>, vector<16x64xf32> -> vector<16x64xf32>
    %c0_40 = arith.constant 0 : index
    %c0_41 = arith.constant 0 : index
    %35 = vector.load %arg7[%c0_40, %c0_41] : memref<16x32xf32, #tpu.memory_space<vmem>>, vector<16x32xf32>
    %cst_42 = arith.constant dense<0.000000e+00> : vector<16x64xf32>
    %36 = tpu.matmul %35, %32, %cst_42 {dimension_numbers = #tpu.dot_dimension_numbers<[1], [0], [0], [1], [0, 0, 1, 1], [], []>} : vector<16x32xf32>, vector<32x64xf32>, vector<16x64xf32> -> vector<16x64xf32>
    %37 = arith.maximumf %34, %36 : vector<16x64xf32>
    %c1_43 = arith.constant 1 : index
    %c4 = arith.constant 4 : index
    %38 = vector.load %arg24[%c1_43, %c4] : memref<18x72xf32, #tpu.memory_space<vmem>>, vector<16x64xf32>
    tpu.vector_store %arg24[%c1_43, %c4], %37 {strides = array<i32>} : memref<18x72xf32, #tpu.memory_space<vmem>>, vector<16x64xf32>,
    %c0_44 = arith.constant 0 : index
    %c0_45 = arith.constant 0 : index
    %39 = vector.load %arg24[%c0_44, %c0_45] : memref<18x72xf32, #tpu.memory_space<vmem>>, vector<16x72xf32>
    %c0_46 = arith.constant 0 : index
    %c0_47 = arith.constant 0 : index
    %c0_48 = arith.constant 0 : index
    %40 = vector.load %arg8[%c0_46, %c0_47, %c0_48] : memref<3x72x128xf32, #tpu.memory_space<vmem>>, vector<1x72x128xf32>
    %41 = vector.shape_cast %40 : vector<1x72x128xf32> to vector<72x128xf32>
    %cst_49 = arith.constant dense<0.000000e+00> : vector<16x128xf32>
    %42 = tpu.matmul %39, %41, %cst_49 {dimension_numbers = #tpu.dot_dimension_numbers<[1], [0], [0], [1], [0, 0, 1, 1], [], []>} : vector<16x72xf32>, vector<72x128xf32>, vector<16x128xf32> -> vector<16x128xf32>
    %c1_50 = arith.constant 1 : index
    %c0_51 = arith.constant 0 : index
    %43 = vector.load %arg24[%c1_50, %c0_51] : memref<18x72xf32, #tpu.memory_space<vmem>>, vector<16x72xf32>
    %c1_52 = arith.constant 1 : index
    %c0_53 = arith.constant 0 : index
    %c0_54 = arith.constant 0 : index
    %44 = vector.load %arg8[%c1_52, %c0_53, %c0_54] : memref<3x72x128xf32, #tpu.memory_space<vmem>>, vector<1x72x128xf32>
    %45 = vector.shape_cast %44 : vector<1x72x128xf32> to vector<72x128xf32>
    %cst_55 = arith.constant dense<0.000000e+00> : vector<16x128xf32>
    %46 = tpu.matmul %43, %45, %cst_55 {dimension_numbers = #tpu.dot_dimension_numbers<[1], [0], [0], [1], [0, 0, 1, 1], [], []>} : vector<16x72xf32>, vector<72x128xf32>, vector<16x128xf32> -> vector<16x128xf32>
    %47 = arith.addf %42, %46 : vector<16x128xf32>
    %c2_56 = arith.constant 2 : index
    %c0_57 = arith.constant 0 : index
    %48 = vector.load %arg24[%c2_56, %c0_57] : memref<18x72xf32, #tpu.memory_space<vmem>>, vector<16x72xf32>
    %c2_58 = arith.constant 2 : index
    %c0_59 = arith.constant 0 : index
    %c0_60 = arith.constant 0 : index
    %49 = vector.load %arg8[%c2_58, %c0_59, %c0_60] : memref<3x72x128xf32, #tpu.memory_space<vmem>>, vector<1x72x128xf32>
    %50 = vector.shape_cast %49 : vector<1x72x128xf32> to vector<72x128xf32>
    %cst_61 = arith.constant dense<0.000000e+00> : vector<16x128xf32>
    %51 = tpu.matmul %48, %50, %cst_61 {dimension_numbers = #tpu.dot_dimension_numbers<[1], [0], [0], [1], [0, 0, 1, 1], [], []>} : vector<16x72xf32>, vector<72x128xf32>, vector<16x128xf32> -> vector<16x128xf32>
    %52 = arith.addf %47, %51 : vector<16x128xf32>
    %c0_62 = arith.constant 0 : index
    %c0_63 = arith.constant 0 : index
    %53 = vector.load %arg9[%c0_62, %c0_63] : memref<1x128xf32, #tpu.memory_space<vmem>>, vector<1x128xf32>
    %54 = vector.broadcast %53 : vector<1x128xf32> to vector<16x128xf32>
    %55 = arith.addf %52, %54 : vector<16x128xf32>
    %cst_64 = arith.constant 0.000000e+00 : f32
    %56 = vector.broadcast %cst_64 : f32 to vector<16x128xf32>
    %57 = arith.maximumf %55, %56 : vector<16x128xf32>
    %c1_65 = arith.constant 1 : index
    %c8 = arith.constant 8 : index
    %58 = vector.load %arg25[%c1_65, %c8] : memref<18x144xf32, #tpu.memory_space<vmem>>, vector<16x128xf32>
    tpu.vector_store %arg25[%c1_65, %c8], %57 {strides = array<i32>} : memref<18x144xf32, #tpu.memory_space<vmem>>, vector<16x128xf32>,
    %c0_66 = arith.constant 0 : index
    %c0_67 = arith.constant 0 : index
    %59 = vector.load %arg25[%c0_66, %c0_67] : memref<18x144xf32, #tpu.memory_space<vmem>>, vector<16x144xf32>
    %c0_68 = arith.constant 0 : index
    %c0_69 = arith.constant 0 : index
    %c0_70 = arith.constant 0 : index
    %60 = vector.load %arg10[%c0_68, %c0_69, %c0_70] : memref<3x144x128xf32, #tpu.memory_space<vmem>>, vector<1x144x128xf32>
    %61 = vector.shape_cast %60 : vector<1x144x128xf32> to vector<144x128xf32>
    %cst_71 = arith.constant dense<0.000000e+00> : vector<16x128xf32>
    %62 = tpu.matmul %59, %61, %cst_71 {dimension_numbers = #tpu.dot_dimension_numbers<[1], [0], [0], [1], [0, 0, 1, 1], [], []>} : vector<16x144xf32>, vector<144x128xf32>, vector<16x128xf32> -> vector<16x128xf32>
    %c1_72 = arith.constant 1 : index
    %c0_73 = arith.constant 0 : index
    %63 = vector.load %arg25[%c1_72, %c0_73] : memref<18x144xf32, #tpu.memory_space<vmem>>, vector<16x144xf32>
    %c1_74 = arith.constant 1 : index
    %c0_75 = arith.constant 0 : index
    %c0_76 = arith.constant 0 : index
    %64 = vector.load %arg10[%c1_74, %c0_75, %c0_76] : memref<3x144x128xf32, #tpu.memory_space<vmem>>, vector<1x144x128xf32>
    %65 = vector.shape_cast %64 : vector<1x144x128xf32> to vector<144x128xf32>
    %cst_77 = arith.constant dense<0.000000e+00> : vector<16x128xf32>
    %66 = tpu.matmul %63, %65, %cst_77 {dimension_numbers = #tpu.dot_dimension_numbers<[1], [0], [0], [1], [0, 0, 1, 1], [], []>} : vector<16x144xf32>, vector<144x128xf32>, vector<16x128xf32> -> vector<16x128xf32>
    %67 = arith.addf %62, %66 : vector<16x128xf32>
    %c2_78 = arith.constant 2 : index
    %c0_79 = arith.constant 0 : index
    %68 = vector.load %arg25[%c2_78, %c0_79] : memref<18x144xf32, #tpu.memory_space<vmem>>, vector<16x144xf32>
    %c2_80 = arith.constant 2 : index
    %c0_81 = arith.constant 0 : index
    %c0_82 = arith.constant 0 : index
    %69 = vector.load %arg10[%c2_80, %c0_81, %c0_82] : memref<3x144x128xf32, #tpu.memory_space<vmem>>, vector<1x144x128xf32>
    %70 = vector.shape_cast %69 : vector<1x144x128xf32> to vector<144x128xf32>
    %cst_83 = arith.constant dense<0.000000e+00> : vector<16x128xf32>
    %71 = tpu.matmul %68, %70, %cst_83 {dimension_numbers = #tpu.dot_dimension_numbers<[1], [0], [0], [1], [0, 0, 1, 1], [], []>} : vector<16x144xf32>, vector<144x128xf32>, vector<16x128xf32> -> vector<16x128xf32>
    %72 = arith.addf %67, %71 : vector<16x128xf32>
    %c0_84 = arith.constant 0 : index
    %c0_85 = arith.constant 0 : index
    %73 = vector.load %arg11[%c0_84, %c0_85] : memref<1x128xf32, #tpu.memory_space<vmem>>, vector<1x128xf32>
    %74 = vector.broadcast %73 : vector<1x128xf32> to vector<16x128xf32>
    %75 = arith.addf %72, %74 : vector<16x128xf32>
    %cst_86 = arith.constant 0.000000e+00 : f32
    %76 = vector.broadcast %cst_86 : f32 to vector<16x128xf32>
    %77 = arith.maximumf %75, %76 : vector<16x128xf32>
    %c0_87 = arith.constant 0 : index
    %c0_88 = arith.constant 0 : index
    %78 = vector.load %arg12[%c0_87, %c0_88] : memref<128x64xf32, #tpu.memory_space<vmem>>, vector<128x64xf32>
    %cst_89 = arith.constant dense<0.000000e+00> : vector<16x64xf32>
    %79 = tpu.matmul %77, %78, %cst_89 {dimension_numbers = #tpu.dot_dimension_numbers<[1], [0], [0], [1], [0, 0, 1, 1], [], []>} : vector<16x128xf32>, vector<128x64xf32>, vector<16x64xf32> -> vector<16x64xf32>
    %c0_90 = arith.constant 0 : index
    %c0_91 = arith.constant 0 : index
    %80 = vector.load %arg13[%c0_90, %c0_91] : memref<128x64xf32, #tpu.memory_space<vmem>>, vector<128x64xf32>
    %cst_92 = arith.constant dense<0.000000e+00> : vector<16x64xf32>
    %81 = tpu.matmul %77, %80, %cst_92 {dimension_numbers = #tpu.dot_dimension_numbers<[1], [0], [0], [1], [0, 0, 1, 1], [], []>} : vector<16x128xf32>, vector<128x64xf32>, vector<16x64xf32> -> vector<16x64xf32>
    %82 = arith.maximumf %79, %81 : vector<16x64xf32>
    %c0_93 = arith.constant 0 : index
    %c0_94 = arith.constant 0 : index
    %83 = vector.load %arg14[%c0_93, %c0_94] : memref<8x16xf32, #tpu.memory_space<vmem>>, vector<8x16xf32>
    %cst_95 = arith.constant dense<0.000000e+00> : vector<8x64xf32>
    %84 = tpu.matmul %83, %82, %cst_95 {dimension_numbers = #tpu.dot_dimension_numbers<[1], [0], [0], [1], [0, 0, 1, 1], [], []>} : vector<8x16xf32>, vector<16x64xf32>, vector<8x64xf32> -> vector<8x64xf32>
    %c0_96 = arith.constant 0 : index
    %c0_97 = arith.constant 0 : index
    %85 = vector.load %arg15[%c0_96, %c0_97] : memref<8x16xf32, #tpu.memory_space<vmem>>, vector<8x16xf32>
    %cst_98 = arith.constant dense<0.000000e+00> : vector<8x64xf32>
    %86 = tpu.matmul %85, %82, %cst_98 {dimension_numbers = #tpu.dot_dimension_numbers<[1], [0], [0], [1], [0, 0, 1, 1], [], []>} : vector<8x16xf32>, vector<16x64xf32>, vector<8x64xf32> -> vector<8x64xf32>
    %87 = arith.maximumf %84, %86 : vector<8x64xf32>
    %88 = arith.truncf %87 : vector<8x64xf32> to vector<8x64xbf16>
    %c0_99 = arith.constant 0 : index
    %c0_100 = arith.constant 0 : index
    %89 = vector.load %arg17[%c0_99, %c0_100] : memref<1x512xf32, #tpu.memory_space<vmem>>, vector<1x512xf32>
    %90 = vector.extract_strided_slice %88 {offsets = [0, 0], sizes = [1, 64], strides = [1, 1]} : vector<8x64xbf16> to vector<1x64xbf16>
    %c0_101 = arith.constant 0 : index
    %c0_102 = arith.constant 0 : index
    %c0_103 = arith.constant 0 : index
    %91 = vector.load %arg16[%c0_101, %c0_102, %c0_103] : memref<8x64x512xbf16, #tpu.memory_space<vmem>>, vector<1x64x512xbf16>
    %92 = vector.shape_cast %91 : vector<1x64x512xbf16> to vector<64x512xbf16>
    %cst_104 = arith.constant dense<0.000000e+00> : vector<1x512xf32>
    %93 = tpu.matmul %90, %92, %cst_104 {dimension_numbers = #tpu.dot_dimension_numbers<[1], [0], [0], [1], [0, 0, 1, 1], [], []>} : vector<1x64xbf16>, vector<64x512xbf16>, vector<1x512xf32> -> vector<1x512xf32>
    %94 = arith.addf %89, %93 : vector<1x512xf32>
    %95 = vector.extract_strided_slice %88 {offsets = [1, 0], sizes = [1, 64], strides = [1, 1]} : vector<8x64xbf16> to vector<1x64xbf16>
    %c1_105 = arith.constant 1 : index
    %c0_106 = arith.constant 0 : index
    %c0_107 = arith.constant 0 : index
    %96 = vector.load %arg16[%c1_105, %c0_106, %c0_107] : memref<8x64x512xbf16, #tpu.memory_space<vmem>>, vector<1x64x512xbf16>
    %97 = vector.shape_cast %96 : vector<1x64x512xbf16> to vector<64x512xbf16>
    %cst_108 = arith.constant dense<0.000000e+00> : vector<1x512xf32>
    %98 = tpu.matmul %95, %97, %cst_108 {dimension_numbers = #tpu.dot_dimension_numbers<[1], [0], [0], [1], [0, 0, 1, 1], [], []>} : vector<1x64xbf16>, vector<64x512xbf16>, vector<1x512xf32> -> vector<1x512xf32>
    %99 = arith.addf %94, %98 : vector<1x512xf32>
    %100 = vector.extract_strided_slice %88 {offsets = [2, 0], sizes = [1, 64], strides = [1, 1]} : vector<8x64xbf16> to vector<1x64xbf16>
    %c2_109 = arith.constant 2 : index
    %c0_110 = arith.constant 0 : index
    %c0_111 = arith.constant 0 : index
    %101 = vector.load %arg16[%c2_109, %c0_110, %c0_111] : memref<8x64x512xbf16, #tpu.memory_space<vmem>>, vector<1x64x512xbf16>
    %102 = vector.shape_cast %101 : vector<1x64x512xbf16> to vector<64x512xbf16>
    %cst_112 = arith.constant dense<0.000000e+00> : vector<1x512xf32>
    %103 = tpu.matmul %100, %102, %cst_112 {dimension_numbers = #tpu.dot_dimension_numbers<[1], [0], [0], [1], [0, 0, 1, 1], [], []>} : vector<1x64xbf16>, vector<64x512xbf16>, vector<1x512xf32> -> vector<1x512xf32>
    %104 = arith.addf %99, %103 : vector<1x512xf32>
    %105 = vector.extract_strided_slice %88 {offsets = [3, 0], sizes = [1, 64], strides = [1, 1]} : vector<8x64xbf16> to vector<1x64xbf16>
    %c3 = arith.constant 3 : index
    %c0_113 = arith.constant 0 : index
    %c0_114 = arith.constant 0 : index
    %106 = vector.load %arg16[%c3, %c0_113, %c0_114] : memref<8x64x512xbf16, #tpu.memory_space<vmem>>, vector<1x64x512xbf16>
    %107 = vector.shape_cast %106 : vector<1x64x512xbf16> to vector<64x512xbf16>
    %cst_115 = arith.constant dense<0.000000e+00> : vector<1x512xf32>
    %108 = tpu.matmul %105, %107, %cst_115 {dimension_numbers = #tpu.dot_dimension_numbers<[1], [0], [0], [1], [0, 0, 1, 1], [], []>} : vector<1x64xbf16>, vector<64x512xbf16>, vector<1x512xf32> -> vector<1x512xf32>
    %109 = arith.addf %104, %108 : vector<1x512xf32>
    %110 = vector.extract_strided_slice %88 {offsets = [4, 0], sizes = [1, 64], strides = [1, 1]} : vector<8x64xbf16> to vector<1x64xbf16>
    %c4_116 = arith.constant 4 : index
    %c0_117 = arith.constant 0 : index
    %c0_118 = arith.constant 0 : index
    %111 = vector.load %arg16[%c4_116, %c0_117, %c0_118] : memref<8x64x512xbf16, #tpu.memory_space<vmem>>, vector<1x64x512xbf16>
    %112 = vector.shape_cast %111 : vector<1x64x512xbf16> to vector<64x512xbf16>
    %cst_119 = arith.constant dense<0.000000e+00> : vector<1x512xf32>
    %113 = tpu.matmul %110, %112, %cst_119 {dimension_numbers = #tpu.dot_dimension_numbers<[1], [0], [0], [1], [0, 0, 1, 1], [], []>} : vector<1x64xbf16>, vector<64x512xbf16>, vector<1x512xf32> -> vector<1x512xf32>
    %114 = arith.addf %109, %113 : vector<1x512xf32>
    %115 = vector.extract_strided_slice %88 {offsets = [5, 0], sizes = [1, 64], strides = [1, 1]} : vector<8x64xbf16> to vector<1x64xbf16>
    %c5 = arith.constant 5 : index
    %c0_120 = arith.constant 0 : index
    %c0_121 = arith.constant 0 : index
    %116 = vector.load %arg16[%c5, %c0_120, %c0_121] : memref<8x64x512xbf16, #tpu.memory_space<vmem>>, vector<1x64x512xbf16>
    %117 = vector.shape_cast %116 : vector<1x64x512xbf16> to vector<64x512xbf16>
    %cst_122 = arith.constant dense<0.000000e+00> : vector<1x512xf32>
    %118 = tpu.matmul %115, %117, %cst_122 {dimension_numbers = #tpu.dot_dimension_numbers<[1], [0], [0], [1], [0, 0, 1, 1], [], []>} : vector<1x64xbf16>, vector<64x512xbf16>, vector<1x512xf32> -> vector<1x512xf32>
    %119 = arith.addf %114, %118 : vector<1x512xf32>
    %120 = vector.extract_strided_slice %88 {offsets = [6, 0], sizes = [1, 64], strides = [1, 1]} : vector<8x64xbf16> to vector<1x64xbf16>
    %c6 = arith.constant 6 : index
    %c0_123 = arith.constant 0 : index
    %c0_124 = arith.constant 0 : index
    %121 = vector.load %arg16[%c6, %c0_123, %c0_124] : memref<8x64x512xbf16, #tpu.memory_space<vmem>>, vector<1x64x512xbf16>
    %122 = vector.shape_cast %121 : vector<1x64x512xbf16> to vector<64x512xbf16>
    %cst_125 = arith.constant dense<0.000000e+00> : vector<1x512xf32>
    %123 = tpu.matmul %120, %122, %cst_125 {dimension_numbers = #tpu.dot_dimension_numbers<[1], [0], [0], [1], [0, 0, 1, 1], [], []>} : vector<1x64xbf16>, vector<64x512xbf16>, vector<1x512xf32> -> vector<1x512xf32>
    %124 = arith.addf %119, %123 : vector<1x512xf32>
    %125 = vector.extract_strided_slice %88 {offsets = [7, 0], sizes = [1, 64], strides = [1, 1]} : vector<8x64xbf16> to vector<1x64xbf16>
    %c7 = arith.constant 7 : index
    %c0_126 = arith.constant 0 : index
    %c0_127 = arith.constant 0 : index
    %126 = vector.load %arg16[%c7, %c0_126, %c0_127] : memref<8x64x512xbf16, #tpu.memory_space<vmem>>, vector<1x64x512xbf16>
    %127 = vector.shape_cast %126 : vector<1x64x512xbf16> to vector<64x512xbf16>
    %cst_128 = arith.constant dense<0.000000e+00> : vector<1x512xf32>
    %128 = tpu.matmul %125, %127, %cst_128 {dimension_numbers = #tpu.dot_dimension_numbers<[1], [0], [0], [1], [0, 0, 1, 1], [], []>} : vector<1x64xbf16>, vector<64x512xbf16>, vector<1x512xf32> -> vector<1x512xf32>
    %129 = arith.addf %124, %128 : vector<1x512xf32>
    %cst_129 = arith.constant 0.000000e+00 : f32
    %130 = vector.broadcast %cst_129 : f32 to vector<1x512xf32>
    %131 = arith.maximumf %129, %130 : vector<1x512xf32>
    %132 = arith.truncf %131 : vector<1x512xf32> to vector<1x512xbf16>
    %c0_130 = arith.constant 0 : index
    %c0_131 = arith.constant 0 : index
    %133 = vector.load %arg18[%c0_130, %c0_131] : memref<512x512xbf16, #tpu.memory_space<vmem>>, vector<512x512xbf16>
    %cst_132 = arith.constant dense<0.000000e+00> : vector<1x512xf32>
    %134 = tpu.matmul %132, %133, %cst_132 {dimension_numbers = #tpu.dot_dimension_numbers<[1], [0], [0], [1], [0, 0, 1, 1], [], []>} : vector<1x512xbf16>, vector<512x512xbf16>, vector<1x512xf32> -> vector<1x512xf32>
    %c0_133 = arith.constant 0 : index
    %c0_134 = arith.constant 0 : index
    %135 = vector.load %arg19[%c0_133, %c0_134] : memref<1x512xf32, #tpu.memory_space<vmem>>, vector<1x512xf32>
    %136 = arith.addf %134, %135 : vector<1x512xf32>
    %cst_135 = arith.constant 0.000000e+00 : f32
    %137 = vector.broadcast %cst_135 : f32 to vector<1x512xf32>
    %138 = arith.maximumf %136, %137 : vector<1x512xf32>
    %139 = arith.truncf %138 : vector<1x512xf32> to vector<1x512xbf16>
    %c0_136 = arith.constant 0 : index
    %c0_137 = arith.constant 0 : index
    %140 = vector.load %arg20[%c0_136, %c0_137] : memref<512x128xbf16, #tpu.memory_space<vmem>>, vector<512x128xbf16>
    %cst_138 = arith.constant dense<0.000000e+00> : vector<1x128xf32>
    %141 = tpu.matmul %139, %140, %cst_138 {dimension_numbers = #tpu.dot_dimension_numbers<[1], [0], [0], [1], [0, 0, 1, 1], [], []>} : vector<1x512xbf16>, vector<512x128xbf16>, vector<1x128xf32> -> vector<1x128xf32>
    %c0_139 = arith.constant 0 : index
    %c0_140 = arith.constant 0 : index
    %142 = vector.load %arg21[%c0_139, %c0_140] : memref<1x128xf32, #tpu.memory_space<vmem>>, vector<1x128xf32>
    %143 = arith.addf %141, %142 : vector<1x128xf32>
    %c0_141 = arith.constant 0 : index
    %c0_142 = arith.constant 0 : index
    %c0_143 = arith.constant 0 : index
    %144 = vector.load %arg22[%c0_141, %c0_142, %c0_143] : memref<1x1x128xf32, #tpu.memory_space<vmem>>, vector<1x1x128xf32>
    %145 = vector.shape_cast %144 : vector<1x1x128xf32> to vector<1x128xf32>
    %146 = vector.shape_cast %143 : vector<1x128xf32> to vector<1x1x128xf32>
    tpu.vector_store %arg22[%c0_141, %c0_142, %c0_143], %146 {strides = array<i32>} : memref<1x1x128xf32, #tpu.memory_space<vmem>>, vector<1x1x128xf32>,
    return
  }
  func.func @transform_0(%arg0: i32) -> (i32, i32, i32) {
    %c0_i32 = arith.constant 0 : i32
    %c0_i32_0 = arith.constant 0 : i32
    %c0_i32_1 = arith.constant 0 : i32
    return %arg0, %c0_i32, %c0_i32_0 : i32, i32, i32
  }
  func.func @transform_1(%arg0: i32) -> (i32, i32, i32) {
    %c0_i32 = arith.constant 0 : i32
    %c0_i32_0 = arith.constant 0 : i32
    %c0_i32_1 = arith.constant 0 : i32
    %c0_i32_2 = arith.constant 0 : i32
    return %c0_i32, %c0_i32_0, %c0_i32_1 : i32, i32, i32
  }
  func.func @transform_2(%arg0: i32) -> (i32, i32) {
    %c0_i32 = arith.constant 0 : i32
    %c0_i32_0 = arith.constant 0 : i32
    %c0_i32_1 = arith.constant 0 : i32
    return %c0_i32, %c0_i32_0 : i32, i32
  }
  func.func @transform_3(%arg0: i32) -> (i32, i32) {
    %c0_i32 = arith.constant 0 : i32
    %c0_i32_0 = arith.constant 0 : i32
    %c0_i32_1 = arith.constant 0 : i32
    return %c0_i32, %c0_i32_0 : i32, i32
  }
  func.func @transform_4(%arg0: i32) -> (i32, i32) {
    %c0_i32 = arith.constant 0 : i32
    %c0_i32_0 = arith.constant 0 : i32
    %c0_i32_1 = arith.constant 0 : i32
    return %c0_i32, %c0_i32_0 : i32, i32
  }
  func.func @transform_5(%arg0: i32) -> (i32, i32) {
    %c0_i32 = arith.constant 0 : i32
    %c0_i32_0 = arith.constant 0 : i32
    %c0_i32_1 = arith.constant 0 : i32
    return %c0_i32, %c0_i32_0 : i32, i32
  }
  func.func @transform_6(%arg0: i32) -> (i32, i32) {
    %c0_i32 = arith.constant 0 : i32
    %c0_i32_0 = arith.constant 0 : i32
    %c0_i32_1 = arith.constant 0 : i32
    return %c0_i32, %c0_i32_0 : i32, i32
  }
  func.func @transform_7(%arg0: i32) -> (i32, i32, i32) {
    %c0_i32 = arith.constant 0 : i32
    %c0_i32_0 = arith.constant 0 : i32
    %c0_i32_1 = arith.constant 0 : i32
    %c0_i32_2 = arith.constant 0 : i32
    return %c0_i32, %c0_i32_0, %c0_i32_1 : i32, i32, i32
  }
  func.func @transform_8(%arg0: i32) -> (i32, i32) {
    %c0_i32 = arith.constant 0 : i32
    %c0_i32_0 = arith.constant 0 : i32
    %c0_i32_1 = arith.constant 0 : i32
    return %c0_i32, %c0_i32_0 : i32, i32
  }
  func.func @transform_9(%arg0: i32) -> (i32, i32, i32) {
    %c0_i32 = arith.constant 0 : i32
    %c0_i32_0 = arith.constant 0 : i32
    %c0_i32_1 = arith.constant 0 : i32
    %c0_i32_2 = arith.constant 0 : i32
    return %c0_i32, %c0_i32_0, %c0_i32_1 : i32, i32, i32
  }
  func.func @transform_10(%arg0: i32) -> (i32, i32) {
    %c0_i32 = arith.constant 0 : i32
    %c0_i32_0 = arith.constant 0 : i32
    %c0_i32_1 = arith.constant 0 : i32
    return %c0_i32, %c0_i32_0 : i32, i32
  }
  func.func @transform_11(%arg0: i32) -> (i32, i32) {
    %c0_i32 = arith.constant 0 : i32
    %c0_i32_0 = arith.constant 0 : i32
    %c0_i32_1 = arith.constant 0 : i32
    return %c0_i32, %c0_i32_0 : i32, i32
  }
  func.func @transform_12(%arg0: i32) -> (i32, i32) {
    %c0_i32 = arith.constant 0 : i32
    %c0_i32_0 = arith.constant 0 : i32
    %c0_i32_1 = arith.constant 0 : i32
    return %c0_i32, %c0_i32_0 : i32, i32
  }
  func.func @transform_13(%arg0: i32) -> (i32, i32) {
    %c0_i32 = arith.constant 0 : i32
    %c0_i32_0 = arith.constant 0 : i32
    %c0_i32_1 = arith.constant 0 : i32
    return %c0_i32, %c0_i32_0 : i32, i32
  }
  func.func @transform_14(%arg0: i32) -> (i32, i32) {
    %c0_i32 = arith.constant 0 : i32
    %c0_i32_0 = arith.constant 0 : i32
    %c0_i32_1 = arith.constant 0 : i32
    return %c0_i32, %c0_i32_0 : i32, i32
  }
  func.func @transform_15(%arg0: i32) -> (i32, i32, i32) {
    %c0_i32 = arith.constant 0 : i32
    %c0_i32_0 = arith.constant 0 : i32
    %c0_i32_1 = arith.constant 0 : i32
    %c0_i32_2 = arith.constant 0 : i32
    return %c0_i32, %c0_i32_0, %c0_i32_1 : i32, i32, i32
  }
  func.func @transform_16(%arg0: i32) -> (i32, i32) {
    %c0_i32 = arith.constant 0 : i32
    %c0_i32_0 = arith.constant 0 : i32
    %c0_i32_1 = arith.constant 0 : i32
    return %c0_i32, %c0_i32_0 : i32, i32
  }
  func.func @transform_17(%arg0: i32) -> (i32, i32) {
    %c0_i32 = arith.constant 0 : i32
    %c0_i32_0 = arith.constant 0 : i32
    %c0_i32_1 = arith.constant 0 : i32
    return %c0_i32, %c0_i32_0 : i32, i32
  }
  func.func @transform_18(%arg0: i32) -> (i32, i32) {
    %c0_i32 = arith.constant 0 : i32
    %c0_i32_0 = arith.constant 0 : i32
    %c0_i32_1 = arith.constant 0 : i32
    return %c0_i32, %c0_i32_0 : i32, i32
  }
  func.func @transform_19(%arg0: i32) -> (i32, i32) {
    %c0_i32 = arith.constant 0 : i32
    %c0_i32_0 = arith.constant 0 : i32
    %c0_i32_1 = arith.constant 0 : i32
    return %c0_i32, %c0_i32_0 : i32, i32
  }
  func.func @transform_20(%arg0: i32) -> (i32, i32) {
    %c0_i32 = arith.constant 0 : i32
    %c0_i32_0 = arith.constant 0 : i32
    %c0_i32_1 = arith.constant 0 : i32
    return %c0_i32, %c0_i32_0 : i32, i32
  }
  func.func @transform_21(%arg0: i32) -> (i32, i32, i32) {
    %c0_i32 = arith.constant 0 : i32
    %c0_i32_0 = arith.constant 0 : i32
    %c0_i32_1 = arith.constant 0 : i32
    return %arg0, %c0_i32, %c0_i32_0 : i32, i32, i32
  }
}

</mosaic_0001>

<llo_original>
// kernel: vgg_forward.1
$region0: #{vgg_forward.1}
  #allocation0 [shape = 'u32[]', space=smem, size = 0x4, offset = 0x4, fixed_abs, tag = 'smem constant byte address 0x4 - core index']
  #allocation1 [shape = 'u32[144,128]{1,0:T(1,128)}', space=vmem, size = 0x12000, scoped, tag = 'internal scratch']
  #allocation2 [shape = 'f32[34,34]{1,0:T(8,128)}', space=vmem, size = 0x5000, scoped, tag = 'scratch operand']
  #allocation3 [shape = 'f32[18,72]{1,0:T(8,128)}', space=vmem, size = 0x3000, scoped, tag = 'scratch operand']
  #allocation4 [shape = 'f32[18,144]{1,0:T(8,128)}', space=vmem, size = 0x6000, scoped, tag = 'scratch operand']
  %s0 = inlined_call_operand.hbm [shape: f32[2,32,32], index: 0, kind: input, shape index: {}]
  %s1 = inlined_call_operand.hbm [shape: f32[3,34,128], index: 1, kind: input, shape index: {}]
  %s2 = inlined_call_operand.vmem [shape: f32[1,128], index: 2, kind: input, shape index: {}]
  %s3 = inlined_call_operand.vmem [shape: f32[128,64], index: 3, kind: input, shape index: {}]
  %s4 = inlined_call_operand.vmem [shape: f32[128,64], index: 4, kind: input, shape index: {}]
  %s5 = inlined_call_operand.vmem [shape: f32[16,32], index: 5, kind: input, shape index: {}]
  %s6 = inlined_call_operand.vmem [shape: f32[16,32], index: 6, kind: input, shape index: {}]
  %s7 = inlined_call_operand.hbm [shape: f32[3,72,128], index: 7, kind: input, shape index: {}]
  %s8 = inlined_call_operand.vmem [shape: f32[1,128], index: 8, kind: input, shape index: {}]
  %s9 = inlined_call_operand.vmem [shape: f32[3,144,128], index: 9, kind: input, shape index: {}]
  %s10 = inlined_call_operand.vmem [shape: f32[1,128], index: 10, kind: input, shape index: {}]
  %s11 = inlined_call_operand.vmem [shape: f32[128,64], index: 11, kind: input, shape index: {}]
  %s12 = inlined_call_operand.vmem [shape: f32[128,64], index: 12, kind: input, shape index: {}]
  %s13 = inlined_call_operand.vmem [shape: f32[8,16], index: 13, kind: input, shape index: {}]
  %s14 = inlined_call_operand.hbm [shape: f32[8,16], index: 14, kind: input, shape index: {}]
  %s15 = inlined_call_operand.hbm [shape: bf16[8,64,512], index: 15, kind: input, shape index: {}]
  %s16 = inlined_call_operand.vmem [shape: f32[1,512], index: 16, kind: input, shape index: {}]
  %s17 = inlined_call_operand.hbm [shape: bf16[512,512], index: 17, kind: input, shape index: {}]
  %s18 = inlined_call_operand.hbm [shape: f32[1,512], index: 18, kind: input, shape index: {}]
  %s19 = inlined_call_operand.vmem [shape: bf16[512,128], index: 19, kind: input, shape index: {}]
  %s20 = inlined_call_operand.hbm [shape: f32[1,128], index: 20, kind: input, shape index: {}]
  %s21 = inlined_call_operand.hbm [shape: f32[2,1,128], index: 21, kind: output, shape index: {}]
  %s22 = sld [smem:[#allocation0]]
  $region149: #{vgg_forward.1} parent=0
    _
  %s24 = ssub.s32 1, %s22
  %s25 = scalar_select 0, %s24, %s22
  $region1: #{vgg_forward.1} parent=0
    #allocation5 [shape = 'u8[32768]{0}', space=vmem, size = 0x8000, scoped, tag = 'input window, operand 0']
    #allocation6 [shape = 's32[2]{0}', space=sflag, size = 0x8, scoped, tag = 'scoped memory for vgg_forward.1']
    #allocation7 [shape = 's32[2]{0}', space=sflag, size = 0x8, scoped, tag = 'scoped memory for vgg_forward.1']
    #allocation8 [shape = 'u8[61440]{0}', space=vmem, size = 0xf000, scoped, tag = 'input window, operand 1, single buffered']
    #allocation9 [shape = 's32[1]{0}', space=sflag, size = 0x4, scoped, tag = 'scoped memory for vgg_forward.1']
    #allocation10 [shape = 'u8[110592]{0}', space=vmem, size = 0x1b000, scoped, tag = 'input window, operand 7, single buffered']
    #allocation11 [shape = 'u8[4096]{0}', space=vmem, size = 0x1000, scoped, tag = 'input window, operand 14, single buffered']
    #allocation12 [shape = 's32[1]{0}', space=sflag, size = 0x4, scoped, tag = 'scoped memory for vgg_forward.1']
    #allocation13 [shape = 'u8[524288]{0}', space=vmem, size = 0x80000, scoped, tag = 'input window, operand 15, single buffered']
    #allocation14 [shape = 'u8[524288]{0}', space=vmem, size = 0x80000, scoped, tag = 'input window, operand 17, single buffered']
    #allocation15 [shape = 's32[1]{0}', space=sflag, size = 0x4, scoped, tag = 'scoped memory for vgg_forward.1']
    #allocation16 [shape = 'u8[2048]{0}', space=vmem, size = 0x800, scoped, tag = 'input window, operand 18, single buffered']
    #allocation17 [shape = 'u8[512]{0}', space=vmem, size = 0x400, scoped, tag = 'input window, operand 20, single buffered']
    #allocation18 [shape = 's32[1]{0}', space=sflag, size = 0x4, scoped, tag = 'scoped memory for vgg_forward.1']
    #allocation19 [shape = 'u8[1024]{0}', space=vmem, size = 0x400, scoped, tag = 'output window, operand 0']
    %26 = vsyncpa [#allocation6], 0
    %s27 = scalar_lea.sflag [#allocation6], 1
    %28 = vsyncpa %s27, 0
    %29 = vsyncpa [#allocation9], 0
    %30 = vsyncpa [#allocation12], 0
    %31 = vsyncpa [#allocation15], 0
    %32 = vsyncpa [#allocation18], 0
    %33 = vsyncpa [#allocation7], 0
    %s34 = scalar_lea.sflag [#allocation7], 1
    %35 = vsyncpa %s34, 0
    loop: start=0, step=1, limit=4
    $region2: #{vgg_forward.1} parent=1 // loop_pre_header
      _
    $region3: #{vgg_forward.1} parent=1 // loop_header
      %s37 = sphi 0, %s41
      %p38 = scmp.ge.s32.totalorder %s37, 4
      %s47 = sphi 0, %s49
      %s50 = sphi 0, %s47
      %s51 = sphi 0, %s50
      %s67 = sphi 0, %s51
      %s71 = sphi 0, %s71
      %s73 = sphi 0, %s71
      %s74 = sphi 0, %s73
      %s88 = sphi 0, %s74
      %s92 = sphi 0, %s92
      %s94 = sphi 0, %s92
      %s95 = sphi 0, %s94
      %s109 = sphi 0, %s95
      %s113 = sphi 0, %s113
      %s115 = sphi 0, %s113
      %s116 = sphi 0, %s115
      %s130 = sphi 0, %s116
      %s134 = sphi 0, %s134
      %s136 = sphi 0, %s134
      %s137 = sphi 0, %s136
      %s151 = sphi 0, %s137
      %s155 = sphi 0, %s155
      %s157 = sphi 0, %s155
      %s158 = sphi 0, %s157
      %s172 = sphi 0, %s158
      %s176 = sphi 0, %s176
      %s178 = sphi 0, %s176
      %s179 = sphi 0, %s178
      %s193 = sphi 0, %s179
      %s197 = sphi 0, %s197
      %s199 = sphi 0, %s197
      %s200 = sphi 0, %s199
      %s214 = sphi 0, %s200
      %s218 = sphi 0, %s218
      %s220 = sphi 0, %s218
      %s221 = sphi 0, %s220
      %s235 = sphi 0, %s221
      %s239 = sphi 0, %s239
      %s241 = sphi 0, %s239
      %s242 = sphi 0, %s241
      %s256 = sphi 0, %s242
      %s260 = sphi 0, %s260
      %s262 = sphi 0, %s260
      %s263 = sphi 0, %s262
      %s277 = sphi 0, %s263
      %s281 = sphi 0, %s281
      %s283 = sphi 0, %s281
      %s284 = sphi 0, %s283
      %s298 = sphi 0, %s284
      %s302 = sphi 0, %s302
      %s304 = sphi 0, %s302
      %s305 = sphi 0, %s304
      %s319 = sphi 0, %s305
      %s323 = sphi 0, %s323
      %s325 = sphi 0, %s323
      %s326 = sphi 0, %s325
      %s340 = sphi 0, %s326
      %s344 = sphi 0, %s344
      %s346 = sphi 0, %s344
      %s347 = sphi 0, %s346
      %s361 = sphi 0, %s347
      %s365 = sphi 0, %s365
      %s367 = sphi 0, %s365
      %s368 = sphi 0, %s367
      %s382 = sphi 0, %s368
      %s386 = sphi 0, %s386
      %s388 = sphi 0, %s386
      %s389 = sphi 0, %s388
      %s403 = sphi 0, %s389
      %s407 = sphi 0, %s407
      %s409 = sphi 0, %s407
      %s410 = sphi 0, %s409
      %s424 = sphi 0, %s410
      %s428 = sphi 0, %s428
      %s430 = sphi 0, %s428
      %s431 = sphi 0, %s430
      %s445 = sphi 0, %s431
      %s449 = sphi 0, %s449
      %s451 = sphi 0, %s449
      %s452 = sphi 0, %s451
      %s466 = sphi 0, %s452
      %s470 = sphi 0, %s470
      %s472 = sphi 0, %s470
      %s473 = sphi 0, %s472
      %s487 = sphi 0, %s473
      %s493 = sphi 0, %s495
      %s496 = sphi 0, %s493
      %s497 = sphi 0, %s496
      %s513 = sphi 0, %s497
    $region4: #{vgg_forward.1} parent=1 // loop_header_branch
      %40 = sbr.rel (%p38) target = $region8
    $region5: #{vgg_forward.1} parent=1 // loop_body
      %s42 = ssub.s32 %s37, 1
      %s43 = ssub.s32 %s37, 2
      %s44 = sadd.s32 %s37, 1
      %s45 = ssub.s32 %s37, %s44
      %p46 = scmp.eq.s32.totalorder %s45, 0
      %s48 = sadd.s32 %s47, 1
      %s49 = scalar_select %p46, %s47, %s48
      %p52 = pneg %p46
      %p53 = scmp.eq.s32.totalorder %s37, 1
      %p54 = por %p52, %p53
      %p55 = scmp.ne.s32.totalorder %s47, %s50
      %p56 = scmp.eq.s32.totalorder %s37, 0
      %p57 = por %p55, %p56
      %p58 = scmp.ne.s32.totalorder %s47, %s50
      %p59 = scmp.eq.s32.totalorder %s42, 1
      %p60 = por %p58, %p59
      %p61 = scmp.ne.s32.totalorder %s50, %s51
      %p62 = scmp.eq.s32.totalorder %s42, 0
      %p63 = por %p61, %p62
      %p64 = scmp.ne.s32.totalorder %s50, %s51
      %p65 = scmp.eq.s32.totalorder %s43, 1
      %p66 = por %p64, %p65
      %p68 = scmp.ne.s32.totalorder %s51, %s67
      %p69 = scmp.eq.s32.totalorder %s43, 0
      %p70 = por %p68, %p69
      %s72 = sadd.s32 %s71, 1
      %p75 = scmp.eq.s32.totalorder %s37, 1
      %p76 = scmp.ne.s32.totalorder %s71, %s73
      %p77 = scmp.eq.s32.totalorder %s37, 0
      %p78 = por %p76, %p77
      %p79 = scmp.ne.s32.totalorder %s71, %s73
      %p80 = scmp.eq.s32.totalorder %s42, 1
      %p81 = por %p79, %p80
      %p82 = scmp.ne.s32.totalorder %s73, %s74
      %p83 = scmp.eq.s32.totalorder %s42, 0
      %p84 = por %p82, %p83
      %p85 = scmp.ne.s32.totalorder %s73, %s74
      %p86 = scmp.eq.s32.totalorder %s43, 1
      %p87 = por %p85, %p86
      %p89 = scmp.ne.s32.totalorder %s74, %s88
      %p90 = scmp.eq.s32.totalorder %s43, 0
      %p91 = por %p89, %p90
      %s93 = sadd.s32 %s92, 1
      %p96 = scmp.eq.s32.totalorder %s37, 1
      %p97 = scmp.ne.s32.totalorder %s92, %s94
      %p98 = scmp.eq.s32.totalorder %s37, 0
      %p99 = por %p97, %p98
      %p100 = scmp.ne.s32.totalorder %s92, %s94
      %p101 = scmp.eq.s32.totalorder %s42, 1
      %p102 = por %p100, %p101
      %p103 = scmp.ne.s32.totalorder %s94, %s95
      %p104 = scmp.eq.s32.totalorder %s42, 0
      %p105 = por %p103, %p104
      %p106 = scmp.ne.s32.totalorder %s94, %s95
      %p107 = scmp.eq.s32.totalorder %s43, 1
      %p108 = por %p106, %p107
      %p110 = scmp.ne.s32.totalorder %s95, %s109
      %p111 = scmp.eq.s32.totalorder %s43, 0
      %p112 = por %p110, %p111
      %s114 = sadd.s32 %s113, 1
      %p117 = scmp.eq.s32.totalorder %s37, 1
      %p118 = scmp.ne.s32.totalorder %s113, %s115
      %p119 = scmp.eq.s32.totalorder %s37, 0
      %p120 = por %p118, %p119
      %p121 = scmp.ne.s32.totalorder %s113, %s115
      %p122 = scmp.eq.s32.totalorder %s42, 1
      %p123 = por %p121, %p122
      %p124 = scmp.ne.s32.totalorder %s115, %s116
      %p125 = scmp.eq.s32.totalorder %s42, 0
      %p126 = por %p124, %p125
      %p127 = scmp.ne.s32.totalorder %s115, %s116
      %p128 = scmp.eq.s32.totalorder %s43, 1
      %p129 = por %p127, %p128
      %p131 = scmp.ne.s32.totalorder %s116, %s130
      %p132 = scmp.eq.s32.totalorder %s43, 0
      %p133 = por %p131, %p132
      %s135 = sadd.s32 %s134, 1
      %p138 = scmp.eq.s32.totalorder %s37, 1
      %p139 = scmp.ne.s32.totalorder %s134, %s136
      %p140 = scmp.eq.s32.totalorder %s37, 0
      %p141 = por %p139, %p140
      %p142 = scmp.ne.s32.totalorder %s134, %s136
      %p143 = scmp.eq.s32.totalorder %s42, 1
      %p144 = por %p142, %p143
      %p145 = scmp.ne.s32.totalorder %s136, %s137
      %p146 = scmp.eq.s32.totalorder %s42, 0
      %p147 = por %p145, %p146
      %p148 = scmp.ne.s32.totalorder %s136, %s137
      %p149 = scmp.eq.s32.totalorder %s43, 1
      %p150 = por %p148, %p149
      %p152 = scmp.ne.s32.totalorder %s137, %s151
      %p153 = scmp.eq.s32.totalorder %s43, 0
      %p154 = por %p152, %p153
      %s156 = sadd.s32 %s155, 1
      %p159 = scmp.eq.s32.totalorder %s37, 1
      %p160 = scmp.ne.s32.totalorder %s155, %s157
      %p161 = scmp.eq.s32.totalorder %s37, 0
      %p162 = por %p160, %p161
      %p163 = scmp.ne.s32.totalorder %s155, %s157
      %p164 = scmp.eq.s32.totalorder %s42, 1
      %p165 = por %p163, %p164
      %p166 = scmp.ne.s32.totalorder %s157, %s158
      %p167 = scmp.eq.s32.totalorder %s42, 0
      %p168 = por %p166, %p167
      %p169 = scmp.ne.s32.totalorder %s157, %s158
      %p170 = scmp.eq.s32.totalorder %s43, 1
      %p171 = por %p169, %p170
      %p173 = scmp.ne.s32.totalorder %s158, %s172
      %p174 = scmp.eq.s32.totalorder %s43, 0
      %p175 = por %p173, %p174
      %s177 = sadd.s32 %s176, 1
      %p180 = scmp.eq.s32.totalorder %s37, 1
      %p181 = scmp.ne.s32.totalorder %s176, %s178
      %p182 = scmp.eq.s32.totalorder %s37, 0
      %p183 = por %p181, %p182
      %p184 = scmp.ne.s32.totalorder %s176, %s178
      %p185 = scmp.eq.s32.totalorder %s42, 1
      %p186 = por %p184, %p185
      %p187 = scmp.ne.s32.totalorder %s178, %s179
      %p188 = scmp.eq.s32.totalorder %s42, 0
      %p189 = por %p187, %p188
      %p190 = scmp.ne.s32.totalorder %s178, %s179
      %p191 = scmp.eq.s32.totalorder %s43, 1
      %p192 = por %p190, %p191
      %p194 = scmp.ne.s32.totalorder %s179, %s193
      %p195 = scmp.eq.s32.totalorder %s43, 0
      %p196 = por %p194, %p195
      %s198 = sadd.s32 %s197, 1
      %p201 = scmp.eq.s32.totalorder %s37, 1
      %p202 = scmp.ne.s32.totalorder %s197, %s199
      %p203 = scmp.eq.s32.totalorder %s37, 0
      %p204 = por %p202, %p203
      %p205 = scmp.ne.s32.totalorder %s197, %s199
      %p206 = scmp.eq.s32.totalorder %s42, 1
      %p207 = por %p205, %p206
      %p208 = scmp.ne.s32.totalorder %s199, %s200
      %p209 = scmp.eq.s32.totalorder %s42, 0
      %p210 = por %p208, %p209
      %p211 = scmp.ne.s32.totalorder %s199, %s200
      %p212 = scmp.eq.s32.totalorder %s43, 1
      %p213 = por %p211, %p212
      %p215 = scmp.ne.s32.totalorder %s200, %s214
      %p216 = scmp.eq.s32.totalorder %s43, 0
      %p217 = por %p215, %p216
      %s219 = sadd.s32 %s218, 1
      %p222 = scmp.eq.s32.totalorder %s37, 1
      %p223 = scmp.ne.s32.totalorder %s218, %s220
      %p224 = scmp.eq.s32.totalorder %s37, 0
      %p225 = por %p223, %p224
      %p226 = scmp.ne.s32.totalorder %s218, %s220
      %p227 = scmp.eq.s32.totalorder %s42, 1
      %p228 = por %p226, %p227
      %p229 = scmp.ne.s32.totalorder %s220, %s221
      %p230 = scmp.eq.s32.totalorder %s42, 0
      %p231 = por %p229, %p230
      %p232 = scmp.ne.s32.totalorder %s220, %s221
      %p233 = scmp.eq.s32.totalorder %s43, 1
      %p234 = por %p232, %p233
      %p236 = scmp.ne.s32.totalorder %s221, %s235
      %p237 = scmp.eq.s32.totalorder %s43, 0
      %p238 = por %p236, %p237
      %s240 = sadd.s32 %s239, 1
      %p243 = scmp.eq.s32.totalorder %s37, 1
      %p244 = scmp.ne.s32.totalorder %s239, %s241
      %p245 = scmp.eq.s32.totalorder %s37, 0
      %p246 = por %p244, %p245
      %p247 = scmp.ne.s32.totalorder %s239, %s241
      %p248 = scmp.eq.s32.totalorder %s42, 1
      %p249 = por %p247, %p248
      %p250 = scmp.ne.s32.totalorder %s241, %s242
      %p251 = scmp.eq.s32.totalorder %s42, 0
      %p252 = por %p250, %p251
      %p253 = scmp.ne.s32.totalorder %s241, %s242
      %p254 = scmp.eq.s32.totalorder %s43, 1
      %p255 = por %p253, %p254
      %p257 = scmp.ne.s32.totalorder %s242, %s256
      %p258 = scmp.eq.s32.totalorder %s43, 0
      %p259 = por %p257, %p258
      %s261 = sadd.s32 %s260, 1
      %p264 = scmp.eq.s32.totalorder %s37, 1
      %p265 = scmp.ne.s32.totalorder %s260, %s262
      %p266 = scmp.eq.s32.totalorder %s37, 0
      %p267 = por %p265, %p266
      %p268 = scmp.ne.s32.totalorder %s260, %s262
      %p269 = scmp.eq.s32.totalorder %s42, 1
      %p270 = por %p268, %p269
      %p271 = scmp.ne.s32.totalorder %s262, %s263
      %p272 = scmp.eq.s32.totalorder %s42, 0
      %p273 = por %p271, %p272
      %p274 = scmp.ne.s32.totalorder %s262, %s263
      %p275 = scmp.eq.s32.totalorder %s43, 1
      %p276 = por %p274, %p275
      %p278 = scmp.ne.s32.totalorder %s263, %s277
      %p279 = scmp.eq.s32.totalorder %s43, 0
      %p280 = por %p278, %p279
      %s282 = sadd.s32 %s281, 1
      %p285 = scmp.eq.s32.totalorder %s37, 1
      %p286 = scmp.ne.s32.totalorder %s281, %s283
      %p287 = scmp.eq.s32.totalorder %s37, 0
      %p288 = por %p286, %p287
      %p289 = scmp.ne.s32.totalorder %s281, %s283
      %p290 = scmp.eq.s32.totalorder %s42, 1
      %p291 = por %p289, %p290
      %p292 = scmp.ne.s32.totalorder %s283, %s284
      %p293 = scmp.eq.s32.totalorder %s42, 0
      %p294 = por %p292, %p293
      %p295 = scmp.ne.s32.totalorder %s283, %s284
      %p296 = scmp.eq.s32.totalorder %s43, 1
      %p297 = por %p295, %p296
      %p299 = scmp.ne.s32.totalorder %s284, %s298
      %p300 = scmp.eq.s32.totalorder %s43, 0
      %p301 = por %p299, %p300
      %s303 = sadd.s32 %s302, 1
      %p306 = scmp.eq.s32.totalorder %s37, 1
      %p307 = scmp.ne.s32.totalorder %s302, %s304
      %p308 = scmp.eq.s32.totalorder %s37, 0
      %p309 = por %p307, %p308
      %p310 = scmp.ne.s32.totalorder %s302, %s304
      %p311 = scmp.eq.s32.totalorder %s42, 1
      %p312 = por %p310, %p311
      %p313 = scmp.ne.s32.totalorder %s304, %s305
      %p314 = scmp.eq.s32.totalorder %s42, 0
      %p315 = por %p313, %p314
      %p316 = scmp.ne.s32.totalorder %s304, %s305
      %p317 = scmp.eq.s32.totalorder %s43, 1
      %p318 = por %p316, %p317
      %p320 = scmp.ne.s32.totalorder %s305, %s319
      %p321 = scmp.eq.s32.totalorder %s43, 0
      %p322 = por %p320, %p321
      %s324 = sadd.s32 %s323, 1
      %p327 = scmp.eq.s32.totalorder %s37, 1
      %p328 = scmp.ne.s32.totalorder %s323, %s325
      %p329 = scmp.eq.s32.totalorder %s37, 0
      %p330 = por %p328, %p329
      %p331 = scmp.ne.s32.totalorder %s323, %s325
      %p332 = scmp.eq.s32.totalorder %s42, 1
      %p333 = por %p331, %p332
      %p334 = scmp.ne.s32.totalorder %s325, %s326
      %p335 = scmp.eq.s32.totalorder %s42, 0
      %p336 = por %p334, %p335
      %p337 = scmp.ne.s32.totalorder %s325, %s326
      %p338 = scmp.eq.s32.totalorder %s43, 1
      %p339 = por %p337, %p338
      %p341 = scmp.ne.s32.totalorder %s326, %s340
      %p342 = scmp.eq.s32.totalorder %s43, 0
      %p343 = por %p341, %p342
      %s345 = sadd.s32 %s344, 1
      %p348 = scmp.eq.s32.totalorder %s37, 1
      %p349 = scmp.ne.s32.totalorder %s344, %s346
      %p350 = scmp.eq.s32.totalorder %s37, 0
      %p351 = por %p349, %p350
      %p352 = scmp.ne.s32.totalorder %s344, %s346
      %p353 = scmp.eq.s32.totalorder %s42, 1
      %p354 = por %p352, %p353
      %p355 = scmp.ne.s32.totalorder %s346, %s347
      %p356 = scmp.eq.s32.totalorder %s42, 0
      %p357 = por %p355, %p356
      %p358 = scmp.ne.s32.totalorder %s346, %s347
      %p359 = scmp.eq.s32.totalorder %s43, 1
      %p360 = por %p358, %p359
      %p362 = scmp.ne.s32.totalorder %s347, %s361
      %p363 = scmp.eq.s32.totalorder %s43, 0
      %p364 = por %p362, %p363
      %s366 = sadd.s32 %s365, 1
      %p369 = scmp.eq.s32.totalorder %s37, 1
      %p370 = scmp.ne.s32.totalorder %s365, %s367
      %p371 = scmp.eq.s32.totalorder %s37, 0
      %p372 = por %p370, %p371
      %p373 = scmp.ne.s32.totalorder %s365, %s367
      %p374 = scmp.eq.s32.totalorder %s42, 1
      %p375 = por %p373, %p374
      %p376 = scmp.ne.s32.totalorder %s367, %s368
      %p377 = scmp.eq.s32.totalorder %s42, 0
      %p378 = por %p376, %p377
      %p379 = scmp.ne.s32.totalorder %s367, %s368
      %p380 = scmp.eq.s32.totalorder %s43, 1
      %p381 = por %p379, %p380
      %p383 = scmp.ne.s32.totalorder %s368, %s382
      %p384 = scmp.eq.s32.totalorder %s43, 0
      %p385 = por %p383, %p384
      %s387 = sadd.s32 %s386, 1
      %p390 = scmp.eq.s32.totalorder %s37, 1
      %p391 = scmp.ne.s32.totalorder %s386, %s388
      %p392 = scmp.eq.s32.totalorder %s37, 0
      %p393 = por %p391, %p392
      %p394 = scmp.ne.s32.totalorder %s386, %s388
      %p395 = scmp.eq.s32.totalorder %s42, 1
      %p396 = por %p394, %p395
      %p397 = scmp.ne.s32.totalorder %s388, %s389
      %p398 = scmp.eq.s32.totalorder %s42, 0
      %p399 = por %p397, %p398
      %p400 = scmp.ne.s32.totalorder %s388, %s389
      %p401 = scmp.eq.s32.totalorder %s43, 1
      %p402 = por %p400, %p401
      %p404 = scmp.ne.s32.totalorder %s389, %s403
      %p405 = scmp.eq.s32.totalorder %s43, 0
      %p406 = por %p404, %p405
      %s408 = sadd.s32 %s407, 1
      %p411 = scmp.eq.s32.totalorder %s37, 1
      %p412 = scmp.ne.s32.totalorder %s407, %s409
      %p413 = scmp.eq.s32.totalorder %s37, 0
      %p414 = por %p412, %p413
      %p415 = scmp.ne.s32.totalorder %s407, %s409
      %p416 = scmp.eq.s32.totalorder %s42, 1
      %p417 = por %p415, %p416
      %p418 = scmp.ne.s32.totalorder %s409, %s410
      %p419 = scmp.eq.s32.totalorder %s42, 0
      %p420 = por %p418, %p419
      %p421 = scmp.ne.s32.totalorder %s409, %s410
      %p422 = scmp.eq.s32.totalorder %s43, 1
      %p423 = por %p421, %p422
      %p425 = scmp.ne.s32.totalorder %s410, %s424
      %p426 = scmp.eq.s32.totalorder %s43, 0
      %p427 = por %p425, %p426
      %s429 = sadd.s32 %s428, 1
      %p432 = scmp.eq.s32.totalorder %s37, 1
      %p433 = scmp.ne.s32.totalorder %s428, %s430
      %p434 = scmp.eq.s32.totalorder %s37, 0
      %p435 = por %p433, %p434
      %p436 = scmp.ne.s32.totalorder %s428, %s430
      %p437 = scmp.eq.s32.totalorder %s42, 1
      %p438 = por %p436, %p437
      %p439 = scmp.ne.s32.totalorder %s430, %s431
      %p440 = scmp.eq.s32.totalorder %s42, 0
      %p441 = por %p439, %p440
      %p442 = scmp.ne.s32.totalorder %s430, %s431
      %p443 = scmp.eq.s32.totalorder %s43, 1
      %p444 = por %p442, %p443
      %p446 = scmp.ne.s32.totalorder %s431, %s445
      %p447 = scmp.eq.s32.totalorder %s43, 0
      %p448 = por %p446, %p447
      %s450 = sadd.s32 %s449, 1
      %p453 = scmp.eq.s32.totalorder %s37, 1
      %p454 = scmp.ne.s32.totalorder %s449, %s451
      %p455 = scmp.eq.s32.totalorder %s37, 0
      %p456 = por %p454, %p455
      %p457 = scmp.ne.s32.totalorder %s449, %s451
      %p458 = scmp.eq.s32.totalorder %s42, 1
      %p459 = por %p457, %p458
      %p460 = scmp.ne.s32.totalorder %s451, %s452
      %p461 = scmp.eq.s32.totalorder %s42, 0
      %p462 = por %p460, %p461
      %p463 = scmp.ne.s32.totalorder %s451, %s452
      %p464 = scmp.eq.s32.totalorder %s43, 1
      %p465 = por %p463, %p464
      %p467 = scmp.ne.s32.totalorder %s452, %s466
      %p468 = scmp.eq.s32.totalorder %s43, 0
      %p469 = por %p467, %p468
      %s471 = sadd.s32 %s470, 1
      %p474 = scmp.eq.s32.totalorder %s37, 1
      %p475 = scmp.ne.s32.totalorder %s470, %s472
      %p476 = scmp.eq.s32.totalorder %s37, 0
      %p477 = por %p475, %p476
      %p478 = scmp.ne.s32.totalorder %s470, %s472
      %p479 = scmp.eq.s32.totalorder %s42, 1
      %p480 = por %p478, %p479
      %p481 = scmp.ne.s32.totalorder %s472, %s473
      %p482 = scmp.eq.s32.totalorder %s42, 0
      %p483 = por %p481, %p482
      %p484 = scmp.ne.s32.totalorder %s472, %s473
      %p485 = scmp.eq.s32.totalorder %s43, 1
      %p486 = por %p484, %p485
      %p488 = scmp.ne.s32.totalorder %s473, %s487
      %p489 = scmp.eq.s32.totalorder %s43, 0
      %p490 = por %p488, %p489
      %s491 = ssub.s32 %s37, %s44
      %p492 = scmp.eq.s32.totalorder %s491, 0
      %s494 = sadd.s32 %s493, 1
      %s495 = scalar_select %p492, %s493, %s494
      %p498 = pneg %p492
      %p499 = scmp.eq.s32.totalorder %s37, 1
      %p500 = por %p498, %p499
      %p501 = scmp.ne.s32.totalorder %s493, %s496
      %p502 = scmp.eq.s32.totalorder %s37, 0
      %p503 = por %p501, %p502
      %p504 = scmp.ne.s32.totalorder %s493, %s496
      %p505 = scmp.eq.s32.totalorder %s42, 1
      %p506 = por %p504, %p505
      %p507 = scmp.ne.s32.totalorder %s496, %s497
      %p508 = scmp.eq.s32.totalorder %s42, 0
      %p509 = por %p507, %p508
      %p510 = scmp.ne.s32.totalorder %s496, %s497
      %p511 = scmp.eq.s32.totalorder %s43, 1
      %p512 = por %p510, %p511
      %p514 = scmp.ne.s32.totalorder %s497, %s513
      %p515 = scmp.eq.s32.totalorder %s43, 0
      %p516 = por %p514, %p515
      %p517 = scmp.le.s32.totalorder 1, %s37
      %p518 = scmp.lt.s32.totalorder %s37, 3
      %p519 = pnand %p517, %p518
      %p520 = pneg %p519
      // Predicated region
      $region9: #{vgg_forward.1} parent=5 // pred_check
        _
      $region10: #{vgg_forward.1} parent=5 // pred_check_branch
        %522 = sbr.rel (%p519) target = $region12
      $region11: #{vgg_forward.1} parent=5 // pred_region
        %s523 = ssub.s32 %s37, 1
        // Predicated region
        $region13: #{vgg_forward.1} parent=11 // pred_check
          %p524 = pneg %p84
        $region14: #{vgg_forward.1} parent=11 // pred_check_branch
          %526 = sbr.rel (%p524) target = $region16
        $region15: #{vgg_forward.1} parent=11 // pred_region
          %s528 = ssub.s32 1920, 1920
          %529 = vsyncadd [#allocation9], %s528
          %s530 = sshll.u32 [#allocation8], 4
          %s531 = int_to_ptr.vmem [resolvable:$true] %s530
          %536 = dma.hbm_to_vmem [thread:$0]  %s1, 1920, %s531, [#allocation9], 128, 128, 8
        $region16: #{vgg_forward.1} parent=11 // pred_fallthru
          _
        // Predicated region
        $region17: #{vgg_forward.1} parent=11 // pred_check
          %p537 = pneg %p105
        $region18: #{vgg_forward.1} parent=11 // pred_check_branch
          %539 = sbr.rel (%p537) target = $region20
        $region19: #{vgg_forward.1} parent=11 // pred_region
          _
        $region20: #{vgg_forward.1} parent=11 // pred_fallthru
          _
        // Predicated region
        $region21: #{vgg_forward.1} parent=11 // pred_check
          %p540 = pneg %p126
        $region22: #{vgg_forward.1} parent=11 // pred_check_branch
          %542 = sbr.rel (%p540) target = $region24
        $region23: #{vgg_forward.1} parent=11 // pred_region
          _
        $region24: #{vgg_forward.1} parent=11 // pred_fallthru
          _
        // Predicated region
        $region25: #{vgg_forward.1} parent=11 // pred_check
          %p543 = pneg %p147
        $region26: #{vgg_forward.1} parent=11 // pred_check_branch
          %545 = sbr.rel (%p543) target = $region28
        $region27: #{vgg_forward.1} parent=11 // pred_region
          _
        $region28: #{vgg_forward.1} parent=11 // pred_fallthru
          _
        // Predicated region
        $region29: #{vgg_forward.1} parent=11 // pred_check
          %p546 = pneg %p168
        $region30: #{vgg_forward.1} parent=11 // pred_check_branch
          %548 = sbr.rel (%p546) target = $region32
        $region31: #{vgg_forward.1} parent=11 // pred_region
          _
        $region32: #{vgg_forward.1} parent=11 // pred_fallthru
          _
        // Predicated region
        $region33: #{vgg_forward.1} parent=11 // pred_check
          %p549 = pneg %p189
        $region34: #{vgg_forward.1} parent=11 // pred_check_branch
          %551 = sbr.rel (%p549) target = $region36
        $region35: #{vgg_forward.1} parent=11 // pred_region
          _
        $region36: #{vgg_forward.1} parent=11 // pred_fallthru
          _
        // Predicated region
        $region37: #{vgg_forward.1} parent=11 // pred_check
          %p552 = pneg %p210
        $region38: #{vgg_forward.1} parent=11 // pred_check_branch
          %554 = sbr.rel (%p552) target = $region40
        $region39: #{vgg_forward.1} parent=11 // pred_region
          %s556 = ssub.s32 3456, 3456
          %557 = vsyncadd [#allocation9], %s556
          %s558 = sshll.u32 [#allocation10], 4
          %s559 = int_to_ptr.vmem [resolvable:$true] %s558
          %564 = dma.hbm_to_vmem [thread:$0]  %s7, 3456, %s559, [#allocation9], 128, 128, 8
        $region40: #{vgg_forward.1} parent=11 // pred_fallthru
          _
        // Predicated region
        $region41: #{vgg_forward.1} parent=11 // pred_check
          %p565 = pneg %p231
        $region42: #{vgg_forward.1} parent=11 // pred_check_branch
          %567 = sbr.rel (%p565) target = $region44
        $region43: #{vgg_forward.1} parent=11 // pred_region
          _
        $region44: #{vgg_forward.1} parent=11 // pred_fallthru
          _
        // Predicated region
        $region45: #{vgg_forward.1} parent=11 // pred_check
          %p568 = pneg %p252
        $region46: #{vgg_forward.1} parent=11 // pred_check_branch
          %570 = sbr.rel (%p568) target = $region48
        $region47: #{vgg_forward.1} parent=11 // pred_region
          _
        $region48: #{vgg_forward.1} parent=11 // pred_fallthru
          _
        // Predicated region
        $region49: #{vgg_forward.1} parent=11 // pred_check
          %p571 = pneg %p273
        $region50: #{vgg_forward.1} parent=11 // pred_check_branch
          %573 = sbr.rel (%p571) target = $region52
        $region51: #{vgg_forward.1} parent=11 // pred_region
          _
        $region52: #{vgg_forward.1} parent=11 // pred_fallthru
          _
        // Predicated region
        $region53: #{vgg_forward.1} parent=11 // pred_check
          %p574 = pneg %p294
        $region54: #{vgg_forward.1} parent=11 // pred_check_branch
          %576 = sbr.rel (%p574) target = $region56
        $region55: #{vgg_forward.1} parent=11 // pred_region
          _
        $region56: #{vgg_forward.1} parent=11 // pred_fallthru
          _
        // Predicated region
        $region57: #{vgg_forward.1} parent=11 // pred_check
          %p577 = pneg %p315
        $region58: #{vgg_forward.1} parent=11 // pred_check_branch
          %579 = sbr.rel (%p577) target = $region60
        $region59: #{vgg_forward.1} parent=11 // pred_region
          _
        $region60: #{vgg_forward.1} parent=11 // pred_fallthru
          _
        // Predicated region
        $region61: #{vgg_forward.1} parent=11 // pred_check
          %p580 = pneg %p336
        $region62: #{vgg_forward.1} parent=11 // pred_check_branch
          %582 = sbr.rel (%p580) target = $region64
        $region63: #{vgg_forward.1} parent=11 // pred_region
          _
        $region64: #{vgg_forward.1} parent=11 // pred_fallthru
          _
        // Predicated region
        $region65: #{vgg_forward.1} parent=11 // pred_check
          %p583 = pneg %p357
        $region66: #{vgg_forward.1} parent=11 // pred_check_branch
          %585 = sbr.rel (%p583) target = $region68
        $region67: #{vgg_forward.1} parent=11 // pred_region
          %s587 = ssub.s32 128, 128
          %588 = vsyncadd [#allocation12], %s587
          %s590 = sshll.u32 [#allocation11], 4
          %s591 = int_to_ptr.vmem [resolvable:$true] %s590
          %593 = dma.hbm_to_vmem [thread:$0]  %s14, 128, %s591, [#allocation12]
        $region68: #{vgg_forward.1} parent=11 // pred_fallthru
          _
        // Predicated region
        $region69: #{vgg_forward.1} parent=11 // pred_check
          %p594 = pneg %p378
        $region70: #{vgg_forward.1} parent=11 // pred_check_branch
          %596 = sbr.rel (%p594) target = $region72
        $region71: #{vgg_forward.1} parent=11 // pred_region
          %s598 = ssub.s32 16384, 16384
          %599 = vsyncadd [#allocation12], %s598
          %s600 = sshll.u32 [#allocation13], 4
          %s601 = int_to_ptr.vmem [resolvable:$true] %s600
          %606 = dma.hbm_to_vmem [thread:$0]  %s15, 16384, %s601, [#allocation12], 256, 256, 16
        $region72: #{vgg_forward.1} parent=11 // pred_fallthru
          _
        // Predicated region
        $region73: #{vgg_forward.1} parent=11 // pred_check
          %p607 = pneg %p399
        $region74: #{vgg_forward.1} parent=11 // pred_check_branch
          %609 = sbr.rel (%p607) target = $region76
        $region75: #{vgg_forward.1} parent=11 // pred_region
          _
        $region76: #{vgg_forward.1} parent=11 // pred_fallthru
          _
        // Predicated region
        $region77: #{vgg_forward.1} parent=11 // pred_check
          %p610 = pneg %p420
        $region78: #{vgg_forward.1} parent=11 // pred_check_branch
          %612 = sbr.rel (%p610) target = $region80
        $region79: #{vgg_forward.1} parent=11 // pred_region
          %s614 = ssub.s32 16384, 16384
          %615 = vsyncadd [#allocation15], %s614
          %s616 = sshll.u32 [#allocation14], 4
          %s617 = int_to_ptr.vmem [resolvable:$true] %s616
          %622 = dma.hbm_to_vmem [thread:$0]  %s17, 16384, %s617, [#allocation15], 256, 256, 16
        $region80: #{vgg_forward.1} parent=11 // pred_fallthru
          _
        // Predicated region
        $region81: #{vgg_forward.1} parent=11 // pred_check
          %p623 = pneg %p441
        $region82: #{vgg_forward.1} parent=11 // pred_check_branch
          %625 = sbr.rel (%p623) target = $region84
        $region83: #{vgg_forward.1} parent=11 // pred_region
          %s627 = ssub.s32 64, 64
          %628 = vsyncadd [#allocation15], %s627
          %s630 = sshll.u32 [#allocation16], 4
          %s631 = int_to_ptr.vmem [resolvable:$true] %s630
          %633 = dma.hbm_to_vmem [thread:$0]  %s18, 64, %s631, [#allocation15]
        $region84: #{vgg_forward.1} parent=11 // pred_fallthru
          _
        // Predicated region
        $region85: #{vgg_forward.1} parent=11 // pred_check
          %p634 = pneg %p462
        $region86: #{vgg_forward.1} parent=11 // pred_check_branch
          %636 = sbr.rel (%p634) target = $region88
        $region87: #{vgg_forward.1} parent=11 // pred_region
          _
        $region88: #{vgg_forward.1} parent=11 // pred_fallthru
          _
        // Predicated region
        $region89: #{vgg_forward.1} parent=11 // pred_check
          %p637 = pneg %p483
        $region90: #{vgg_forward.1} parent=11 // pred_check_branch
          %639 = sbr.rel (%p637) target = $region92
        $region91: #{vgg_forward.1} parent=11 // pred_region
          %s641 = ssub.s32 16, 16
          %642 = vsyncadd [#allocation18], %s641
          %s644 = sshll.u32 [#allocation17], 4
          %s645 = int_to_ptr.vmem [resolvable:$true] %s644
          %647 = dma.hbm_to_vmem [thread:$0]  %s20, 16, %s645, [#allocation18]
        $region92: #{vgg_forward.1} parent=11 // pred_fallthru
          _
      $region12: #{vgg_forward.1} parent=5 // pred_fallthru
        _
      %p648 = scmp.lt.s32.totalorder %s37, 2
      // Predicated region
      $region93: #{vgg_forward.1} parent=5 // pred_check
        %p649 = pneg %p648
      $region94: #{vgg_forward.1} parent=5 // pred_check_branch
        %651 = sbr.rel (%p649) target = $region96
      $region95: #{vgg_forward.1} parent=5 // pred_region
        // Predicated region
        $region97: #{vgg_forward.1} parent=95 // pred_check
          %p652 = pneg %p57
        $region98: #{vgg_forward.1} parent=95 // pred_check_branch
          %654 = sbr.rel (%p652) target = $region100
        $region99: #{vgg_forward.1} parent=95 // pred_region
          %s655 = sand.u32 %s47, 1
          %s656 = scalar_lea.sflag [#allocation6], %s655
          %s657 = sand.u32 %s47, 1
          %s658 = smul.addr %s657, 32
          %s659 = scalar_lea.vmem [#allocation5], %s658
          %s661 = ssub.s32 512, 512
          %662 = vsyncadd %s656, %s661
          %s663 = smul.addr %s37, 4
          %s664 = smul.addr %s663, 128
          %s665 = scalar_lea.hbm %s0, %s664
          %s666 = sshll.u32 %s659, 4
          %s667 = int_to_ptr.vmem [resolvable:$true] %s666
          %672 = dma.hbm_to_vmem [thread:$0]  %s665, 512, %s667, %s656, 128, 128, 8
        $region100: #{vgg_forward.1} parent=95 // pred_fallthru
          _
      $region96: #{vgg_forward.1} parent=5 // pred_fallthru
        _
      %p673 = scmp.le.s32.totalorder 1, %s37
      %p674 = scmp.lt.s32.totalorder %s37, 3
      %p675 = pnand %p673, %p674
      %p676 = pneg %p675
      // Predicated region
      $region101: #{vgg_forward.1} parent=5 // pred_check
        _
      $region102: #{vgg_forward.1} parent=5 // pred_check_branch
        %678 = sbr.rel (%p675) target = $region104
      $region103: #{vgg_forward.1} parent=5 // pred_region
        %s679 = ssub.s32 %s37, 1
        %s680 = sand.u32 %s50, 1
        %s681 = scalar_lea.sflag [#allocation6], %s680
        %s682 = sand.u32 %s50, 1
        %s683 = smul.addr %s682, 32
        %s684 = scalar_lea.vmem [#allocation5], %s683
        // Predicated region
        $region105: #{vgg_forward.1} parent=103 // pred_check
          %p685 = pneg %p63
        $region106: #{vgg_forward.1} parent=103 // pred_check_branch
          %687 = sbr.rel (%p685) target = $region108
        $region107: #{vgg_forward.1} parent=103 // pred_region
          %688 = dma.done %s681, 512
        $region108: #{vgg_forward.1} parent=103 // pred_fallthru
          _
        // Predicated region
        $region109: #{vgg_forward.1} parent=103 // pred_check
          %p689 = pneg %p84
        $region110: #{vgg_forward.1} parent=103 // pred_check_branch
          %691 = sbr.rel (%p689) target = $region112
        $region111: #{vgg_forward.1} parent=103 // pred_region
          %692 = dma.done [#allocation9], 1920
        $region112: #{vgg_forward.1} parent=103 // pred_fallthru
          _
        // Predicated region
        $region113: #{vgg_forward.1} parent=103 // pred_check
          %p693 = pneg %p210
        $region114: #{vgg_forward.1} parent=103 // pred_check_branch
          %695 = sbr.rel (%p693) target = $region116
        $region115: #{vgg_forward.1} parent=103 // pred_region
          %696 = dma.done [#allocation9], 3456
        $region116: #{vgg_forward.1} parent=103 // pred_fallthru
          _
        // Predicated region
        $region117: #{vgg_forward.1} parent=103 // pred_check
          %p697 = pneg %p357
        $region118: #{vgg_forward.1} parent=103 // pred_check_branch
          %699 = sbr.rel (%p697) target = $region120
        $region119: #{vgg_forward.1} parent=103 // pred_region
          %700 = dma.done [#allocation12], 128
        $region120: #{vgg_forward.1} parent=103 // pred_fallthru
          _
        // Predicated region
        $region121: #{vgg_forward.1} parent=103 // pred_check
          %p701 = pneg %p378
        $region122: #{vgg_forward.1} parent=103 // pred_check_branch
          %703 = sbr.rel (%p701) target = $region124
        $region123: #{vgg_forward.1} parent=103 // pred_region
          %704 = dma.done [#allocation12], 16384
        $region124: #{vgg_forward.1} parent=103 // pred_fallthru
          _
        // Predicated region
        $region125: #{vgg_forward.1} parent=103 // pred_check
          %p705 = pneg %p420
        $region126: #{vgg_forward.1} parent=103 // pred_check_branch
          %707 = sbr.rel (%p705) target = $region128
        $region127: #{vgg_forward.1} parent=103 // pred_region
          %708 = dma.done [#allocation15], 16384
        $region128: #{vgg_forward.1} parent=103 // pred_fallthru
          _
        // Predicated region
        $region129: #{vgg_forward.1} parent=103 // pred_check
          %p709 = pneg %p441
        $region130: #{vgg_forward.1} parent=103 // pred_check_branch
          %711 = sbr.rel (%p709) target = $region132
        $region131: #{vgg_forward.1} parent=103 // pred_region
          %712 = dma.done [#allocation15], 64
        $region132: #{vgg_forward.1} parent=103 // pred_fallthru
          _
        // Predicated region
        $region133: #{vgg_forward.1} parent=103 // pred_check
          %p713 = pneg %p483
        $region134: #{vgg_forward.1} parent=103 // pred_check_branch
          %715 = sbr.rel (%p713) target = $region136
        $region135: #{vgg_forward.1} parent=103 // pred_region
          %716 = dma.done [#allocation18], 16
        $region136: #{vgg_forward.1} parent=103 // pred_fallthru
          _
        %s717 = sand.u32 %s50, 1
        %s718 = scalar_lea.sflag [#allocation6], %s717
        %s719 = sand.u32 %s50, 1
        %s720 = smul.addr %s719, 32
        %s721 = scalar_lea.vmem [#allocation5], %s720
        %p722 = pneg %p63
        %p723 = pneg %p60
        %p724 = pneg %p84
        %p725 = pneg %p81
        %p726 = pneg %p105
        %p727 = pneg %p102
        %p728 = pneg %p126
        %p729 = pneg %p123
        %p730 = pneg %p147
        %p731 = pneg %p144
        %p732 = pneg %p168
        %p733 = pneg %p165
        %p734 = pneg %p189
        %p735 = pneg %p186
        %p736 = pneg %p210
        %p737 = pneg %p207
        %p738 = pneg %p231
        %p739 = pneg %p228
        %p740 = pneg %p252
        %p741 = pneg %p249
        %p742 = pneg %p273
        %p743 = pneg %p270
        %p744 = pneg %p294
        %p745 = pneg %p291
        %p746 = pneg %p315
        %p747 = pneg %p312
        %p748 = pneg %p336
        %p749 = pneg %p333
        %p750 = pneg %p357
        %p751 = pneg %p354
        %p752 = pneg %p378
        %p753 = pneg %p375
        %p754 = pneg %p399
        %p755 = pneg %p396
        %p756 = pneg %p420
        %p757 = pneg %p417
        %p758 = pneg %p441
        %p759 = pneg %p438
        %p760 = pneg %p462
        %p761 = pneg %p459
        %p762 = pneg %p483
        %p763 = pneg %p480
        %p764 = pneg %p509
        %p765 = pneg %p506
        %s766 = sand.u32 %s496, 1
        %s767 = scalar_lea.sflag [#allocation7], %s766
        %s768 = sand.u32 %s496, 1
        %s769 = scalar_lea.vmem [#allocation19], %s768
        %vm771 = vcmask 277504
        %772 = vst.msk [vmem:[#allocation2] sm:$0xff] %vm771, 0.0
        %773 = vst.msk [vmem:[#allocation2 + $0x8] sm:$0xff] %vm771, 0.0
        %774 = vst.msk [vmem:[#allocation2 + $0x10] sm:$0xff] %vm771, 0.0
        %775 = vst.msk [vmem:[#allocation2 + $0x18] sm:$0xff] %vm771, 0.0
        %vm776 = vcmask 271360
        %777 = vst.msk [vmem:[#allocation2 + $0x20] sm:$0x3] %vm776, 0.0
        %vm778 = vcmask 588800
        %779 = vst.msk [vmem:[#allocation3] sm:$0xff] %vm778, 0.0
        %780 = vst.msk [vmem:[#allocation3 + $0x8] sm:$0xff] %vm778, 0.0
        %vm781 = vcmask 582656
        %782 = vst.msk [vmem:[#allocation3 + $0x10] sm:$0x3] %vm781, 0.0
        %783 = vst [vmem:[#allocation4] sm:$0xff] 0.0
        %vm784 = vcmask 130048
        %785 = vst.msk [vmem:[#allocation4 + $0x8] sm:$0xff] %vm784, 0.0
        %786 = vst [vmem:[#allocation4 + $0x10] sm:$0xff] 0.0
        %787 = vst.msk [vmem:[#allocation4 + $0x18] sm:$0xff] %vm784, 0.0
        %788 = vst [vmem:[#allocation4 + $0x20] sm:$0x3] 0.0
        %vm789 = vcmask 123904
        %790 = vst.msk [vmem:[#allocation4 + $0x28] sm:$0x3] %vm789, 0.0
        %v791 = vld [vmem:[%s684] sm:$0xff]
        %v792 = vld [vmem:[%s684 + $0x8] sm:$0xff]
        %v793 = vld [vmem:[%s684 + $0x10] sm:$0xff]
        %v794 = vld [vmem:[%s684 + $0x18] sm:$0xff]
        %799 = vrot.lane.b32.xlu0 %v791, 1
        %v800 = vpop.permute.xlu0 %799
        %801 = vrot.lane.b32.xlu0 %v792, 1
        %v802 = vpop.permute.xlu0 %801
        %803 = vrot.lane.b32.xlu0 %v793, 1
        %v804 = vpop.permute.xlu0 %803
        %805 = vrot.lane.b32.xlu0 %v794, 1
        %v806 = vpop.permute.xlu0 %805
        %vm811 = vcmask 269320
        %812 = vst.msk [vmem:[#allocation2 + $0x1] sm:$0xff] %vm811, %v800
        %813 = vst.msk [vmem:[#allocation2 + $0x9] sm:$0xff] %vm811, %v802
        %814 = vst.msk [vmem:[#allocation2 + $0x11] sm:$0xff] %vm811, %v804
        %815 = vst.msk [vmem:[#allocation2 + $0x19] sm:$0xff] %vm811, %v806
        %v816 = vld [vmem:[#allocation2] sm:$0xff]
        %v817 = vld [vmem:[#allocation2 + $0x8] sm:$0xff]
        %v818 = vld [vmem:[#allocation2 + $0x10] sm:$0xff]
        %v819 = vld [vmem:[#allocation2 + $0x18] sm:$0xff]
        %v820 = vld [vmem:[#allocation8] sm:$0xff]
        %v821 = vld [vmem:[#allocation8 + $0x8] sm:$0xff]
        %v822 = vld [vmem:[#allocation8 + $0x10] sm:$0xff]
        %v823 = vld [vmem:[#allocation8 + $0x18] sm:$0xff]
        %v824 = vld [vmem:[#allocation8 + $0x20] sm:$0x3]
        %v825 = vld [vmem:[#allocation2 + $0x1] sm:$0xff]
        %v826 = vld [vmem:[#allocation2 + $0x9] sm:$0xff]
        %v827 = vld [vmem:[#allocation2 + $0x11] sm:$0xff]
        %v828 = vld [vmem:[#allocation2 + $0x19] sm:$0xff]
        %s829 = scalar_lea.vmem [#allocation8], 40
        %v830 = vld [vmem:[%s829] sm:$0xff]
        %v831 = vld [vmem:[%s829 + $0x8] sm:$0xff]
        %v832 = vld [vmem:[%s829 + $0x10] sm:$0xff]
        %v833 = vld [vmem:[%s829 + $0x18] sm:$0xff]
        %v834 = vld [vmem:[%s829 + $0x20] sm:$0x3]
        %v836 = vsel %vm771, %v825, 0
        %v839 = vsel %vm771, %v826, 0
        %v842 = vsel %vm771, %v827, 0
        %v845 = vsel %vm771, %v828, 0
        %vm847 = vcmask 1041408
        %v849 = vsel %vm847, %v834, 0
        %851 = vmatprep.subr.mxu0 0.0
        %852 = vmatpush1.msra.mxu0 0.0
        %853 = vmatprep.subr.mxu0 0.0
        %854 = vmatpush1.msra.mxu0 0.0
        %855 = vmatprep.subr.mxu0 0.0
        %856 = vmatpush1.msra.mxu0 0.0
        %857 = vmatprep.subr.mxu0 0.0
        %858 = vmatpush1.msra.mxu0 0.0
        %859 = vmatprep.subr.mxu0 0.0
        %860 = vmatpush1.msra.mxu0 0.0
        %861 = vmatprep.subr.mxu0 0.0
        %862 = vmatpush1.msra.mxu0 0.0
        %863 = vmatprep.subr.mxu0 0.0
        %864 = vmatpush1.msra.mxu0 0.0
        %865 = vmatprep.subr.mxu0 0.0
        %866 = vmatpush1.msra.mxu0 0.0
        %867 = vmatprep.subr.mxu0 0.0
        %868 = vmatpush1.msra.mxu0 0.0
        %869 = vmatprep.subr.mxu0 0.0
        %870 = vmatpush1.msra.mxu0 0.0
        %871 = vmatprep.subr.mxu0 0.0
        %872 = vmatpush1.msra.mxu0 0.0
        %873 = vmatprep.subr.mxu0 0.0
        %874 = vmatpush1.msra.mxu0 %v849
        %875 = vmatprep.subr.mxu0 0.0
        %876 = vmatpush1.msra.mxu0 %v833
        %877 = vmatprep.subr.mxu0 0.0
        %878 = vmatpush1.msra.mxu0 %v832
        %879 = vmatprep.subr.mxu0 0.0
        %880 = vmatpush1.msra.mxu0 %v831
        %881 = vmatprep.subr.mxu0 0.0
        %882 = vmatpush1.msra.mxu0 %v830
        %883 = vmatprep.subr.mxu0 0.0
        %884 = vmatpush2.msra.mxu0 0.0
        %885 = vmatprep.subr.mxu0 0.0
        %886 = vmatpush2.msra.mxu0 0.0
        %887 = vmatprep.subr.mxu0 0.0
        %888 = vmatpush2.msra.mxu0 0.0
        %889 = vmatprep.subr.mxu0 0.0
        %890 = vmatpush2.msra.mxu0 0.0
        %891 = vmatprep.subr.mxu0 0.0
        %892 = vmatpush2.msra.mxu0 0.0
        %893 = vmatprep.subr.mxu0 0.0
        %894 = vmatpush2.msra.mxu0 0.0
        %895 = vmatprep.subr.mxu0 0.0
        %896 = vmatpush2.msra.mxu0 0.0
        %897 = vmatprep.subr.mxu0 0.0
        %898 = vmatpush2.msra.mxu0 0.0
        %899 = vmatprep.subr.mxu0 0.0
        %900 = vmatpush2.msra.mxu0 0.0
        %901 = vmatprep.subr.mxu0 0.0
        %902 = vmatpush2.msra.mxu0 0.0
        %903 = vmatprep.subr.mxu0 0.0
        %904 = vmatpush2.msra.mxu0 0.0
        %905 = vmatprep.subr.mxu0 0.0
        %906 = vmatpush2.msra.mxu0 0.0
        %907 = vmatprep.subr.mxu0 0.0
        %908 = vmatpush2.msra.mxu0 0.0
        %909 = vmatprep.subr.mxu0 0.0
        %910 = vmatpush2.msra.mxu0 0.0
        %911 = vmatprep.subr.mxu0 0.0
        %912 = vmatpush2.msra.mxu0 0.0
        %913 = vmatprep.subr.mxu0 0.0
        %914 = vmatpush2.msra.mxu0 0.0
        %915 = vmatprep.mubr.f32.mxu0 0.0
        %916 = vmatmul.mubr.f32.gmra.mxu0 %v836
        %v917 = vpop.f32.mrf.mxu0
        %v918 = vadd.f32 0.0, %v917
        %v919 = vpop.f32.mrf.mxu0
        %920 = vmatprep.mubr.f32.mxu0 0.0
        %921 = vmatmul.mubr.f32.gmra.mxu0 %v839
        %v922 = vpop.f32.mrf.mxu0
        %v923 = vadd.f32 0.0, %v922
        %v924 = vpop.f32.mrf.mxu0
        %925 = vmatprep.mubr.f32.mxu0 0.0
        %926 = vmatmul.mubr.f32.gmra.mxu0 %v842
        %v927 = vpop.f32.mrf.mxu0
        %v928 = vadd.f32 0.0, %v927
        %v929 = vpop.f32.mrf.mxu0
        %930 = vmatprep.mubr.f32.mxu0 0.0
        %931 = vmatmul.mubr.f32.gmra.mxu0 %v845
        %v932 = vpop.f32.mrf.mxu0
        %v933 = vadd.f32 0.0, %v932
        %v934 = vpop.f32.mrf.mxu0
        %935 = vdwg.mxu0
        %v937 = vsel %vm771, %v816, 0
        %v940 = vsel %vm771, %v817, 0
        %v943 = vsel %vm771, %v818, 0
        %v946 = vsel %vm771, %v819, 0
        %v949 = vsel %vm847, %v824, 0
        %951 = vmatprep.subr.mxu0 0.0
        %952 = vmatpush1.msra.mxu0 0.0
        %953 = vmatprep.subr.mxu0 0.0
        %954 = vmatpush1.msra.mxu0 0.0
        %955 = vmatprep.subr.mxu0 0.0
        %956 = vmatpush1.msra.mxu0 0.0
        %957 = vmatprep.subr.mxu0 0.0
        %958 = vmatpush1.msra.mxu0 0.0
        %959 = vmatprep.subr.mxu0 0.0
        %960 = vmatpush1.msra.mxu0 0.0
        %961 = vmatprep.subr.mxu0 0.0
        %962 = vmatpush1.msra.mxu0 0.0
        %963 = vmatprep.subr.mxu0 0.0
        %964 = vmatpush1.msra.mxu0 0.0
        %965 = vmatprep.subr.mxu0 0.0
        %966 = vmatpush1.msra.mxu0 0.0
        %967 = vmatprep.subr.mxu0 0.0
        %968 = vmatpush1.msra.mxu0 0.0
        %969 = vmatprep.subr.mxu0 0.0
        %970 = vmatpush1.msra.mxu0 0.0
        %971 = vmatprep.subr.mxu0 0.0
        %972 = vmatpush1.msra.mxu0 0.0
        %973 = vmatprep.subr.mxu0 0.0
        %974 = vmatpush1.msra.mxu0 %v949
        %975 = vmatprep.subr.mxu0 0.0
        %976 = vmatpush1.msra.mxu0 %v823
        %977 = vmatprep.subr.mxu0 0.0
        %978 = vmatpush1.msra.mxu0 %v822
        %979 = vmatprep.subr.mxu0 0.0
        %980 = vmatpush1.msra.mxu0 %v821
        %981 = vmatprep.subr.mxu0 0.0
        %982 = vmatpush1.msra.mxu0 %v820
        %983 = vmatprep.subr.mxu0 0.0
        %984 = vmatpush2.msra.mxu0 0.0
        %985 = vmatprep.subr.mxu0 0.0
        %986 = vmatpush2.msra.mxu0 0.0
        %987 = vmatprep.subr.mxu0 0.0
        %988 = vmatpush2.msra.mxu0 0.0
        %989 = vmatprep.subr.mxu0 0.0
        %990 = vmatpush2.msra.mxu0 0.0
        %991 = vmatprep.subr.mxu0 0.0
        %992 = vmatpush2.msra.mxu0 0.0
        %993 = vmatprep.subr.mxu0 0.0
        %994 = vmatpush2.msra.mxu0 0.0
        %995 = vmatprep.subr.mxu0 0.0
        %996 = vmatpush2.msra.mxu0 0.0
        %997 = vmatprep.subr.mxu0 0.0
        %998 = vmatpush2.msra.mxu0 0.0
        %999 = vmatprep.subr.mxu0 0.0
        %1000 = vmatpush2.msra.mxu0 0.0
        %1001 = vmatprep.subr.mxu0 0.0
        %1002 = vmatpush2.msra.mxu0 0.0
        %1003 = vmatprep.subr.mxu0 0.0
        %1004 = vmatpush2.msra.mxu0 0.0
        %1005 = vmatprep.subr.mxu0 0.0
        %1006 = vmatpush2.msra.mxu0 0.0
        %1007 = vmatprep.subr.mxu0 0.0
        %1008 = vmatpush2.msra.mxu0 0.0
        %1009 = vmatprep.subr.mxu0 0.0
        %1010 = vmatpush2.msra.mxu0 0.0
        %1011 = vmatprep.subr.mxu0 0.0
        %1012 = vmatpush2.msra.mxu0 0.0
        %1013 = vmatprep.subr.mxu0 0.0
        %1014 = vmatpush2.msra.mxu0 0.0
        %1015 = vmatprep.mubr.f32.mxu0 0.0
        %1016 = vmatmul.mubr.f32.gmra.mxu0 %v937
        %v1017 = vpop.f32.mrf.mxu0
        %v1018 = vadd.f32 %v918, %v1017
        %v1019 = vpop.f32.mrf.mxu0
        %1020 = vmatprep.mubr.f32.mxu0 0.0
        %1021 = vmatmul.mubr.f32.gmra.mxu0 %v940
        %v1022 = vpop.f32.mrf.mxu0
        %v1023 = vadd.f32 %v923, %v1022
        %v1024 = vpop.f32.mrf.mxu0
        %1025 = vmatprep.mubr.f32.mxu0 0.0
        %1026 = vmatmul.mubr.f32.gmra.mxu0 %v943
        %v1027 = vpop.f32.mrf.mxu0
        %v1028 = vadd.f32 %v928, %v1027
        %v1029 = vpop.f32.mrf.mxu0
        %1030 = vmatprep.mubr.f32.mxu0 0.0
        %1031 = vmatmul.mubr.f32.gmra.mxu0 %v946
        %v1032 = vpop.f32.mrf.mxu0
        %v1033 = vadd.f32 %v933, %v1032
        %v1034 = vpop.f32.mrf.mxu0
        %1035 = vdwg.mxu0
        %v1036 = vld [vmem:[#allocation2 + $0x2] sm:$0xff]
        %v1037 = vld [vmem:[#allocation2 + $0xa] sm:$0xff]
        %v1038 = vld [vmem:[#allocation2 + $0x12] sm:$0xff]
        %v1039 = vld [vmem:[#allocation2 + $0x1a] sm:$0xff]
        %s1040 = scalar_lea.vmem [#allocation8], 80
        %v1041 = vld [vmem:[%s1040] sm:$0xff]
        %v1042 = vld [vmem:[%s1040 + $0x8] sm:$0xff]
        %v1043 = vld [vmem:[%s1040 + $0x10] sm:$0xff]
        %v1044 = vld [vmem:[%s1040 + $0x18] sm:$0xff]
        %v1045 = vld [vmem:[%s1040 + $0x20] sm:$0x3]
        %v1047 = vsel %vm771, %v1036, 0
        %v1050 = vsel %vm771, %v1037, 0
        %v1053 = vsel %vm771, %v1038, 0
        %v1056 = vsel %vm771, %v1039, 0
        %v1059 = vsel %vm847, %v1045, 0
        %1061 = vmatprep.subr.mxu0 0.0
        %1062 = vmatpush1.msra.mxu0 0.0
        %1063 = vmatprep.subr.mxu0 0.0
        %1064 = vmatpush1.msra.mxu0 0.0
        %1065 = vmatprep.subr.mxu0 0.0
        %1066 = vmatpush1.msra.mxu0 0.0
        %1067 = vmatprep.subr.mxu0 0.0
        %1068 = vmatpush1.msra.mxu0 0.0
        %1069 = vmatprep.subr.mxu0 0.0
        %1070 = vmatpush1.msra.mxu0 0.0
        %1071 = vmatprep.subr.mxu0 0.0
        %1072 = vmatpush1.msra.mxu0 0.0
        %1073 = vmatprep.subr.mxu0 0.0
        %1074 = vmatpush1.msra.mxu0 0.0
        %1075 = vmatprep.subr.mxu0 0.0
        %1076 = vmatpush1.msra.mxu0 0.0
        %1077 = vmatprep.subr.mxu0 0.0
        %1078 = vmatpush1.msra.mxu0 0.0
        %1079 = vmatprep.subr.mxu0 0.0
        %1080 = vmatpush1.msra.mxu0 0.0
        %1081 = vmatprep.subr.mxu0 0.0
        %1082 = vmatpush1.msra.mxu0 0.0
        %1083 = vmatprep.subr.mxu0 0.0
        %1084 = vmatpush1.msra.mxu0 %v1059
        %1085 = vmatprep.subr.mxu0 0.0
        %1086 = vmatpush1.msra.mxu0 %v1044
        %1087 = vmatprep.subr.mxu0 0.0
        %1088 = vmatpush1.msra.mxu0 %v1043
        %1089 = vmatprep.subr.mxu0 0.0
        %1090 = vmatpush1.msra.mxu0 %v1042
        %1091 = vmatprep.subr.mxu0 0.0
        %1092 = vmatpush1.msra.mxu0 %v1041
        %1093 = vmatprep.subr.mxu0 0.0
        %1094 = vmatpush2.msra.mxu0 0.0
        %1095 = vmatprep.subr.mxu0 0.0
        %1096 = vmatpush2.msra.mxu0 0.0
        %1097 = vmatprep.subr.mxu0 0.0
        %1098 = vmatpush2.msra.mxu0 0.0
        %1099 = vmatprep.subr.mxu0 0.0
        %1100 = vmatpush2.msra.mxu0 0.0
        %1101 = vmatprep.subr.mxu0 0.0
        %1102 = vmatpush2.msra.mxu0 0.0
        %1103 = vmatprep.subr.mxu0 0.0
        %1104 = vmatpush2.msra.mxu0 0.0
        %1105 = vmatprep.subr.mxu0 0.0
        %1106 = vmatpush2.msra.mxu0 0.0
        %1107 = vmatprep.subr.mxu0 0.0
        %1108 = vmatpush2.msra.mxu0 0.0
        %1109 = vmatprep.subr.mxu0 0.0
        %1110 = vmatpush2.msra.mxu0 0.0
        %1111 = vmatprep.subr.mxu0 0.0
        %1112 = vmatpush2.msra.mxu0 0.0
        %1113 = vmatprep.subr.mxu0 0.0
        %1114 = vmatpush2.msra.mxu0 0.0
        %1115 = vmatprep.subr.mxu0 0.0
        %1116 = vmatpush2.msra.mxu0 0.0
        %1117 = vmatprep.subr.mxu0 0.0
        %1118 = vmatpush2.msra.mxu0 0.0
        %1119 = vmatprep.subr.mxu0 0.0
        %1120 = vmatpush2.msra.mxu0 0.0
        %1121 = vmatprep.subr.mxu0 0.0
        %1122 = vmatpush2.msra.mxu0 0.0
        %1123 = vmatprep.subr.mxu0 0.0
        %1124 = vmatpush2.msra.mxu0 0.0
        %1125 = vmatprep.mubr.f32.mxu0 0.0
        %1126 = vmatmul.mubr.f32.gmra.mxu0 %v1047
        %v1127 = vpop.f32.mrf.mxu0
        %v1128 = vadd.f32 0.0, %v1127
        %v1129 = vpop.f32.mrf.mxu0
        %1130 = vmatprep.mubr.f32.mxu0 0.0
        %1131 = vmatmul.mubr.f32.gmra.mxu0 %v1050
        %v1132 = vpop.f32.mrf.mxu0
        %v1133 = vadd.f32 0.0, %v1132
        %v1134 = vpop.f32.mrf.mxu0
        %1135 = vmatprep.mubr.f32.mxu0 0.0
        %1136 = vmatmul.mubr.f32.gmra.mxu0 %v1053
        %v1137 = vpop.f32.mrf.mxu0
        %v1138 = vadd.f32 0.0, %v1137
        %v1139 = vpop.f32.mrf.mxu0
        %1140 = vmatprep.mubr.f32.mxu0 0.0
        %1141 = vmatmul.mubr.f32.gmra.mxu0 %v1056
        %v1142 = vpop.f32.mrf.mxu0
        %v1143 = vadd.f32 0.0, %v1142
        %v1144 = vpop.f32.mrf.mxu0
        %1145 = vdwg.mxu0
        %v1146 = vadd.f32 %v1018, %v1128
        %v1147 = vadd.f32 %v1023, %v1133
        %v1148 = vadd.f32 %v1028, %v1138
        %v1149 = vadd.f32 %v1033, %v1143
        %v1150 = vld [vmem:[%s2] sm:$0x1]
        %v1152 = vlaneseq
        %v1153 = vshrl.u32 %v1152, 7
        %v1154 = vsub.s32 0, %v1153
        %v1155 = vrot.slane %v1150, %v1154
        %v1157 = vadd.f32 %v1146, %v1155
        %v1158 = vadd.f32 %v1147, %v1155
        %v1159 = vadd.f32 %v1148, %v1155
        %v1160 = vadd.f32 %v1149, %v1155
        %v1161 = vmax.f32 %v1157, 0.0
        %v1162 = vmax.f32 %v1158, 0.0
        %v1163 = vmax.f32 %v1159, 0.0
        %v1164 = vmax.f32 %v1160, 0.0
        %v1165 = vld [vmem:[%s3] sm:$0xff]
        %v1166 = vld [vmem:[%s3 + $0x8] sm:$0xff]
        %v1167 = vld [vmem:[%s3 + $0x10] sm:$0xff]
        %v1168 = vld [vmem:[%s3 + $0x18] sm:$0xff]
        %v1169 = vld [vmem:[%s3 + $0x20] sm:$0xff]
        %v1170 = vld [vmem:[%s3 + $0x28] sm:$0xff]
        %v1171 = vld [vmem:[%s3 + $0x30] sm:$0xff]
        %v1172 = vld [vmem:[%s3 + $0x38] sm:$0xff]
        %v1173 = vld [vmem:[%s3 + $0x40] sm:$0xff]
        %v1174 = vld [vmem:[%s3 + $0x48] sm:$0xff]
        %v1175 = vld [vmem:[%s3 + $0x50] sm:$0xff]
        %v1176 = vld [vmem:[%s3 + $0x58] sm:$0xff]
        %v1177 = vld [vmem:[%s3 + $0x60] sm:$0xff]
        %v1178 = vld [vmem:[%s3 + $0x68] sm:$0xff]
        %v1179 = vld [vmem:[%s3 + $0x70] sm:$0xff]
        %v1180 = vld [vmem:[%s3 + $0x78] sm:$0xff]
        %1181 = vmatprep.subr.mxu0 0.0
        %1182 = vmatpush1.msra.mxu0 %v1180
        %1183 = vmatprep.subr.mxu0 0.0
        %1184 = vmatpush1.msra.mxu0 %v1179
        %1185 = vmatprep.subr.mxu0 0.0
        %1186 = vmatpush1.msra.mxu0 %v1178
        %1187 = vmatprep.subr.mxu0 0.0
        %1188 = vmatpush1.msra.mxu0 %v1177
        %1189 = vmatprep.subr.mxu0 0.0
        %1190 = vmatpush1.msra.mxu0 %v1176
        %1191 = vmatprep.subr.mxu0 0.0
        %1192 = vmatpush1.msra.mxu0 %v1175
        %1193 = vmatprep.subr.mxu0 0.0
        %1194 = vmatpush1.msra.mxu0 %v1174
        %1195 = vmatprep.subr.mxu0 0.0
        %1196 = vmatpush1.msra.mxu0 %v1173
        %1197 = vmatprep.subr.mxu0 0.0
        %1198 = vmatpush1.msra.mxu0 %v1172
        %1199 = vmatprep.subr.mxu0 0.0
        %1200 = vmatpush1.msra.mxu0 %v1171
        %1201 = vmatprep.subr.mxu0 0.0
        %1202 = vmatpush1.msra.mxu0 %v1170
        %1203 = vmatprep.subr.mxu0 0.0
        %1204 = vmatpush1.msra.mxu0 %v1169
        %1205 = vmatprep.subr.mxu0 0.0
        %1206 = vmatpush1.msra.mxu0 %v1168
        %1207 = vmatprep.subr.mxu0 0.0
        %1208 = vmatpush1.msra.mxu0 %v1167
        %1209 = vmatprep.subr.mxu0 0.0
        %1210 = vmatpush1.msra.mxu0 %v1166
        %1211 = vmatprep.subr.mxu0 0.0
        %1212 = vmatpush1.msra.mxu0 %v1165
        %1213 = vmatprep.subr.mxu0 0.0
        %1214 = vmatpush2.msra.mxu0 0.0
        %1215 = vmatprep.subr.mxu0 0.0
        %1216 = vmatpush2.msra.mxu0 0.0
        %1217 = vmatprep.subr.mxu0 0.0
        %1218 = vmatpush2.msra.mxu0 0.0
        %1219 = vmatprep.subr.mxu0 0.0
        %1220 = vmatpush2.msra.mxu0 0.0
        %1221 = vmatprep.subr.mxu0 0.0
        %1222 = vmatpush2.msra.mxu0 0.0
        %1223 = vmatprep.subr.mxu0 0.0
        %1224 = vmatpush2.msra.mxu0 0.0
        %1225 = vmatprep.subr.mxu0 0.0
        %1226 = vmatpush2.msra.mxu0 0.0
        %1227 = vmatprep.subr.mxu0 0.0
        %1228 = vmatpush2.msra.mxu0 0.0
        %1229 = vmatprep.subr.mxu0 0.0
        %1230 = vmatpush2.msra.mxu0 0.0
        %1231 = vmatprep.subr.mxu0 0.0
        %1232 = vmatpush2.msra.mxu0 0.0
        %1233 = vmatprep.subr.mxu0 0.0
        %1234 = vmatpush2.msra.mxu0 0.0
        %1235 = vmatprep.subr.mxu0 0.0
        %1236 = vmatpush2.msra.mxu0 0.0
        %1237 = vmatprep.subr.mxu0 0.0
        %1238 = vmatpush2.msra.mxu0 0.0
        %1239 = vmatprep.subr.mxu0 0.0
        %1240 = vmatpush2.msra.mxu0 0.0
        %1241 = vmatprep.subr.mxu0 0.0
        %1242 = vmatpush2.msra.mxu0 0.0
        %1243 = vmatprep.subr.mxu0 0.0
        %1244 = vmatpush2.msra.mxu0 0.0
        %1245 = vmatprep.mubr.f32.mxu0 0.0
        %1246 = vmatmul.mubr.f32.gmra.mxu0 %v1161
        %v1247 = vpop.f32.mrf.mxu0
        %v1248 = vadd.f32 0.0, %v1247
        %v1249 = vpop.f32.mrf.mxu0
        %1250 = vmatprep.mubr.f32.mxu0 0.0
        %1251 = vmatmul.mubr.f32.gmra.mxu0 %v1162
        %v1252 = vpop.f32.mrf.mxu0
        %v1253 = vadd.f32 0.0, %v1252
        %v1254 = vpop.f32.mrf.mxu0
        %1255 = vmatprep.mubr.f32.mxu0 0.0
        %1256 = vmatmul.mubr.f32.gmra.mxu0 %v1163
        %v1257 = vpop.f32.mrf.mxu0
        %v1258 = vadd.f32 0.0, %v1257
        %v1259 = vpop.f32.mrf.mxu0
        %1260 = vmatprep.mubr.f32.mxu0 0.0
        %1261 = vmatmul.mubr.f32.gmra.mxu0 %v1164
        %v1262 = vpop.f32.mrf.mxu0
        %v1263 = vadd.f32 0.0, %v1262
        %v1264 = vpop.f32.mrf.mxu0
        %1265 = vdwg.mxu0
        %v1266 = vld [vmem:[%s4] sm:$0xff]
        %v1267 = vld [vmem:[%s4 + $0x8] sm:$0xff]
        %v1268 = vld [vmem:[%s4 + $0x10] sm:$0xff]
        %v1269 = vld [vmem:[%s4 + $0x18] sm:$0xff]
        %v1270 = vld [vmem:[%s4 + $0x20] sm:$0xff]
        %v1271 = vld [vmem:[%s4 + $0x28] sm:$0xff]
        %v1272 = vld [vmem:[%s4 + $0x30] sm:$0xff]
        %v1273 = vld [vmem:[%s4 + $0x38] sm:$0xff]
        %v1274 = vld [vmem:[%s4 + $0x40] sm:$0xff]
        %v1275 = vld [vmem:[%s4 + $0x48] sm:$0xff]
        %v1276 = vld [vmem:[%s4 + $0x50] sm:$0xff]
        %v1277 = vld [vmem:[%s4 + $0x58] sm:$0xff]
        %v1278 = vld [vmem:[%s4 + $0x60] sm:$0xff]
        %v1279 = vld [vmem:[%s4 + $0x68] sm:$0xff]
        %v1280 = vld [vmem:[%s4 + $0x70] sm:$0xff]
        %v1281 = vld [vmem:[%s4 + $0x78] sm:$0xff]
        %1282 = vmatprep.subr.mxu0 0.0
        %1283 = vmatpush1.msra.mxu0 %v1281
        %1284 = vmatprep.subr.mxu0 0.0
        %1285 = vmatpush1.msra.mxu0 %v1280
        %1286 = vmatprep.subr.mxu0 0.0
        %1287 = vmatpush1.msra.mxu0 %v1279
        %1288 = vmatprep.subr.mxu0 0.0
        %1289 = vmatpush1.msra.mxu0 %v1278
        %1290 = vmatprep.subr.mxu0 0.0
        %1291 = vmatpush1.msra.mxu0 %v1277
        %1292 = vmatprep.subr.mxu0 0.0
        %1293 = vmatpush1.msra.mxu0 %v1276
        %1294 = vmatprep.subr.mxu0 0.0
        %1295 = vmatpush1.msra.mxu0 %v1275
        %1296 = vmatprep.subr.mxu0 0.0
        %1297 = vmatpush1.msra.mxu0 %v1274
        %1298 = vmatprep.subr.mxu0 0.0
        %1299 = vmatpush1.msra.mxu0 %v1273
        %1300 = vmatprep.subr.mxu0 0.0
        %1301 = vmatpush1.msra.mxu0 %v1272
        %1302 = vmatprep.subr.mxu0 0.0
        %1303 = vmatpush1.msra.mxu0 %v1271
        %1304 = vmatprep.subr.mxu0 0.0
        %1305 = vmatpush1.msra.mxu0 %v1270
        %1306 = vmatprep.subr.mxu0 0.0
        %1307 = vmatpush1.msra.mxu0 %v1269
        %1308 = vmatprep.subr.mxu0 0.0
        %1309 = vmatpush1.msra.mxu0 %v1268
        %1310 = vmatprep.subr.mxu0 0.0
        %1311 = vmatpush1.msra.mxu0 %v1267
        %1312 = vmatprep.subr.mxu0 0.0
        %1313 = vmatpush1.msra.mxu0 %v1266
        %1314 = vmatprep.subr.mxu0 0.0
        %1315 = vmatpush2.msra.mxu0 0.0
        %1316 = vmatprep.subr.mxu0 0.0
        %1317 = vmatpush2.msra.mxu0 0.0
        %1318 = vmatprep.subr.mxu0 0.0
        %1319 = vmatpush2.msra.mxu0 0.0
        %1320 = vmatprep.subr.mxu0 0.0
        %1321 = vmatpush2.msra.mxu0 0.0
        %1322 = vmatprep.subr.mxu0 0.0
        %1323 = vmatpush2.msra.mxu0 0.0
        %1324 = vmatprep.subr.mxu0 0.0
        %1325 = vmatpush2.msra.mxu0 0.0
        %1326 = vmatprep.subr.mxu0 0.0
        %1327 = vmatpush2.msra.mxu0 0.0
        %1328 = vmatprep.subr.mxu0 0.0
        %1329 = vmatpush2.msra.mxu0 0.0
        %1330 = vmatprep.subr.mxu0 0.0
        %1331 = vmatpush2.msra.mxu0 0.0
        %1332 = vmatprep.subr.mxu0 0.0
        %1333 = vmatpush2.msra.mxu0 0.0
        %1334 = vmatprep.subr.mxu0 0.0
        %1335 = vmatpush2.msra.mxu0 0.0
        %1336 = vmatprep.subr.mxu0 0.0
        %1337 = vmatpush2.msra.mxu0 0.0
        %1338 = vmatprep.subr.mxu0 0.0
        %1339 = vmatpush2.msra.mxu0 0.0
        %1340 = vmatprep.subr.mxu0 0.0
        %1341 = vmatpush2.msra.mxu0 0.0
        %1342 = vmatprep.subr.mxu0 0.0
        %1343 = vmatpush2.msra.mxu0 0.0
        %1344 = vmatprep.subr.mxu0 0.0
        %1345 = vmatpush2.msra.mxu0 0.0
        %1346 = vmatprep.mubr.f32.mxu0 0.0
        %1347 = vmatmul.mubr.f32.gmra.mxu0 %v1161
        %v1348 = vpop.f32.mrf.mxu0
        %v1349 = vadd.f32 0.0, %v1348
        %v1350 = vpop.f32.mrf.mxu0
        %1351 = vmatprep.mubr.f32.mxu0 0.0
        %1352 = vmatmul.mubr.f32.gmra.mxu0 %v1162
        %v1353 = vpop.f32.mrf.mxu0
        %v1354 = vadd.f32 0.0, %v1353
        %v1355 = vpop.f32.mrf.mxu0
        %1356 = vmatprep.mubr.f32.mxu0 0.0
        %1357 = vmatmul.mubr.f32.gmra.mxu0 %v1163
        %v1358 = vpop.f32.mrf.mxu0
        %v1359 = vadd.f32 0.0, %v1358
        %v1360 = vpop.f32.mrf.mxu0
        %1361 = vmatprep.mubr.f32.mxu0 0.0
        %1362 = vmatmul.mubr.f32.gmra.mxu0 %v1164
        %v1363 = vpop.f32.mrf.mxu0
        %v1364 = vadd.f32 0.0, %v1363
        %v1365 = vpop.f32.mrf.mxu0
        %1366 = vdwg.mxu0
        %v1367 = vmax.f32 %v1248, %v1349
        %v1368 = vmax.f32 %v1253, %v1354
        %v1369 = vmax.f32 %v1258, %v1359
        %v1370 = vmax.f32 %v1263, %v1364
        %v1371 = vld [vmem:[%s5] sm:$0xff]
        %v1372 = vld [vmem:[%s5 + $0x8] sm:$0xff]
        %vm1373 = vcmask 261120
        %v1375 = vsel %vm1373, %v1371, 0
        %v1378 = vsel %vm1373, %v1372, 0
        %1380 = vmatprep.subr.mxu0 0.0
        %1381 = vmatpush1.msra.mxu0 0.0
        %1382 = vmatprep.subr.mxu0 0.0
        %1383 = vmatpush1.msra.mxu0 0.0
        %1384 = vmatprep.subr.mxu0 0.0
        %1385 = vmatpush1.msra.mxu0 0.0
        %1386 = vmatprep.subr.mxu0 0.0
        %1387 = vmatpush1.msra.mxu0 0.0
        %1388 = vmatprep.subr.mxu0 0.0
        %1389 = vmatpush1.msra.mxu0 0.0
        %1390 = vmatprep.subr.mxu0 0.0
        %1391 = vmatpush1.msra.mxu0 0.0
        %1392 = vmatprep.subr.mxu0 0.0
        %1393 = vmatpush1.msra.mxu0 0.0
        %1394 = vmatprep.subr.mxu0 0.0
        %1395 = vmatpush1.msra.mxu0 0.0
        %1396 = vmatprep.subr.mxu0 0.0
        %1397 = vmatpush1.msra.mxu0 0.0
        %1398 = vmatprep.subr.mxu0 0.0
        %1399 = vmatpush1.msra.mxu0 0.0
        %1400 = vmatprep.subr.mxu0 0.0
        %1401 = vmatpush1.msra.mxu0 0.0
        %1402 = vmatprep.subr.mxu0 0.0
        %1403 = vmatpush1.msra.mxu0 0.0
        %1404 = vmatprep.subr.mxu0 0.0
        %1405 = vmatpush1.msra.mxu0 %v1370
        %1406 = vmatprep.subr.mxu0 0.0
        %1407 = vmatpush1.msra.mxu0 %v1369
        %1408 = vmatprep.subr.mxu0 0.0
        %1409 = vmatpush1.msra.mxu0 %v1368
        %1410 = vmatprep.subr.mxu0 0.0
        %1411 = vmatpush1.msra.mxu0 %v1367
        %1412 = vmatprep.subr.mxu0 0.0
        %1413 = vmatpush2.msra.mxu0 0.0
        %1414 = vmatprep.subr.mxu0 0.0
        %1415 = vmatpush2.msra.mxu0 0.0
        %1416 = vmatprep.subr.mxu0 0.0
        %1417 = vmatpush2.msra.mxu0 0.0
        %1418 = vmatprep.subr.mxu0 0.0
        %1419 = vmatpush2.msra.mxu0 0.0
        %1420 = vmatprep.subr.mxu0 0.0
        %1421 = vmatpush2.msra.mxu0 0.0
        %1422 = vmatprep.subr.mxu0 0.0
        %1423 = vmatpush2.msra.mxu0 0.0
        %1424 = vmatprep.subr.mxu0 0.0
        %1425 = vmatpush2.msra.mxu0 0.0
        %1426 = vmatprep.subr.mxu0 0.0
        %1427 = vmatpush2.msra.mxu0 0.0
        %1428 = vmatprep.subr.mxu0 0.0
        %1429 = vmatpush2.msra.mxu0 0.0
        %1430 = vmatprep.subr.mxu0 0.0
        %1431 = vmatpush2.msra.mxu0 0.0
        %1432 = vmatprep.subr.mxu0 0.0
        %1433 = vmatpush2.msra.mxu0 0.0
        %1434 = vmatprep.subr.mxu0 0.0
        %1435 = vmatpush2.msra.mxu0 0.0
        %1436 = vmatprep.subr.mxu0 0.0
        %1437 = vmatpush2.msra.mxu0 0.0
        %1438 = vmatprep.subr.mxu0 0.0
        %1439 = vmatpush2.msra.mxu0 0.0
        %1440 = vmatprep.subr.mxu0 0.0
        %1441 = vmatpush2.msra.mxu0 0.0
        %1442 = vmatprep.subr.mxu0 0.0
        %1443 = vmatpush2.msra.mxu0 0.0
        %1444 = vmatprep.mubr.f32.mxu0 0.0
        %1445 = vmatmul.mubr.f32.gmra.mxu0 %v1375
        %v1446 = vpop.f32.mrf.mxu0
        %v1447 = vadd.f32 0.0, %v1446
        %v1448 = vpop.f32.mrf.mxu0
        %1449 = vmatprep.mubr.f32.mxu0 0.0
        %1450 = vmatmul.mubr.f32.gmra.mxu0 %v1378
        %v1451 = vpop.f32.mrf.mxu0
        %v1452 = vadd.f32 0.0, %v1451
        %v1453 = vpop.f32.mrf.mxu0
        %1454 = vdwg.mxu0
        %v1455 = vld [vmem:[%s6] sm:$0xff]
        %v1456 = vld [vmem:[%s6 + $0x8] sm:$0xff]
        %v1458 = vsel %vm1373, %v1455, 0
        %v1461 = vsel %vm1373, %v1456, 0
        %1463 = vmatprep.subr.mxu0 0.0
        %1464 = vmatpush1.msra.mxu0 0.0
        %1465 = vmatprep.subr.mxu0 0.0
        %1466 = vmatpush1.msra.mxu0 0.0
        %1467 = vmatprep.subr.mxu0 0.0
        %1468 = vmatpush1.msra.mxu0 0.0
        %1469 = vmatprep.subr.mxu0 0.0
        %1470 = vmatpush1.msra.mxu0 0.0
        %1471 = vmatprep.subr.mxu0 0.0
        %1472 = vmatpush1.msra.mxu0 0.0
        %1473 = vmatprep.subr.mxu0 0.0
        %1474 = vmatpush1.msra.mxu0 0.0
        %1475 = vmatprep.subr.mxu0 0.0
        %1476 = vmatpush1.msra.mxu0 0.0
        %1477 = vmatprep.subr.mxu0 0.0
        %1478 = vmatpush1.msra.mxu0 0.0
        %1479 = vmatprep.subr.mxu0 0.0
        %1480 = vmatpush1.msra.mxu0 0.0
        %1481 = vmatprep.subr.mxu0 0.0
        %1482 = vmatpush1.msra.mxu0 0.0
        %1483 = vmatprep.subr.mxu0 0.0
        %1484 = vmatpush1.msra.mxu0 0.0
        %1485 = vmatprep.subr.mxu0 0.0
        %1486 = vmatpush1.msra.mxu0 0.0
        %1487 = vmatprep.subr.mxu0 0.0
        %1488 = vmatpush1.msra.mxu0 %v1370
        %1489 = vmatprep.subr.mxu0 0.0
        %1490 = vmatpush1.msra.mxu0 %v1369
        %1491 = vmatprep.subr.mxu0 0.0
        %1492 = vmatpush1.msra.mxu0 %v1368
        %1493 = vmatprep.subr.mxu0 0.0
        %1494 = vmatpush1.msra.mxu0 %v1367
        %1495 = vmatprep.subr.mxu0 0.0
        %1496 = vmatpush2.msra.mxu0 0.0
        %1497 = vmatprep.subr.mxu0 0.0
        %1498 = vmatpush2.msra.mxu0 0.0
        %1499 = vmatprep.subr.mxu0 0.0
        %1500 = vmatpush2.msra.mxu0 0.0
        %1501 = vmatprep.subr.mxu0 0.0
        %1502 = vmatpush2.msra.mxu0 0.0
        %1503 = vmatprep.subr.mxu0 0.0
        %1504 = vmatpush2.msra.mxu0 0.0
        %1505 = vmatprep.subr.mxu0 0.0
        %1506 = vmatpush2.msra.mxu0 0.0
        %1507 = vmatprep.subr.mxu0 0.0
        %1508 = vmatpush2.msra.mxu0 0.0
        %1509 = vmatprep.subr.mxu0 0.0
        %1510 = vmatpush2.msra.mxu0 0.0
        %1511 = vmatprep.subr.mxu0 0.0
        %1512 = vmatpush2.msra.mxu0 0.0
        %1513 = vmatprep.subr.mxu0 0.0
        %1514 = vmatpush2.msra.mxu0 0.0
        %1515 = vmatprep.subr.mxu0 0.0
        %1516 = vmatpush2.msra.mxu0 0.0
        %1517 = vmatprep.subr.mxu0 0.0
        %1518 = vmatpush2.msra.mxu0 0.0
        %1519 = vmatprep.subr.mxu0 0.0
        %1520 = vmatpush2.msra.mxu0 0.0
        %1521 = vmatprep.subr.mxu0 0.0
        %1522 = vmatpush2.msra.mxu0 0.0
        %1523 = vmatprep.subr.mxu0 0.0
        %1524 = vmatpush2.msra.mxu0 0.0
        %1525 = vmatprep.subr.mxu0 0.0
        %1526 = vmatpush2.msra.mxu0 0.0
        %1527 = vmatprep.mubr.f32.mxu0 0.0
        %1528 = vmatmul.mubr.f32.gmra.mxu0 %v1458
        %v1529 = vpop.f32.mrf.mxu0
        %v1530 = vadd.f32 0.0, %v1529
        %v1531 = vpop.f32.mrf.mxu0
        %1532 = vmatprep.mubr.f32.mxu0 0.0
        %1533 = vmatmul.mubr.f32.gmra.mxu0 %v1461
        %v1534 = vpop.f32.mrf.mxu0
        %v1535 = vadd.f32 0.0, %v1534
        %v1536 = vpop.f32.mrf.mxu0
        %1537 = vdwg.mxu0
        %v1538 = vmax.f32 %v1447, %v1530
        %v1539 = vmax.f32 %v1452, %v1535
        %1542 = vrot.lane.b32.xlu0 %v1538, 4
        %v1543 = vpop.permute.xlu0 %1542
        %1544 = vrot.lane.b32.xlu0 %v1539, 4
        %v1545 = vpop.permute.xlu0 %1544
        %vm1548 = vcmask 556064
        %1549 = vst.msk [vmem:[#allocation3 + $0x1] sm:$0xff] %vm1548, %v1543
        %1550 = vst.msk [vmem:[#allocation3 + $0x9] sm:$0xff] %vm1548, %v1545
        %v1551 = vld [vmem:[#allocation3] sm:$0xff]
        %v1552 = vld [vmem:[#allocation3 + $0x8] sm:$0xff]
        %v1553 = vld [vmem:[#allocation10] sm:$0xff]
        %v1554 = vld [vmem:[#allocation10 + $0x8] sm:$0xff]
        %v1555 = vld [vmem:[#allocation10 + $0x10] sm:$0xff]
        %v1556 = vld [vmem:[#allocation10 + $0x18] sm:$0xff]
        %v1557 = vld [vmem:[#allocation10 + $0x20] sm:$0xff]
        %v1558 = vld [vmem:[#allocation10 + $0x28] sm:$0xff]
        %v1559 = vld [vmem:[#allocation10 + $0x30] sm:$0xff]
        %v1560 = vld [vmem:[#allocation10 + $0x38] sm:$0xff]
        %v1561 = vld [vmem:[#allocation10 + $0x40] sm:$0xff]
        %v1562 = vld [vmem:[#allocation3 + $0x1] sm:$0xff]
        %v1563 = vld [vmem:[#allocation3 + $0x9] sm:$0xff]
        %s1564 = scalar_lea.vmem [#allocation10], 72
        %v1565 = vld [vmem:[%s1564] sm:$0xff]
        %v1566 = vld [vmem:[%s1564 + $0x8] sm:$0xff]
        %v1567 = vld [vmem:[%s1564 + $0x10] sm:$0xff]
        %v1568 = vld [vmem:[%s1564 + $0x18] sm:$0xff]
        %v1569 = vld [vmem:[%s1564 + $0x20] sm:$0xff]
        %v1570 = vld [vmem:[%s1564 + $0x28] sm:$0xff]
        %v1571 = vld [vmem:[%s1564 + $0x30] sm:$0xff]
        %v1572 = vld [vmem:[%s1564 + $0x38] sm:$0xff]
        %v1573 = vld [vmem:[%s1564 + $0x40] sm:$0xff]
        %v1575 = vsel %vm778, %v1562, 0
        %v1578 = vsel %vm778, %v1563, 0
        %1580 = vmatprep.subr.mxu0 0.0
        %1581 = vmatpush1.msra.mxu0 0.0
        %1582 = vmatprep.subr.mxu0 0.0
        %1583 = vmatpush1.msra.mxu0 0.0
        %1584 = vmatprep.subr.mxu0 0.0
        %1585 = vmatpush1.msra.mxu0 0.0
        %1586 = vmatprep.subr.mxu0 0.0
        %1587 = vmatpush1.msra.mxu0 0.0
        %1588 = vmatprep.subr.mxu0 0.0
        %1589 = vmatpush1.msra.mxu0 0.0
        %1590 = vmatprep.subr.mxu0 0.0
        %1591 = vmatpush1.msra.mxu0 0.0
        %1592 = vmatprep.subr.mxu0 0.0
        %1593 = vmatpush1.msra.mxu0 0.0
        %1594 = vmatprep.subr.mxu0 0.0
        %1595 = vmatpush1.msra.mxu0 %v1573
        %1596 = vmatprep.subr.mxu0 0.0
        %1597 = vmatpush1.msra.mxu0 %v1572
        %1598 = vmatprep.subr.mxu0 0.0
        %1599 = vmatpush1.msra.mxu0 %v1571
        %1600 = vmatprep.subr.mxu0 0.0
        %1601 = vmatpush1.msra.mxu0 %v1570
        %1602 = vmatprep.subr.mxu0 0.0
        %1603 = vmatpush1.msra.mxu0 %v1569
        %1604 = vmatprep.subr.mxu0 0.0
        %1605 = vmatpush1.msra.mxu0 %v1568
        %1606 = vmatprep.subr.mxu0 0.0
        %1607 = vmatpush1.msra.mxu0 %v1567
        %1608 = vmatprep.subr.mxu0 0.0
        %1609 = vmatpush1.msra.mxu0 %v1566
        %1610 = vmatprep.subr.mxu0 0.0
        %1611 = vmatpush1.msra.mxu0 %v1565
        %1612 = vmatprep.subr.mxu0 0.0
        %1613 = vmatpush2.msra.mxu0 0.0
        %1614 = vmatprep.subr.mxu0 0.0
        %1615 = vmatpush2.msra.mxu0 0.0
        %1616 = vmatprep.subr.mxu0 0.0
        %1617 = vmatpush2.msra.mxu0 0.0
        %1618 = vmatprep.subr.mxu0 0.0
        %1619 = vmatpush2.msra.mxu0 0.0
        %1620 = vmatprep.subr.mxu0 0.0
        %1621 = vmatpush2.msra.mxu0 0.0
        %1622 = vmatprep.subr.mxu0 0.0
        %1623 = vmatpush2.msra.mxu0 0.0
        %1624 = vmatprep.subr.mxu0 0.0
        %1625 = vmatpush2.msra.mxu0 0.0
        %1626 = vmatprep.subr.mxu0 0.0
        %1627 = vmatpush2.msra.mxu0 0.0
        %1628 = vmatprep.subr.mxu0 0.0
        %1629 = vmatpush2.msra.mxu0 0.0
        %1630 = vmatprep.subr.mxu0 0.0
        %1631 = vmatpush2.msra.mxu0 0.0
        %1632 = vmatprep.subr.mxu0 0.0
        %1633 = vmatpush2.msra.mxu0 0.0
        %1634 = vmatprep.subr.mxu0 0.0
        %1635 = vmatpush2.msra.mxu0 0.0
        %1636 = vmatprep.subr.mxu0 0.0
        %1637 = vmatpush2.msra.mxu0 0.0
        %1638 = vmatprep.subr.mxu0 0.0
        %1639 = vmatpush2.msra.mxu0 0.0
        %1640 = vmatprep.subr.mxu0 0.0
        %1641 = vmatpush2.msra.mxu0 0.0
        %1642 = vmatprep.subr.mxu0 0.0
        %1643 = vmatpush2.msra.mxu0 0.0
        %1644 = vmatprep.mubr.f32.mxu0 0.0
        %1645 = vmatmul.mubr.f32.gmra.mxu0 %v1575
        %v1646 = vpop.f32.mrf.mxu0
        %v1647 = vadd.f32 0.0, %v1646
        %v1648 = vpop.f32.mrf.mxu0
        %1649 = vmatprep.mubr.f32.mxu0 0.0
        %1650 = vmatmul.mubr.f32.gmra.mxu0 %v1578
        %v1651 = vpop.f32.mrf.mxu0
        %v1652 = vadd.f32 0.0, %v1651
        %v1653 = vpop.f32.mrf.mxu0
        %1654 = vdwg.mxu0
        %v1656 = vsel %vm778, %v1551, 0
        %v1659 = vsel %vm778, %v1552, 0
        %1661 = vmatprep.subr.mxu0 0.0
        %1662 = vmatpush1.msra.mxu0 0.0
        %1663 = vmatprep.subr.mxu0 0.0
        %1664 = vmatpush1.msra.mxu0 0.0
        %1665 = vmatprep.subr.mxu0 0.0
        %1666 = vmatpush1.msra.mxu0 0.0
        %1667 = vmatprep.subr.mxu0 0.0
        %1668 = vmatpush1.msra.mxu0 0.0
        %1669 = vmatprep.subr.mxu0 0.0
        %1670 = vmatpush1.msra.mxu0 0.0
        %1671 = vmatprep.subr.mxu0 0.0
        %1672 = vmatpush1.msra.mxu0 0.0
        %1673 = vmatprep.subr.mxu0 0.0
        %1674 = vmatpush1.msra.mxu0 0.0
        %1675 = vmatprep.subr.mxu0 0.0
        %1676 = vmatpush1.msra.mxu0 %v1561
        %1677 = vmatprep.subr.mxu0 0.0
        %1678 = vmatpush1.msra.mxu0 %v1560
        %1679 = vmatprep.subr.mxu0 0.0
        %1680 = vmatpush1.msra.mxu0 %v1559
        %1681 = vmatprep.subr.mxu0 0.0
        %1682 = vmatpush1.msra.mxu0 %v1558
        %1683 = vmatprep.subr.mxu0 0.0
        %1684 = vmatpush1.msra.mxu0 %v1557
        %1685 = vmatprep.subr.mxu0 0.0
        %1686 = vmatpush1.msra.mxu0 %v1556
        %1687 = vmatprep.subr.mxu0 0.0
        %1688 = vmatpush1.msra.mxu0 %v1555
        %1689 = vmatprep.subr.mxu0 0.0
        %1690 = vmatpush1.msra.mxu0 %v1554
        %1691 = vmatprep.subr.mxu0 0.0
        %1692 = vmatpush1.msra.mxu0 %v1553
        %1693 = vmatprep.subr.mxu0 0.0
        %1694 = vmatpush2.msra.mxu0 0.0
        %1695 = vmatprep.subr.mxu0 0.0
        %1696 = vmatpush2.msra.mxu0 0.0
        %1697 = vmatprep.subr.mxu0 0.0
        %1698 = vmatpush2.msra.mxu0 0.0
        %1699 = vmatprep.subr.mxu0 0.0
        %1700 = vmatpush2.msra.mxu0 0.0
        %1701 = vmatprep.subr.mxu0 0.0
        %1702 = vmatpush2.msra.mxu0 0.0
        %1703 = vmatprep.subr.mxu0 0.0
        %1704 = vmatpush2.msra.mxu0 0.0
        %1705 = vmatprep.subr.mxu0 0.0
        %1706 = vmatpush2.msra.mxu0 0.0
        %1707 = vmatprep.subr.mxu0 0.0
        %1708 = vmatpush2.msra.mxu0 0.0
        %1709 = vmatprep.subr.mxu0 0.0
        %1710 = vmatpush2.msra.mxu0 0.0
        %1711 = vmatprep.subr.mxu0 0.0
        %1712 = vmatpush2.msra.mxu0 0.0
        %1713 = vmatprep.subr.mxu0 0.0
        %1714 = vmatpush2.msra.mxu0 0.0
        %1715 = vmatprep.subr.mxu0 0.0
        %1716 = vmatpush2.msra.mxu0 0.0
        %1717 = vmatprep.subr.mxu0 0.0
        %1718 = vmatpush2.msra.mxu0 0.0
        %1719 = vmatprep.subr.mxu0 0.0
        %1720 = vmatpush2.msra.mxu0 0.0
        %1721 = vmatprep.subr.mxu0 0.0
        %1722 = vmatpush2.msra.mxu0 0.0
        %1723 = vmatprep.subr.mxu0 0.0
        %1724 = vmatpush2.msra.mxu0 0.0
        %1725 = vmatprep.mubr.f32.mxu0 0.0
        %1726 = vmatmul.mubr.f32.gmra.mxu0 %v1656
        %v1727 = vpop.f32.mrf.mxu0
        %v1728 = vadd.f32 %v1647, %v1727
        %v1729 = vpop.f32.mrf.mxu0
        %1730 = vmatprep.mubr.f32.mxu0 0.0
        %1731 = vmatmul.mubr.f32.gmra.mxu0 %v1659
        %v1732 = vpop.f32.mrf.mxu0
        %v1733 = vadd.f32 %v1652, %v1732
        %v1734 = vpop.f32.mrf.mxu0
        %1735 = vdwg.mxu0
        %v1736 = vld [vmem:[#allocation3 + $0x2] sm:$0xff]
        %v1737 = vld [vmem:[#allocation3 + $0xa] sm:$0xff]
        %s1738 = scalar_lea.vmem [#allocation10], 144
        %v1739 = vld [vmem:[%s1738] sm:$0xff]
        %v1740 = vld [vmem:[%s1738 + $0x8] sm:$0xff]
        %v1741 = vld [vmem:[%s1738 + $0x10] sm:$0xff]
        %v1742 = vld [vmem:[%s1738 + $0x18] sm:$0xff]
        %v1743 = vld [vmem:[%s1738 + $0x20] sm:$0xff]
        %v1744 = vld [vmem:[%s1738 + $0x28] sm:$0xff]
        %v1745 = vld [vmem:[%s1738 + $0x30] sm:$0xff]
        %v1746 = vld [vmem:[%s1738 + $0x38] sm:$0xff]
        %v1747 = vld [vmem:[%s1738 + $0x40] sm:$0xff]
        %v1749 = vsel %vm778, %v1736, 0
        %v1752 = vsel %vm778, %v1737, 0
        %1754 = vmatprep.subr.mxu0 0.0
        %1755 = vmatpush1.msra.mxu0 0.0
        %1756 = vmatprep.subr.mxu0 0.0
        %1757 = vmatpush1.msra.mxu0 0.0
        %1758 = vmatprep.subr.mxu0 0.0
        %1759 = vmatpush1.msra.mxu0 0.0
        %1760 = vmatprep.subr.mxu0 0.0
        %1761 = vmatpush1.msra.mxu0 0.0
        %1762 = vmatprep.subr.mxu0 0.0
        %1763 = vmatpush1.msra.mxu0 0.0
        %1764 = vmatprep.subr.mxu0 0.0
        %1765 = vmatpush1.msra.mxu0 0.0
        %1766 = vmatprep.subr.mxu0 0.0
        %1767 = vmatpush1.msra.mxu0 0.0
        %1768 = vmatprep.subr.mxu0 0.0
        %1769 = vmatpush1.msra.mxu0 %v1747
        %1770 = vmatprep.subr.mxu0 0.0
        %1771 = vmatpush1.msra.mxu0 %v1746
        %1772 = vmatprep.subr.mxu0 0.0
        %1773 = vmatpush1.msra.mxu0 %v1745
        %1774 = vmatprep.subr.mxu0 0.0
        %1775 = vmatpush1.msra.mxu0 %v1744
        %1776 = vmatprep.subr.mxu0 0.0
        %1777 = vmatpush1.msra.mxu0 %v1743
        %1778 = vmatprep.subr.mxu0 0.0
        %1779 = vmatpush1.msra.mxu0 %v1742
        %1780 = vmatprep.subr.mxu0 0.0
        %1781 = vmatpush1.msra.mxu0 %v1741
        %1782 = vmatprep.subr.mxu0 0.0
        %1783 = vmatpush1.msra.mxu0 %v1740
        %1784 = vmatprep.subr.mxu0 0.0
        %1785 = vmatpush1.msra.mxu0 %v1739
        %1786 = vmatprep.subr.mxu0 0.0
        %1787 = vmatpush2.msra.mxu0 0.0
        %1788 = vmatprep.subr.mxu0 0.0
        %1789 = vmatpush2.msra.mxu0 0.0
        %1790 = vmatprep.subr.mxu0 0.0
        %1791 = vmatpush2.msra.mxu0 0.0
        %1792 = vmatprep.subr.mxu0 0.0
        %1793 = vmatpush2.msra.mxu0 0.0
        %1794 = vmatprep.subr.mxu0 0.0
        %1795 = vmatpush2.msra.mxu0 0.0
        %1796 = vmatprep.subr.mxu0 0.0
        %1797 = vmatpush2.msra.mxu0 0.0
        %1798 = vmatprep.subr.mxu0 0.0
        %1799 = vmatpush2.msra.mxu0 0.0
        %1800 = vmatprep.subr.mxu0 0.0
        %1801 = vmatpush2.msra.mxu0 0.0
        %1802 = vmatprep.subr.mxu0 0.0
        %1803 = vmatpush2.msra.mxu0 0.0
        %1804 = vmatprep.subr.mxu0 0.0
        %1805 = vmatpush2.msra.mxu0 0.0
        %1806 = vmatprep.subr.mxu0 0.0
        %1807 = vmatpush2.msra.mxu0 0.0
        %1808 = vmatprep.subr.mxu0 0.0
        %1809 = vmatpush2.msra.mxu0 0.0
        %1810 = vmatprep.subr.mxu0 0.0
        %1811 = vmatpush2.msra.mxu0 0.0
        %1812 = vmatprep.subr.mxu0 0.0
        %1813 = vmatpush2.msra.mxu0 0.0
        %1814 = vmatprep.subr.mxu0 0.0
        %1815 = vmatpush2.msra.mxu0 0.0
        %1816 = vmatprep.subr.mxu0 0.0
        %1817 = vmatpush2.msra.mxu0 0.0
        %1818 = vmatprep.mubr.f32.mxu0 0.0
        %1819 = vmatmul.mubr.f32.gmra.mxu0 %v1749
        %v1820 = vpop.f32.mrf.mxu0
        %v1821 = vadd.f32 0.0, %v1820
        %v1822 = vpop.f32.mrf.mxu0
        %1823 = vmatprep.mubr.f32.mxu0 0.0
        %1824 = vmatmul.mubr.f32.gmra.mxu0 %v1752
        %v1825 = vpop.f32.mrf.mxu0
        %v1826 = vadd.f32 0.0, %v1825
        %v1827 = vpop.f32.mrf.mxu0
        %1828 = vdwg.mxu0
        %v1829 = vadd.f32 %v1728, %v1821
        %v1830 = vadd.f32 %v1733, %v1826
        %v1831 = vld [vmem:[%s8] sm:$0x1]
        %v1833 = vlaneseq
        %v1834 = vshrl.u32 %v1833, 7
        %v1835 = vsub.s32 0, %v1834
        %v1836 = vrot.slane %v1831, %v1835
        %v1838 = vadd.f32 %v1829, %v1836
        %v1839 = vadd.f32 %v1830, %v1836
        %v1840 = vmax.f32 %v1838, 0.0
        %v1841 = vmax.f32 %v1839, 0.0
        %vm1844 = vcmask 1040384
        %v1845 = vrot.slane %v1840, 7
        %v1846 = vrot.slane %v1841, 7
        %v1847 = vsel %vm1844, %v1845, %v1846
        %1848 = vrot.lane.b32.xlu0 %v1845, 8
        %v1849 = vpop.permute.xlu0 %1848
        %1850 = vrot.lane.b32.xlu0 %v1847, 8
        %v1851 = vpop.permute.xlu0 %1850
        %1852 = vrot.lane.b32.xlu0 %v1846, 8
        %v1853 = vpop.permute.xlu0 %1852
        %vm1857 = vcmask 1047617
        %1858 = vst.msk [vmem:[#allocation4] sm:$0xfe] %vm1857, %v1849
        %vm1859 = vcmask 64513
        %1860 = vst.msk [vmem:[#allocation4 + $0x8] sm:$0xfe] %vm1859, %v1849
        %vm1861 = vcmask 1047616
        %1862 = vst.msk [vmem:[#allocation4 + $0x10] sm:$0xff] %vm1861, %v1851
        %vm1863 = vcmask 64512
        %1864 = vst.msk [vmem:[#allocation4 + $0x18] sm:$0xff] %vm1863, %v1851
        %vm1865 = vcmask 1040448
        %1866 = vst.msk [vmem:[#allocation4 + $0x20] sm:$0x1] %vm1865, %v1853
        %vm1867 = vcmask 57344
        %1868 = vst.msk [vmem:[#allocation4 + $0x28] sm:$0x1] %vm1867, %v1853
        %v1869 = vld [vmem:[#allocation4] sm:$0xff]
        %v1870 = vld [vmem:[#allocation4 + $0x8] sm:$0xff]
        %v1871 = vld [vmem:[#allocation4 + $0x10] sm:$0xff]
        %v1872 = vld [vmem:[#allocation4 + $0x18] sm:$0xff]
        %v1873 = vld [vmem:[%s9] sm:$0xff]
        %v1874 = vld [vmem:[%s9 + $0x8] sm:$0xff]
        %v1875 = vld [vmem:[%s9 + $0x10] sm:$0xff]
        %v1876 = vld [vmem:[%s9 + $0x18] sm:$0xff]
        %v1877 = vld [vmem:[%s9 + $0x20] sm:$0xff]
        %v1878 = vld [vmem:[%s9 + $0x28] sm:$0xff]
        %v1879 = vld [vmem:[%s9 + $0x30] sm:$0xff]
        %v1880 = vld [vmem:[%s9 + $0x38] sm:$0xff]
        %v1881 = vld [vmem:[%s9 + $0x40] sm:$0xff]
        %v1882 = vld [vmem:[%s9 + $0x48] sm:$0xff]
        %v1883 = vld [vmem:[%s9 + $0x50] sm:$0xff]
        %v1884 = vld [vmem:[%s9 + $0x58] sm:$0xff]
        %v1885 = vld [vmem:[%s9 + $0x60] sm:$0xff]
        %v1886 = vld [vmem:[%s9 + $0x68] sm:$0xff]
        %v1887 = vld [vmem:[%s9 + $0x70] sm:$0xff]
        %v1888 = vld [vmem:[%s9 + $0x78] sm:$0xff]
        %v1889 = vld [vmem:[%s9 + $0x80] sm:$0xff]
        %v1890 = vld [vmem:[%s9 + $0x88] sm:$0xff]
        %v1891 = vld [vmem:[#allocation4] sm:$0xfe]
        %v1892 = vld [vmem:[#allocation4 + $0x8] sm:$0xfe]
        %v1893 = vld [vmem:[#allocation4 + $0x20] sm:$0x1]
        %v1894 = vld [vmem:[#allocation4 + $0x28] sm:$0x1]
        %s1895 = scalar_lea.vmem %s9, 144
        %v1896 = vld [vmem:[%s1895] sm:$0xff]
        %v1897 = vld [vmem:[%s1895 + $0x8] sm:$0xff]
        %v1898 = vld [vmem:[%s1895 + $0x10] sm:$0xff]
        %v1899 = vld [vmem:[%s1895 + $0x18] sm:$0xff]
        %v1900 = vld [vmem:[%s1895 + $0x20] sm:$0xff]
        %v1901 = vld [vmem:[%s1895 + $0x28] sm:$0xff]
        %v1902 = vld [vmem:[%s1895 + $0x30] sm:$0xff]
        %v1903 = vld [vmem:[%s1895 + $0x38] sm:$0xff]
        %v1904 = vld [vmem:[%s1895 + $0x40] sm:$0xff]
        %v1905 = vld [vmem:[%s1895 + $0x48] sm:$0xff]
        %v1906 = vld [vmem:[%s1895 + $0x50] sm:$0xff]
        %v1907 = vld [vmem:[%s1895 + $0x58] sm:$0xff]
        %v1908 = vld [vmem:[%s1895 + $0x60] sm:$0xff]
        %v1909 = vld [vmem:[%s1895 + $0x68] sm:$0xff]
        %v1910 = vld [vmem:[%s1895 + $0x70] sm:$0xff]
        %v1911 = vld [vmem:[%s1895 + $0x78] sm:$0xff]
        %v1912 = vld [vmem:[%s1895 + $0x80] sm:$0xff]
        %v1913 = vld [vmem:[%s1895 + $0x88] sm:$0xff]
        %vm1920 = vcmask 1046528
        %v1921 = vrot.slane %v1891, 1
        %v1922 = vrot.slane %v1871, 1
        %v1923 = vsel %vm1920, %v1921, %v1922
        %v1924 = vrot.slane %v1892, 1
        %v1925 = vrot.slane %v1872, 1
        %v1926 = vsel %vm1920, %v1924, %v1925
        %v1927 = vrot.slane %v1893, 1
        %v1928 = vsel %vm1920, %v1922, %v1927
        %v1929 = vrot.slane %v1894, 1
        %v1930 = vsel %vm1920, %v1925, %v1929
        %v1933 = vsel %vm784, %v1926, 0
        %v1935 = vsel %vm784, %v1930, 0
        %1937 = vmatprep.subr.mxu0 0.0
        %1938 = vmatpush1.msra.mxu0 %v1911
        %1939 = vmatprep.subr.mxu0 0.0
        %1940 = vmatpush1.msra.mxu0 %v1910
        %1941 = vmatprep.subr.mxu0 0.0
        %1942 = vmatpush1.msra.mxu0 %v1909
        %1943 = vmatprep.subr.mxu0 0.0
        %1944 = vmatpush1.msra.mxu0 %v1908
        %1945 = vmatprep.subr.mxu0 0.0
        %1946 = vmatpush1.msra.mxu0 %v1907
        %1947 = vmatprep.subr.mxu0 0.0
        %1948 = vmatpush1.msra.mxu0 %v1906
        %1949 = vmatprep.subr.mxu0 0.0
        %1950 = vmatpush1.msra.mxu0 %v1905
        %1951 = vmatprep.subr.mxu0 0.0
        %1952 = vmatpush1.msra.mxu0 %v1904
        %1953 = vmatprep.subr.mxu0 0.0
        %1954 = vmatpush1.msra.mxu0 %v1903
        %1955 = vmatprep.subr.mxu0 0.0
        %1956 = vmatpush1.msra.mxu0 %v1902
        %1957 = vmatprep.subr.mxu0 0.0
        %1958 = vmatpush1.msra.mxu0 %v1901
        %1959 = vmatprep.subr.mxu0 0.0
        %1960 = vmatpush1.msra.mxu0 %v1900
        %1961 = vmatprep.subr.mxu0 0.0
        %1962 = vmatpush1.msra.mxu0 %v1899
        %1963 = vmatprep.subr.mxu0 0.0
        %1964 = vmatpush1.msra.mxu0 %v1898
        %1965 = vmatprep.subr.mxu0 0.0
        %1966 = vmatpush1.msra.mxu0 %v1897
        %1967 = vmatprep.subr.mxu0 0.0
        %1968 = vmatpush1.msra.mxu0 %v1896
        %1969 = vmatprep.subr.mxu0 0.0
        %1970 = vmatpush2.msra.mxu0 0.0
        %1971 = vmatprep.subr.mxu0 0.0
        %1972 = vmatpush2.msra.mxu0 0.0
        %1973 = vmatprep.subr.mxu0 0.0
        %1974 = vmatpush2.msra.mxu0 0.0
        %1975 = vmatprep.subr.mxu0 0.0
        %1976 = vmatpush2.msra.mxu0 0.0
        %1977 = vmatprep.subr.mxu0 0.0
        %1978 = vmatpush2.msra.mxu0 0.0
        %1979 = vmatprep.subr.mxu0 0.0
        %1980 = vmatpush2.msra.mxu0 0.0
        %1981 = vmatprep.subr.mxu0 0.0
        %1982 = vmatpush2.msra.mxu0 0.0
        %1983 = vmatprep.subr.mxu0 0.0
        %1984 = vmatpush2.msra.mxu0 0.0
        %1985 = vmatprep.subr.mxu0 0.0
        %1986 = vmatpush2.msra.mxu0 0.0
        %1987 = vmatprep.subr.mxu0 0.0
        %1988 = vmatpush2.msra.mxu0 0.0
        %1989 = vmatprep.subr.mxu0 0.0
        %1990 = vmatpush2.msra.mxu0 0.0
        %1991 = vmatprep.subr.mxu0 0.0
        %1992 = vmatpush2.msra.mxu0 0.0
        %1993 = vmatprep.subr.mxu0 0.0
        %1994 = vmatpush2.msra.mxu0 0.0
        %1995 = vmatprep.subr.mxu0 0.0
        %1996 = vmatpush2.msra.mxu0 0.0
        %1997 = vmatprep.subr.mxu0 0.0
        %1998 = vmatpush2.msra.mxu0 %v1913
        %1999 = vmatprep.subr.mxu0 0.0
        %2000 = vmatpush2.msra.mxu0 %v1912
        %2001 = vmatprep.mubr.f32.mxu0 %v1933
        %2002 = vmatmul.mubr.f32.gmra.mxu0 %v1923
        %v2003 = vpop.f32.mrf.mxu0
        %v2004 = vadd.f32 0.0, %v2003
        %v2005 = vpop.f32.mrf.mxu0
        %2006 = vmatprep.mubr.f32.mxu0 %v1935
        %2007 = vmatmul.mubr.f32.gmra.mxu0 %v1928
        %v2008 = vpop.f32.mrf.mxu0
        %v2009 = vadd.f32 0.0, %v2008
        %v2010 = vpop.f32.mrf.mxu0
        %2011 = vdwg.mxu0
        %v2013 = vsel %vm784, %v1870, 0
        %v2015 = vsel %vm784, %v1872, 0
        %2017 = vmatprep.subr.mxu0 0.0
        %2018 = vmatpush1.msra.mxu0 %v1888
        %2019 = vmatprep.subr.mxu0 0.0
        %2020 = vmatpush1.msra.mxu0 %v1887
        %2021 = vmatprep.subr.mxu0 0.0
        %2022 = vmatpush1.msra.mxu0 %v1886
        %2023 = vmatprep.subr.mxu0 0.0
        %2024 = vmatpush1.msra.mxu0 %v1885
        %2025 = vmatprep.subr.mxu0 0.0
        %2026 = vmatpush1.msra.mxu0 %v1884
        %2027 = vmatprep.subr.mxu0 0.0
        %2028 = vmatpush1.msra.mxu0 %v1883
        %2029 = vmatprep.subr.mxu0 0.0
        %2030 = vmatpush1.msra.mxu0 %v1882
        %2031 = vmatprep.subr.mxu0 0.0
        %2032 = vmatpush1.msra.mxu0 %v1881
        %2033 = vmatprep.subr.mxu0 0.0
        %2034 = vmatpush1.msra.mxu0 %v1880
        %2035 = vmatprep.subr.mxu0 0.0
        %2036 = vmatpush1.msra.mxu0 %v1879
        %2037 = vmatprep.subr.mxu0 0.0
        %2038 = vmatpush1.msra.mxu0 %v1878
        %2039 = vmatprep.subr.mxu0 0.0
        %2040 = vmatpush1.msra.mxu0 %v1877
        %2041 = vmatprep.subr.mxu0 0.0
        %2042 = vmatpush1.msra.mxu0 %v1876
        %2043 = vmatprep.subr.mxu0 0.0
        %2044 = vmatpush1.msra.mxu0 %v1875
        %2045 = vmatprep.subr.mxu0 0.0
        %2046 = vmatpush1.msra.mxu0 %v1874
        %2047 = vmatprep.subr.mxu0 0.0
        %2048 = vmatpush1.msra.mxu0 %v1873
        %2049 = vmatprep.subr.mxu0 0.0
        %2050 = vmatpush2.msra.mxu0 0.0
        %2051 = vmatprep.subr.mxu0 0.0
        %2052 = vmatpush2.msra.mxu0 0.0
        %2053 = vmatprep.subr.mxu0 0.0
        %2054 = vmatpush2.msra.mxu0 0.0
        %2055 = vmatprep.subr.mxu0 0.0
        %2056 = vmatpush2.msra.mxu0 0.0
        %2057 = vmatprep.subr.mxu0 0.0
        %2058 = vmatpush2.msra.mxu0 0.0
        %2059 = vmatprep.subr.mxu0 0.0
        %2060 = vmatpush2.msra.mxu0 0.0
        %2061 = vmatprep.subr.mxu0 0.0
        %2062 = vmatpush2.msra.mxu0 0.0
        %2063 = vmatprep.subr.mxu0 0.0
        %2064 = vmatpush2.msra.mxu0 0.0
        %2065 = vmatprep.subr.mxu0 0.0
        %2066 = vmatpush2.msra.mxu0 0.0
        %2067 = vmatprep.subr.mxu0 0.0
        %2068 = vmatpush2.msra.mxu0 0.0
        %2069 = vmatprep.subr.mxu0 0.0
        %2070 = vmatpush2.msra.mxu0 0.0
        %2071 = vmatprep.subr.mxu0 0.0
        %2072 = vmatpush2.msra.mxu0 0.0
        %2073 = vmatprep.subr.mxu0 0.0
        %2074 = vmatpush2.msra.mxu0 0.0
        %2075 = vmatprep.subr.mxu0 0.0
        %2076 = vmatpush2.msra.mxu0 0.0
        %2077 = vmatprep.subr.mxu0 0.0
        %2078 = vmatpush2.msra.mxu0 %v1890
        %2079 = vmatprep.subr.mxu0 0.0
        %2080 = vmatpush2.msra.mxu0 %v1889
        %2081 = vmatprep.mubr.f32.mxu0 %v2013
        %2082 = vmatmul.mubr.f32.gmra.mxu0 %v1869
        %v2083 = vpop.f32.mrf.mxu0
        %v2084 = vadd.f32 %v2004, %v2083
        %v2085 = vpop.f32.mrf.mxu0
        %2086 = vmatprep.mubr.f32.mxu0 %v2015
        %2087 = vmatmul.mubr.f32.gmra.mxu0 %v1871
        %v2088 = vpop.f32.mrf.mxu0
        %v2089 = vadd.f32 %v2009, %v2088
        %v2090 = vpop.f32.mrf.mxu0
        %2091 = vdwg.mxu0
        %v2092 = vld [vmem:[#allocation4] sm:$0xfc]
        %v2093 = vld [vmem:[#allocation4 + $0x8] sm:$0xfc]
        %v2094 = vld [vmem:[#allocation4 + $0x20] sm:$0x3]
        %v2095 = vld [vmem:[#allocation4 + $0x28] sm:$0x3]
        %s2096 = scalar_lea.vmem %s9, 288
        %v2097 = vld [vmem:[%s2096] sm:$0xff]
        %v2098 = vld [vmem:[%s2096 + $0x8] sm:$0xff]
        %v2099 = vld [vmem:[%s2096 + $0x10] sm:$0xff]
        %v2100 = vld [vmem:[%s2096 + $0x18] sm:$0xff]
        %v2101 = vld [vmem:[%s2096 + $0x20] sm:$0xff]
        %v2102 = vld [vmem:[%s2096 + $0x28] sm:$0xff]
        %v2103 = vld [vmem:[%s2096 + $0x30] sm:$0xff]
        %v2104 = vld [vmem:[%s2096 + $0x38] sm:$0xff]
        %v2105 = vld [vmem:[%s2096 + $0x40] sm:$0xff]
        %v2106 = vld [vmem:[%s2096 + $0x48] sm:$0xff]
        %v2107 = vld [vmem:[%s2096 + $0x50] sm:$0xff]
        %v2108 = vld [vmem:[%s2096 + $0x58] sm:$0xff]
        %v2109 = vld [vmem:[%s2096 + $0x60] sm:$0xff]
        %v2110 = vld [vmem:[%s2096 + $0x68] sm:$0xff]
        %v2111 = vld [vmem:[%s2096 + $0x70] sm:$0xff]
        %v2112 = vld [vmem:[%s2096 + $0x78] sm:$0xff]
        %v2113 = vld [vmem:[%s2096 + $0x80] sm:$0xff]
        %v2114 = vld [vmem:[%s2096 + $0x88] sm:$0xff]
        %vm2119 = vcmask 1045504
        %v2120 = vrot.slane %v2092, 2
        %v2121 = vrot.slane %v1871, 2
        %v2122 = vsel %vm2119, %v2120, %v2121
        %v2123 = vrot.slane %v2093, 2
        %v2124 = vrot.slane %v1872, 2
        %v2125 = vsel %vm2119, %v2123, %v2124
        %v2126 = vrot.slane %v2094, 2
        %v2127 = vsel %vm2119, %v2121, %v2126
        %v2128 = vrot.slane %v2095, 2
        %v2129 = vsel %vm2119, %v2124, %v2128
        %v2132 = vsel %vm784, %v2125, 0
        %v2134 = vsel %vm784, %v2129, 0
        %2136 = vmatprep.subr.mxu0 0.0
        %2137 = vmatpush1.msra.mxu0 %v2112
        %2138 = vmatprep.subr.mxu0 0.0
        %2139 = vmatpush1.msra.mxu0 %v2111
        %2140 = vmatprep.subr.mxu0 0.0
        %2141 = vmatpush1.msra.mxu0 %v2110
        %2142 = vmatprep.subr.mxu0 0.0
        %2143 = vmatpush1.msra.mxu0 %v2109
        %2144 = vmatprep.subr.mxu0 0.0
        %2145 = vmatpush1.msra.mxu0 %v2108
        %2146 = vmatprep.subr.mxu0 0.0
        %2147 = vmatpush1.msra.mxu0 %v2107
        %2148 = vmatprep.subr.mxu0 0.0
        %2149 = vmatpush1.msra.mxu0 %v2106
        %2150 = vmatprep.subr.mxu0 0.0
        %2151 = vmatpush1.msra.mxu0 %v2105
        %2152 = vmatprep.subr.mxu0 0.0
        %2153 = vmatpush1.msra.mxu0 %v2104
        %2154 = vmatprep.subr.mxu0 0.0
        %2155 = vmatpush1.msra.mxu0 %v2103
        %2156 = vmatprep.subr.mxu0 0.0
        %2157 = vmatpush1.msra.mxu0 %v2102
        %2158 = vmatprep.subr.mxu0 0.0
        %2159 = vmatpush1.msra.mxu0 %v2101
        %2160 = vmatprep.subr.mxu0 0.0
        %2161 = vmatpush1.msra.mxu0 %v2100
        %2162 = vmatprep.subr.mxu0 0.0
        %2163 = vmatpush1.msra.mxu0 %v2099
        %2164 = vmatprep.subr.mxu0 0.0
        %2165 = vmatpush1.msra.mxu0 %v2098
        %2166 = vmatprep.subr.mxu0 0.0
        %2167 = vmatpush1.msra.mxu0 %v2097
        %2168 = vmatprep.subr.mxu0 0.0
        %2169 = vmatpush2.msra.mxu0 0.0
        %2170 = vmatprep.subr.mxu0 0.0
        %2171 = vmatpush2.msra.mxu0 0.0
        %2172 = vmatprep.subr.mxu0 0.0
        %2173 = vmatpush2.msra.mxu0 0.0
        %2174 = vmatprep.subr.mxu0 0.0
        %2175 = vmatpush2.msra.mxu0 0.0
        %2176 = vmatprep.subr.mxu0 0.0
        %2177 = vmatpush2.msra.mxu0 0.0
        %2178 = vmatprep.subr.mxu0 0.0
        %2179 = vmatpush2.msra.mxu0 0.0
        %2180 = vmatprep.subr.mxu0 0.0
        %2181 = vmatpush2.msra.mxu0 0.0
        %2182 = vmatprep.subr.mxu0 0.0
        %2183 = vmatpush2.msra.mxu0 0.0
        %2184 = vmatprep.subr.mxu0 0.0
        %2185 = vmatpush2.msra.mxu0 0.0
        %2186 = vmatprep.subr.mxu0 0.0
        %2187 = vmatpush2.msra.mxu0 0.0
        %2188 = vmatprep.subr.mxu0 0.0
        %2189 = vmatpush2.msra.mxu0 0.0
        %2190 = vmatprep.subr.mxu0 0.0
        %2191 = vmatpush2.msra.mxu0 0.0
        %2192 = vmatprep.subr.mxu0 0.0
        %2193 = vmatpush2.msra.mxu0 0.0
        %2194 = vmatprep.subr.mxu0 0.0
        %2195 = vmatpush2.msra.mxu0 0.0
        %2196 = vmatprep.subr.mxu0 0.0
        %2197 = vmatpush2.msra.mxu0 %v2114
        %2198 = vmatprep.subr.mxu0 0.0
        %2199 = vmatpush2.msra.mxu0 %v2113
        %2200 = vmatprep.mubr.f32.mxu0 %v2132
        %2201 = vmatmul.mubr.f32.gmra.mxu0 %v2122
        %v2202 = vpop.f32.mrf.mxu0
        %v2203 = vadd.f32 0.0, %v2202
        %v2204 = vpop.f32.mrf.mxu0
        %2205 = vmatprep.mubr.f32.mxu0 %v2134
        %2206 = vmatmul.mubr.f32.gmra.mxu0 %v2127
        %v2207 = vpop.f32.mrf.mxu0
        %v2208 = vadd.f32 0.0, %v2207
        %v2209 = vpop.f32.mrf.mxu0
        %2210 = vdwg.mxu0
        %v2211 = vadd.f32 %v2084, %v2203
        %v2212 = vadd.f32 %v2089, %v2208
        %v2213 = vld [vmem:[%s10] sm:$0x1]
        %v2215 = vlaneseq
        %v2216 = vshrl.u32 %v2215, 7
        %v2217 = vsub.s32 0, %v2216
        %v2218 = vrot.slane %v2213, %v2217
        %v2220 = vadd.f32 %v2211, %v2218
        %v2221 = vadd.f32 %v2212, %v2218
        %v2222 = vmax.f32 %v2220, 0.0
        %v2223 = vmax.f32 %v2221, 0.0
        %v2224 = vld [vmem:[%s11] sm:$0xff]
        %v2225 = vld [vmem:[%s11 + $0x8] sm:$0xff]
        %v2226 = vld [vmem:[%s11 + $0x10] sm:$0xff]
        %v2227 = vld [vmem:[%s11 + $0x18] sm:$0xff]
        %v2228 = vld [vmem:[%s11 + $0x20] sm:$0xff]
        %v2229 = vld [vmem:[%s11 + $0x28] sm:$0xff]
        %v2230 = vld [vmem:[%s11 + $0x30] sm:$0xff]
        %v2231 = vld [vmem:[%s11 + $0x38] sm:$0xff]
        %v2232 = vld [vmem:[%s11 + $0x40] sm:$0xff]
        %v2233 = vld [vmem:[%s11 + $0x48] sm:$0xff]
        %v2234 = vld [vmem:[%s11 + $0x50] sm:$0xff]
        %v2235 = vld [vmem:[%s11 + $0x58] sm:$0xff]
        %v2236 = vld [vmem:[%s11 + $0x60] sm:$0xff]
        %v2237 = vld [vmem:[%s11 + $0x68] sm:$0xff]
        %v2238 = vld [vmem:[%s11 + $0x70] sm:$0xff]
        %v2239 = vld [vmem:[%s11 + $0x78] sm:$0xff]
        %2240 = vmatprep.subr.mxu0 0.0
        %2241 = vmatpush1.msra.mxu0 %v2239
        %2242 = vmatprep.subr.mxu0 0.0
        %2243 = vmatpush1.msra.mxu0 %v2238
        %2244 = vmatprep.subr.mxu0 0.0
        %2245 = vmatpush1.msra.mxu0 %v2237
        %2246 = vmatprep.subr.mxu0 0.0
        %2247 = vmatpush1.msra.mxu0 %v2236
        %2248 = vmatprep.subr.mxu0 0.0
        %2249 = vmatpush1.msra.mxu0 %v2235
        %2250 = vmatprep.subr.mxu0 0.0
        %2251 = vmatpush1.msra.mxu0 %v2234
        %2252 = vmatprep.subr.mxu0 0.0
        %2253 = vmatpush1.msra.mxu0 %v2233
        %2254 = vmatprep.subr.mxu0 0.0
        %2255 = vmatpush1.msra.mxu0 %v2232
        %2256 = vmatprep.subr.mxu0 0.0
        %2257 = vmatpush1.msra.mxu0 %v2231
        %2258 = vmatprep.subr.mxu0 0.0
        %2259 = vmatpush1.msra.mxu0 %v2230
        %2260 = vmatprep.subr.mxu0 0.0
        %2261 = vmatpush1.msra.mxu0 %v2229
        %2262 = vmatprep.subr.mxu0 0.0
        %2263 = vmatpush1.msra.mxu0 %v2228
        %2264 = vmatprep.subr.mxu0 0.0
        %2265 = vmatpush1.msra.mxu0 %v2227
        %2266 = vmatprep.subr.mxu0 0.0
        %2267 = vmatpush1.msra.mxu0 %v2226
        %2268 = vmatprep.subr.mxu0 0.0
        %2269 = vmatpush1.msra.mxu0 %v2225
        %2270 = vmatprep.subr.mxu0 0.0
        %2271 = vmatpush1.msra.mxu0 %v2224
        %2272 = vmatprep.subr.mxu0 0.0
        %2273 = vmatpush2.msra.mxu0 0.0
        %2274 = vmatprep.subr.mxu0 0.0
        %2275 = vmatpush2.msra.mxu0 0.0
        %2276 = vmatprep.subr.mxu0 0.0
        %2277 = vmatpush2.msra.mxu0 0.0
        %2278 = vmatprep.subr.mxu0 0.0
        %2279 = vmatpush2.msra.mxu0 0.0
        %2280 = vmatprep.subr.mxu0 0.0
        %2281 = vmatpush2.msra.mxu0 0.0
        %2282 = vmatprep.subr.mxu0 0.0
        %2283 = vmatpush2.msra.mxu0 0.0
        %2284 = vmatprep.subr.mxu0 0.0
        %2285 = vmatpush2.msra.mxu0 0.0
        %2286 = vmatprep.subr.mxu0 0.0
        %2287 = vmatpush2.msra.mxu0 0.0
        %2288 = vmatprep.subr.mxu0 0.0
        %2289 = vmatpush2.msra.mxu0 0.0
        %2290 = vmatprep.subr.mxu0 0.0
        %2291 = vmatpush2.msra.mxu0 0.0
        %2292 = vmatprep.subr.mxu0 0.0
        %2293 = vmatpush2.msra.mxu0 0.0
        %2294 = vmatprep.subr.mxu0 0.0
        %2295 = vmatpush2.msra.mxu0 0.0
        %2296 = vmatprep.subr.mxu0 0.0
        %2297 = vmatpush2.msra.mxu0 0.0
        %2298 = vmatprep.subr.mxu0 0.0
        %2299 = vmatpush2.msra.mxu0 0.0
        %2300 = vmatprep.subr.mxu0 0.0
        %2301 = vmatpush2.msra.mxu0 0.0
        %2302 = vmatprep.subr.mxu0 0.0
        %2303 = vmatpush2.msra.mxu0 0.0
        %2304 = vmatprep.mubr.f32.mxu0 0.0
        %2305 = vmatmul.mubr.f32.gmra.mxu0 %v2222
        %v2306 = vpop.f32.mrf.mxu0
        %v2307 = vadd.f32 0.0, %v2306
        %v2308 = vpop.f32.mrf.mxu0
        %2309 = vmatprep.mubr.f32.mxu0 0.0
        %2310 = vmatmul.mubr.f32.gmra.mxu0 %v2223
        %v2311 = vpop.f32.mrf.mxu0
        %v2312 = vadd.f32 0.0, %v2311
        %v2313 = vpop.f32.mrf.mxu0
        %2314 = vdwg.mxu0
        %v2315 = vld [vmem:[%s12] sm:$0xff]
        %v2316 = vld [vmem:[%s12 + $0x8] sm:$0xff]
        %v2317 = vld [vmem:[%s12 + $0x10] sm:$0xff]
        %v2318 = vld [vmem:[%s12 + $0x18] sm:$0xff]
        %v2319 = vld [vmem:[%s12 + $0x20] sm:$0xff]
        %v2320 = vld [vmem:[%s12 + $0x28] sm:$0xff]
        %v2321 = vld [vmem:[%s12 + $0x30] sm:$0xff]
        %v2322 = vld [vmem:[%s12 + $0x38] sm:$0xff]
        %v2323 = vld [vmem:[%s12 + $0x40] sm:$0xff]
        %v2324 = vld [vmem:[%s12 + $0x48] sm:$0xff]
        %v2325 = vld [vmem:[%s12 + $0x50] sm:$0xff]
        %v2326 = vld [vmem:[%s12 + $0x58] sm:$0xff]
        %v2327 = vld [vmem:[%s12 + $0x60] sm:$0xff]
        %v2328 = vld [vmem:[%s12 + $0x68] sm:$0xff]
        %v2329 = vld [vmem:[%s12 + $0x70] sm:$0xff]
        %v2330 = vld [vmem:[%s12 + $0x78] sm:$0xff]
        %2331 = vmatprep.subr.mxu0 0.0
        %2332 = vmatpush1.msra.mxu0 %v2330
        %2333 = vmatprep.subr.mxu0 0.0
        %2334 = vmatpush1.msra.mxu0 %v2329
        %2335 = vmatprep.subr.mxu0 0.0
        %2336 = vmatpush1.msra.mxu0 %v2328
        %2337 = vmatprep.subr.mxu0 0.0
        %2338 = vmatpush1.msra.mxu0 %v2327
        %2339 = vmatprep.subr.mxu0 0.0
        %2340 = vmatpush1.msra.mxu0 %v2326
        %2341 = vmatprep.subr.mxu0 0.0
        %2342 = vmatpush1.msra.mxu0 %v2325
        %2343 = vmatprep.subr.mxu0 0.0
        %2344 = vmatpush1.msra.mxu0 %v2324
        %2345 = vmatprep.subr.mxu0 0.0
        %2346 = vmatpush1.msra.mxu0 %v2323
        %2347 = vmatprep.subr.mxu0 0.0
        %2348 = vmatpush1.msra.mxu0 %v2322
        %2349 = vmatprep.subr.mxu0 0.0
        %2350 = vmatpush1.msra.mxu0 %v2321
        %2351 = vmatprep.subr.mxu0 0.0
        %2352 = vmatpush1.msra.mxu0 %v2320
        %2353 = vmatprep.subr.mxu0 0.0
        %2354 = vmatpush1.msra.mxu0 %v2319
        %2355 = vmatprep.subr.mxu0 0.0
        %2356 = vmatpush1.msra.mxu0 %v2318
        %2357 = vmatprep.subr.mxu0 0.0
        %2358 = vmatpush1.msra.mxu0 %v2317
        %2359 = vmatprep.subr.mxu0 0.0
        %2360 = vmatpush1.msra.mxu0 %v2316
        %2361 = vmatprep.subr.mxu0 0.0
        %2362 = vmatpush1.msra.mxu0 %v2315
        %2363 = vmatprep.subr.mxu0 0.0
        %2364 = vmatpush2.msra.mxu0 0.0
        %2365 = vmatprep.subr.mxu0 0.0
        %2366 = vmatpush2.msra.mxu0 0.0
        %2367 = vmatprep.subr.mxu0 0.0
        %2368 = vmatpush2.msra.mxu0 0.0
        %2369 = vmatprep.subr.mxu0 0.0
        %2370 = vmatpush2.msra.mxu0 0.0
        %2371 = vmatprep.subr.mxu0 0.0
        %2372 = vmatpush2.msra.mxu0 0.0
        %2373 = vmatprep.subr.mxu0 0.0
        %2374 = vmatpush2.msra.mxu0 0.0
        %2375 = vmatprep.subr.mxu0 0.0
        %2376 = vmatpush2.msra.mxu0 0.0
        %2377 = vmatprep.subr.mxu0 0.0
        %2378 = vmatpush2.msra.mxu0 0.0
        %2379 = vmatprep.subr.mxu0 0.0
        %2380 = vmatpush2.msra.mxu0 0.0
        %2381 = vmatprep.subr.mxu0 0.0
        %2382 = vmatpush2.msra.mxu0 0.0
        %2383 = vmatprep.subr.mxu0 0.0
        %2384 = vmatpush2.msra.mxu0 0.0
        %2385 = vmatprep.subr.mxu0 0.0
        %2386 = vmatpush2.msra.mxu0 0.0
        %2387 = vmatprep.subr.mxu0 0.0
        %2388 = vmatpush2.msra.mxu0 0.0
        %2389 = vmatprep.subr.mxu0 0.0
        %2390 = vmatpush2.msra.mxu0 0.0
        %2391 = vmatprep.subr.mxu0 0.0
        %2392 = vmatpush2.msra.mxu0 0.0
        %2393 = vmatprep.subr.mxu0 0.0
        %2394 = vmatpush2.msra.mxu0 0.0
        %2395 = vmatprep.mubr.f32.mxu0 0.0
        %2396 = vmatmul.mubr.f32.gmra.mxu0 %v2222
        %v2397 = vpop.f32.mrf.mxu0
        %v2398 = vadd.f32 0.0, %v2397
        %v2399 = vpop.f32.mrf.mxu0
        %2400 = vmatprep.mubr.f32.mxu0 0.0
        %2401 = vmatmul.mubr.f32.gmra.mxu0 %v2223
        %v2402 = vpop.f32.mrf.mxu0
        %v2403 = vadd.f32 0.0, %v2402
        %v2404 = vpop.f32.mrf.mxu0
        %2405 = vdwg.mxu0
        %v2406 = vmax.f32 %v2307, %v2398
        %v2407 = vmax.f32 %v2312, %v2403
        %v2408 = vld [vmem:[%s13] sm:$0xff]
        %v2410 = vsel %vm784, %v2408, 0
        %2412 = vmatprep.subr.mxu0 0.0
        %2413 = vmatpush1.msra.mxu0 0.0
        %2414 = vmatprep.subr.mxu0 0.0
        %2415 = vmatpush1.msra.mxu0 0.0
        %2416 = vmatprep.subr.mxu0 0.0
        %2417 = vmatpush1.msra.mxu0 0.0
        %2418 = vmatprep.subr.mxu0 0.0
        %2419 = vmatpush1.msra.mxu0 0.0
        %2420 = vmatprep.subr.mxu0 0.0
        %2421 = vmatpush1.msra.mxu0 0.0
        %2422 = vmatprep.subr.mxu0 0.0
        %2423 = vmatpush1.msra.mxu0 0.0
        %2424 = vmatprep.subr.mxu0 0.0
        %2425 = vmatpush1.msra.mxu0 0.0
        %2426 = vmatprep.subr.mxu0 0.0
        %2427 = vmatpush1.msra.mxu0 0.0
        %2428 = vmatprep.subr.mxu0 0.0
        %2429 = vmatpush1.msra.mxu0 0.0
        %2430 = vmatprep.subr.mxu0 0.0
        %2431 = vmatpush1.msra.mxu0 0.0
        %2432 = vmatprep.subr.mxu0 0.0
        %2433 = vmatpush1.msra.mxu0 0.0
        %2434 = vmatprep.subr.mxu0 0.0
        %2435 = vmatpush1.msra.mxu0 0.0
        %2436 = vmatprep.subr.mxu0 0.0
        %2437 = vmatpush1.msra.mxu0 0.0
        %2438 = vmatprep.subr.mxu0 0.0
        %2439 = vmatpush1.msra.mxu0 0.0
        %2440 = vmatprep.subr.mxu0 0.0
        %2441 = vmatpush1.msra.mxu0 %v2407
        %2442 = vmatprep.subr.mxu0 0.0
        %2443 = vmatpush1.msra.mxu0 %v2406
        %2444 = vmatprep.subr.mxu0 0.0
        %2445 = vmatpush2.msra.mxu0 0.0
        %2446 = vmatprep.subr.mxu0 0.0
        %2447 = vmatpush2.msra.mxu0 0.0
        %2448 = vmatprep.subr.mxu0 0.0
        %2449 = vmatpush2.msra.mxu0 0.0
        %2450 = vmatprep.subr.mxu0 0.0
        %2451 = vmatpush2.msra.mxu0 0.0
        %2452 = vmatprep.subr.mxu0 0.0
        %2453 = vmatpush2.msra.mxu0 0.0
        %2454 = vmatprep.subr.mxu0 0.0
        %2455 = vmatpush2.msra.mxu0 0.0
        %2456 = vmatprep.subr.mxu0 0.0
        %2457 = vmatpush2.msra.mxu0 0.0
        %2458 = vmatprep.subr.mxu0 0.0
        %2459 = vmatpush2.msra.mxu0 0.0
        %2460 = vmatprep.subr.mxu0 0.0
        %2461 = vmatpush2.msra.mxu0 0.0
        %2462 = vmatprep.subr.mxu0 0.0
        %2463 = vmatpush2.msra.mxu0 0.0
        %2464 = vmatprep.subr.mxu0 0.0
        %2465 = vmatpush2.msra.mxu0 0.0
        %2466 = vmatprep.subr.mxu0 0.0
        %2467 = vmatpush2.msra.mxu0 0.0
        %2468 = vmatprep.subr.mxu0 0.0
        %2469 = vmatpush2.msra.mxu0 0.0
        %2470 = vmatprep.subr.mxu0 0.0
        %2471 = vmatpush2.msra.mxu0 0.0
        %2472 = vmatprep.subr.mxu0 0.0
        %2473 = vmatpush2.msra.mxu0 0.0
        %2474 = vmatprep.subr.mxu0 0.0
        %2475 = vmatpush2.msra.mxu0 0.0
        %2476 = vmatprep.mubr.f32.mxu0 0.0
        %2477 = vmatmul.mubr.f32.gmra.mxu0 %v2410
        %v2478 = vpop.f32.mrf.mxu0
        %v2479 = vadd.f32 0.0, %v2478
        %v2480 = vpop.f32.mrf.mxu0
        %2481 = vdwg.mxu0
        %v2482 = vld [vmem:[#allocation11] sm:$0xff]
        %v2484 = vsel %vm784, %v2482, 0
        %2486 = vmatprep.subr.mxu0 0.0
        %2487 = vmatpush1.msra.mxu0 0.0
        %2488 = vmatprep.subr.mxu0 0.0
        %2489 = vmatpush1.msra.mxu0 0.0
        %2490 = vmatprep.subr.mxu0 0.0
        %2491 = vmatpush1.msra.mxu0 0.0
        %2492 = vmatprep.subr.mxu0 0.0
        %2493 = vmatpush1.msra.mxu0 0.0
        %2494 = vmatprep.subr.mxu0 0.0
        %2495 = vmatpush1.msra.mxu0 0.0
        %2496 = vmatprep.subr.mxu0 0.0
        %2497 = vmatpush1.msra.mxu0 0.0
        %2498 = vmatprep.subr.mxu0 0.0
        %2499 = vmatpush1.msra.mxu0 0.0
        %2500 = vmatprep.subr.mxu0 0.0
        %2501 = vmatpush1.msra.mxu0 0.0
        %2502 = vmatprep.subr.mxu0 0.0
        %2503 = vmatpush1.msra.mxu0 0.0
        %2504 = vmatprep.subr.mxu0 0.0
        %2505 = vmatpush1.msra.mxu0 0.0
        %2506 = vmatprep.subr.mxu0 0.0
        %2507 = vmatpush1.msra.mxu0 0.0
        %2508 = vmatprep.subr.mxu0 0.0
        %2509 = vmatpush1.msra.mxu0 0.0
        %2510 = vmatprep.subr.mxu0 0.0
        %2511 = vmatpush1.msra.mxu0 0.0
        %2512 = vmatprep.subr.mxu0 0.0
        %2513 = vmatpush1.msra.mxu0 0.0
        %2514 = vmatprep.subr.mxu0 0.0
        %2515 = vmatpush1.msra.mxu0 %v2407
        %2516 = vmatprep.subr.mxu0 0.0
        %2517 = vmatpush1.msra.mxu0 %v2406
        %2518 = vmatprep.subr.mxu0 0.0
        %2519 = vmatpush2.msra.mxu0 0.0
        %2520 = vmatprep.subr.mxu0 0.0
        %2521 = vmatpush2.msra.mxu0 0.0
        %2522 = vmatprep.subr.mxu0 0.0
        %2523 = vmatpush2.msra.mxu0 0.0
        %2524 = vmatprep.subr.mxu0 0.0
        %2525 = vmatpush2.msra.mxu0 0.0
        %2526 = vmatprep.subr.mxu0 0.0
        %2527 = vmatpush2.msra.mxu0 0.0
        %2528 = vmatprep.subr.mxu0 0.0
        %2529 = vmatpush2.msra.mxu0 0.0
        %2530 = vmatprep.subr.mxu0 0.0
        %2531 = vmatpush2.msra.mxu0 0.0
        %2532 = vmatprep.subr.mxu0 0.0
        %2533 = vmatpush2.msra.mxu0 0.0
        %2534 = vmatprep.subr.mxu0 0.0
        %2535 = vmatpush2.msra.mxu0 0.0
        %2536 = vmatprep.subr.mxu0 0.0
        %2537 = vmatpush2.msra.mxu0 0.0
        %2538 = vmatprep.subr.mxu0 0.0
        %2539 = vmatpush2.msra.mxu0 0.0
        %2540 = vmatprep.subr.mxu0 0.0
        %2541 = vmatpush2.msra.mxu0 0.0
        %2542 = vmatprep.subr.mxu0 0.0
        %2543 = vmatpush2.msra.mxu0 0.0
        %2544 = vmatprep.subr.mxu0 0.0
        %2545 = vmatpush2.msra.mxu0 0.0
        %2546 = vmatprep.subr.mxu0 0.0
        %2547 = vmatpush2.msra.mxu0 0.0
        %2548 = vmatprep.subr.mxu0 0.0
        %2549 = vmatpush2.msra.mxu0 0.0
        %2550 = vmatprep.mubr.f32.mxu0 0.0
        %2551 = vmatmul.mubr.f32.gmra.mxu0 %v2484
        %v2552 = vpop.f32.mrf.mxu0
        %v2553 = vadd.f32 0.0, %v2552
        %v2554 = vpop.f32.mrf.mxu0
        %2555 = vdwg.mxu0
        %v2556 = vmax.f32 %v2479, %v2553
        %v2557 = vpack.c.bf16 %v2556, %v2556
        %v2558 = vld [vmem:[%s16] sm:$0xf]
        %v2559 = vld [vmem:[#allocation13] sm:$0xff]
        %v2560 = vld [vmem:[#allocation13 + $0x8] sm:$0xff]
        %v2561 = vld [vmem:[#allocation13 + $0x10] sm:$0xff]
        %v2562 = vld [vmem:[#allocation13 + $0x18] sm:$0xff]
        %v2563 = vld [vmem:[#allocation13 + $0x20] sm:$0xff]
        %v2564 = vld [vmem:[#allocation13 + $0x28] sm:$0xff]
        %v2565 = vld [vmem:[#allocation13 + $0x30] sm:$0xff]
        %v2566 = vld [vmem:[#allocation13 + $0x38] sm:$0xff]
        %v2567 = vld [vmem:[#allocation13 + $0x40] sm:$0xff]
        %v2568 = vld [vmem:[#allocation13 + $0x48] sm:$0xff]
        %v2569 = vld [vmem:[#allocation13 + $0x50] sm:$0xff]
        %v2570 = vld [vmem:[#allocation13 + $0x58] sm:$0xff]
        %v2571 = vld [vmem:[#allocation13 + $0x60] sm:$0xff]
        %v2572 = vld [vmem:[#allocation13 + $0x68] sm:$0xff]
        %v2573 = vld [vmem:[#allocation13 + $0x70] sm:$0xff]
        %v2574 = vld [vmem:[#allocation13 + $0x78] sm:$0xff]
        %v2591 = vunpack.c.l.b16 %v2559
        %v2592 = vunpack.c.h.b16 %v2559
        %v2593 = vunpack.c.l.b16 %v2560
        %v2594 = vunpack.c.h.b16 %v2560
        %v2595 = vunpack.c.l.b16 %v2561
        %v2596 = vunpack.c.h.b16 %v2561
        %v2597 = vunpack.c.l.b16 %v2562
        %v2598 = vunpack.c.h.b16 %v2562
        %v2599 = vunpack.c.l.b16 %v2563
        %v2600 = vunpack.c.h.b16 %v2563
        %v2601 = vunpack.c.l.b16 %v2564
        %v2602 = vunpack.c.h.b16 %v2564
        %v2603 = vunpack.c.l.b16 %v2565
        %v2604 = vunpack.c.h.b16 %v2565
        %v2605 = vunpack.c.l.b16 %v2566
        %v2606 = vunpack.c.h.b16 %v2566
        %v2607 = vunpack.c.l.b16 %v2567
        %v2608 = vunpack.c.h.b16 %v2567
        %v2609 = vunpack.c.l.b16 %v2568
        %v2610 = vunpack.c.h.b16 %v2568
        %v2611 = vunpack.c.l.b16 %v2569
        %v2612 = vunpack.c.h.b16 %v2569
        %v2613 = vunpack.c.l.b16 %v2570
        %v2614 = vunpack.c.h.b16 %v2570
        %v2615 = vunpack.c.l.b16 %v2571
        %v2616 = vunpack.c.h.b16 %v2571
        %v2617 = vunpack.c.l.b16 %v2572
        %v2618 = vunpack.c.h.b16 %v2572
        %v2619 = vunpack.c.l.b16 %v2573
        %v2620 = vunpack.c.h.b16 %v2573
        %v2621 = vunpack.c.l.b16 %v2574
        %v2622 = vunpack.c.h.b16 %v2574
        %v2623 = vpack.c.b16 %v2595, %v2591
        %v2624 = vpack.c.b16 %v2596, %v2592
        %v2625 = vpack.c.b16 %v2597, %v2593
        %v2626 = vpack.c.b16 %v2598, %v2594
        %v2627 = vpack.c.b16 %v2603, %v2599
        %v2628 = vpack.c.b16 %v2604, %v2600
        %v2629 = vpack.c.b16 %v2605, %v2601
        %v2630 = vpack.c.b16 %v2606, %v2602
        %v2631 = vpack.c.b16 %v2611, %v2607
        %v2632 = vpack.c.b16 %v2612, %v2608
        %v2633 = vpack.c.b16 %v2613, %v2609
        %v2634 = vpack.c.b16 %v2614, %v2610
        %v2635 = vpack.c.b16 %v2619, %v2615
        %v2636 = vpack.c.b16 %v2620, %v2616
        %v2637 = vpack.c.b16 %v2621, %v2617
        %v2638 = vpack.c.b16 %v2622, %v2618
        %vm2655 = vcmask 523264
        %v2657 = vsel %vm2655, %v2557, 0
        %2659 = vmatprep.subr.bf16.mxu0 0
        %2660 = vmatpush1.bf16.msra.mxu0 0
        %2661 = vmatprep.subr.bf16.mxu0 0
        %2662 = vmatpush1.bf16.msra.mxu0 0
        %2663 = vmatprep.subr.bf16.mxu0 0
        %2664 = vmatpush1.bf16.msra.mxu0 0
        %2665 = vmatprep.subr.bf16.mxu0 0
        %2666 = vmatpush1.bf16.msra.mxu0 0
        %2667 = vmatprep.subr.bf16.mxu0 %v2636
        %2668 = vmatpush1.bf16.msra.mxu0 %v2635
        %2669 = vmatprep.subr.bf16.mxu0 %v2632
        %2670 = vmatpush1.bf16.msra.mxu0 %v2631
        %2671 = vmatprep.subr.bf16.mxu0 %v2628
        %2672 = vmatpush1.bf16.msra.mxu0 %v2627
        %2673 = vmatprep.subr.bf16.mxu0 %v2624
        %2674 = vmatpush1.bf16.msra.mxu0 %v2623
        %2675 = vmatprep.subr.bf16.mxu0 0
        %2676 = vmatpush2.bf16.msra.mxu0 0
        %2677 = vmatprep.subr.bf16.mxu0 0
        %2678 = vmatpush2.bf16.msra.mxu0 0
        %2679 = vmatprep.subr.bf16.mxu0 0
        %2680 = vmatpush2.bf16.msra.mxu0 0
        %2681 = vmatprep.subr.bf16.mxu0 0
        %2682 = vmatpush2.bf16.msra.mxu0 0
        %2683 = vmatprep.subr.bf16.mxu0 0
        %2684 = vmatpush2.bf16.msra.mxu0 0
        %2685 = vmatprep.subr.bf16.mxu0 0
        %2686 = vmatpush2.bf16.msra.mxu0 0
        %2687 = vmatprep.subr.bf16.mxu0 0
        %2688 = vmatpush2.bf16.msra.mxu0 0
        %2689 = vmatprep.subr.bf16.mxu0 0
        %2690 = vmatpush2.bf16.msra.mxu0 0
        %2691 = vmatprep.mubr.bf16.mxu0 0
        %2692 = vmatmul.mubr.bf16.gmra.mxu0 %v2657
        %v2693 = vpop.f32.mrf.mxu0
        %v2694 = vadd.f32 0.0, %v2693
        %v2695 = vpop.f32.mrf.mxu0
        %v2696 = vadd.f32 0.0, %v2695
        %v2697 = vpop.f32.mrf.mxu0
        %v2698 = vpop.f32.mrf.mxu0
        %2699 = vdwg.mxu0
        %2700 = vmatprep.subr.bf16.mxu0 0
        %2701 = vmatpush1.bf16.msra.mxu0 0
        %2702 = vmatprep.subr.bf16.mxu0 0
        %2703 = vmatpush1.bf16.msra.mxu0 0
        %2704 = vmatprep.subr.bf16.mxu0 0
        %2705 = vmatpush1.bf16.msra.mxu0 0
        %2706 = vmatprep.subr.bf16.mxu0 0
        %2707 = vmatpush1.bf16.msra.mxu0 0
        %2708 = vmatprep.subr.bf16.mxu0 %v2638
        %2709 = vmatpush1.bf16.msra.mxu0 %v2637
        %2710 = vmatprep.subr.bf16.mxu0 %v2634
        %2711 = vmatpush1.bf16.msra.mxu0 %v2633
        %2712 = vmatprep.subr.bf16.mxu0 %v2630
        %2713 = vmatpush1.bf16.msra.mxu0 %v2629
        %2714 = vmatprep.subr.bf16.mxu0 %v2626
        %2715 = vmatpush1.bf16.msra.mxu0 %v2625
        %2716 = vmatprep.subr.bf16.mxu0 0
        %2717 = vmatpush2.bf16.msra.mxu0 0
        %2718 = vmatprep.subr.bf16.mxu0 0
        %2719 = vmatpush2.bf16.msra.mxu0 0
        %2720 = vmatprep.subr.bf16.mxu0 0
        %2721 = vmatpush2.bf16.msra.mxu0 0
        %2722 = vmatprep.subr.bf16.mxu0 0
        %2723 = vmatpush2.bf16.msra.mxu0 0
        %2724 = vmatprep.subr.bf16.mxu0 0
        %2725 = vmatpush2.bf16.msra.mxu0 0
        %2726 = vmatprep.subr.bf16.mxu0 0
        %2727 = vmatpush2.bf16.msra.mxu0 0
        %2728 = vmatprep.subr.bf16.mxu0 0
        %2729 = vmatpush2.bf16.msra.mxu0 0
        %2730 = vmatprep.subr.bf16.mxu0 0
        %2731 = vmatpush2.bf16.msra.mxu0 0
        %2732 = vmatprep.mubr.bf16.mxu0 0
        %2733 = vmatmul.mubr.bf16.gmra.mxu0 %v2657
        %v2734 = vpop.f32.mrf.mxu0
        %v2735 = vadd.f32 0.0, %v2734
        %v2736 = vpop.f32.mrf.mxu0
        %v2737 = vadd.f32 0.0, %v2736
        %v2738 = vpop.f32.mrf.mxu0
        %v2739 = vpop.f32.mrf.mxu0
        %2740 = vdwg.mxu0
        %v2745 = vcombine.low %v2694, %v2696
        %v2746 = vcombine.low %v2735, %v2737
        %v2748 = vunpack.c.l.s4 1966171168
        %v2749 = vunpack.c.0.s8 %v2748
        %v2750 = vlaneseq
        %v2751 = vshrl.u32 %v2750, 7
        %v2752 = vsub.s32 %v2749, %v2751
        %v2753 = vrot.slane %v2745, %v2752
        %v2755 = vunpack.c.l.s4 1966171168
        %v2756 = vunpack.c.0.s8 %v2755
        %v2757 = vlaneseq
        %v2758 = vshrl.u32 %v2757, 7
        %v2759 = vsub.s32 %v2756, %v2758
        %v2760 = vrot.slane %v2746, %v2759
        %v2761 = vcombine.low %v2753, %v2760
        %v2763 = vunpack.c.l.s4 1966171168
        %v2764 = vunpack.c.0.s8 %v2763
        %v2765 = vlaneseq
        %v2766 = vshrl.u32 %v2765, 7
        %v2767 = vsub.s32 %v2764, %v2766
        %v2768 = vrot.slane %v2761, %v2767
        %v2770 = vadd.f32 %v2558, %v2768
        %s2771 = scalar_lea.vmem [#allocation13], 128
        %v2772 = vld [vmem:[%s2771] sm:$0xff]
        %v2773 = vld [vmem:[%s2771 + $0x8] sm:$0xff]
        %v2774 = vld [vmem:[%s2771 + $0x10] sm:$0xff]
        %v2775 = vld [vmem:[%s2771 + $0x18] sm:$0xff]
        %v2776 = vld [vmem:[%s2771 + $0x20] sm:$0xff]
        %v2777 = vld [vmem:[%s2771 + $0x28] sm:$0xff]
        %v2778 = vld [vmem:[%s2771 + $0x30] sm:$0xff]
        %v2779 = vld [vmem:[%s2771 + $0x38] sm:$0xff]
        %v2780 = vld [vmem:[%s2771 + $0x40] sm:$0xff]
        %v2781 = vld [vmem:[%s2771 + $0x48] sm:$0xff]
        %v2782 = vld [vmem:[%s2771 + $0x50] sm:$0xff]
        %v2783 = vld [vmem:[%s2771 + $0x58] sm:$0xff]
        %v2784 = vld [vmem:[%s2771 + $0x60] sm:$0xff]
        %v2785 = vld [vmem:[%s2771 + $0x68] sm:$0xff]
        %v2786 = vld [vmem:[%s2771 + $0x70] sm:$0xff]
        %v2787 = vld [vmem:[%s2771 + $0x78] sm:$0xff]
        %v2788 = vshrl.u32 %v2557, 16
        %v2806 = vunpack.c.l.b16 %v2772
        %v2807 = vunpack.c.h.b16 %v2772
        %v2808 = vunpack.c.l.b16 %v2773
        %v2809 = vunpack.c.h.b16 %v2773
        %v2810 = vunpack.c.l.b16 %v2774
        %v2811 = vunpack.c.h.b16 %v2774
        %v2812 = vunpack.c.l.b16 %v2775
        %v2813 = vunpack.c.h.b16 %v2775
        %v2814 = vunpack.c.l.b16 %v2776
        %v2815 = vunpack.c.h.b16 %v2776
        %v2816 = vunpack.c.l.b16 %v2777
        %v2817 = vunpack.c.h.b16 %v2777
        %v2818 = vunpack.c.l.b16 %v2778
        %v2819 = vunpack.c.h.b16 %v2778
        %v2820 = vunpack.c.l.b16 %v2779
        %v2821 = vunpack.c.h.b16 %v2779
        %v2822 = vunpack.c.l.b16 %v2780
        %v2823 = vunpack.c.h.b16 %v2780
        %v2824 = vunpack.c.l.b16 %v2781
        %v2825 = vunpack.c.h.b16 %v2781
        %v2826 = vunpack.c.l.b16 %v2782
        %v2827 = vunpack.c.h.b16 %v2782
        %v2828 = vunpack.c.l.b16 %v2783
        %v2829 = vunpack.c.h.b16 %v2783
        %v2830 = vunpack.c.l.b16 %v2784
        %v2831 = vunpack.c.h.b16 %v2784
        %v2832 = vunpack.c.l.b16 %v2785
        %v2833 = vunpack.c.h.b16 %v2785
        %v2834 = vunpack.c.l.b16 %v2786
        %v2835 = vunpack.c.h.b16 %v2786
        %v2836 = vunpack.c.l.b16 %v2787
        %v2837 = vunpack.c.h.b16 %v2787
        %v2838 = vpack.c.b16 %v2810, %v2806
        %v2839 = vpack.c.b16 %v2811, %v2807
        %v2840 = vpack.c.b16 %v2812, %v2808
        %v2841 = vpack.c.b16 %v2813, %v2809
        %v2842 = vpack.c.b16 %v2818, %v2814
        %v2843 = vpack.c.b16 %v2819, %v2815
        %v2844 = vpack.c.b16 %v2820, %v2816
        %v2845 = vpack.c.b16 %v2821, %v2817
        %v2846 = vpack.c.b16 %v2826, %v2822
        %v2847 = vpack.c.b16 %v2827, %v2823
        %v2848 = vpack.c.b16 %v2828, %v2824
        %v2849 = vpack.c.b16 %v2829, %v2825
        %v2850 = vpack.c.b16 %v2834, %v2830
        %v2851 = vpack.c.b16 %v2835, %v2831
        %v2852 = vpack.c.b16 %v2836, %v2832
        %v2853 = vpack.c.b16 %v2837, %v2833
        %v2871 = vsel %vm2655, %v2788, 0
        %2873 = vmatprep.subr.bf16.mxu0 0
        %2874 = vmatpush1.bf16.msra.mxu0 0
        %2875 = vmatprep.subr.bf16.mxu0 0
        %2876 = vmatpush1.bf16.msra.mxu0 0
        %2877 = vmatprep.subr.bf16.mxu0 0
        %2878 = vmatpush1.bf16.msra.mxu0 0
        %2879 = vmatprep.subr.bf16.mxu0 0
        %2880 = vmatpush1.bf16.msra.mxu0 0
        %2881 = vmatprep.subr.bf16.mxu0 %v2851
        %2882 = vmatpush1.bf16.msra.mxu0 %v2850
        %2883 = vmatprep.subr.bf16.mxu0 %v2847
        %2884 = vmatpush1.bf16.msra.mxu0 %v2846
        %2885 = vmatprep.subr.bf16.mxu0 %v2843
        %2886 = vmatpush1.bf16.msra.mxu0 %v2842
        %2887 = vmatprep.subr.bf16.mxu0 %v2839
        %2888 = vmatpush1.bf16.msra.mxu0 %v2838
        %2889 = vmatprep.subr.bf16.mxu0 0
        %2890 = vmatpush2.bf16.msra.mxu0 0
        %2891 = vmatprep.subr.bf16.mxu0 0
        %2892 = vmatpush2.bf16.msra.mxu0 0
        %2893 = vmatprep.subr.bf16.mxu0 0
        %2894 = vmatpush2.bf16.msra.mxu0 0
        %2895 = vmatprep.subr.bf16.mxu0 0
        %2896 = vmatpush2.bf16.msra.mxu0 0
        %2897 = vmatprep.subr.bf16.mxu0 0
        %2898 = vmatpush2.bf16.msra.mxu0 0
        %2899 = vmatprep.subr.bf16.mxu0 0
        %2900 = vmatpush2.bf16.msra.mxu0 0
        %2901 = vmatprep.subr.bf16.mxu0 0
        %2902 = vmatpush2.bf16.msra.mxu0 0
        %2903 = vmatprep.subr.bf16.mxu0 0
        %2904 = vmatpush2.bf16.msra.mxu0 0
        %2905 = vmatprep.mubr.bf16.mxu0 0
        %2906 = vmatmul.mubr.bf16.gmra.mxu0 %v2871
        %v2907 = vpop.f32.mrf.mxu0
        %v2908 = vadd.f32 0.0, %v2907
        %v2909 = vpop.f32.mrf.mxu0
        %v2910 = vadd.f32 0.0, %v2909
        %v2911 = vpop.f32.mrf.mxu0
        %v2912 = vpop.f32.mrf.mxu0
        %2913 = vdwg.mxu0
        %2914 = vmatprep.subr.bf16.mxu0 0
        %2915 = vmatpush1.bf16.msra.mxu0 0
        %2916 = vmatprep.subr.bf16.mxu0 0
        %2917 = vmatpush1.bf16.msra.mxu0 0
        %2918 = vmatprep.subr.bf16.mxu0 0
        %2919 = vmatpush1.bf16.msra.mxu0 0
        %2920 = vmatprep.subr.bf16.mxu0 0
        %2921 = vmatpush1.bf16.msra.mxu0 0
        %2922 = vmatprep.subr.bf16.mxu0 %v2853
        %2923 = vmatpush1.bf16.msra.mxu0 %v2852
        %2924 = vmatprep.subr.bf16.mxu0 %v2849
        %2925 = vmatpush1.bf16.msra.mxu0 %v2848
        %2926 = vmatprep.subr.bf16.mxu0 %v2845
        %2927 = vmatpush1.bf16.msra.mxu0 %v2844
        %2928 = vmatprep.subr.bf16.mxu0 %v2841
        %2929 = vmatpush1.bf16.msra.mxu0 %v2840
        %2930 = vmatprep.subr.bf16.mxu0 0
        %2931 = vmatpush2.bf16.msra.mxu0 0
        %2932 = vmatprep.subr.bf16.mxu0 0
        %2933 = vmatpush2.bf16.msra.mxu0 0
        %2934 = vmatprep.subr.bf16.mxu0 0
        %2935 = vmatpush2.bf16.msra.mxu0 0
        %2936 = vmatprep.subr.bf16.mxu0 0
        %2937 = vmatpush2.bf16.msra.mxu0 0
        %2938 = vmatprep.subr.bf16.mxu0 0
        %2939 = vmatpush2.bf16.msra.mxu0 0
        %2940 = vmatprep.subr.bf16.mxu0 0
        %2941 = vmatpush2.bf16.msra.mxu0 0
        %2942 = vmatprep.subr.bf16.mxu0 0
        %2943 = vmatpush2.bf16.msra.mxu0 0
        %2944 = vmatprep.subr.bf16.mxu0 0
        %2945 = vmatpush2.bf16.msra.mxu0 0
        %2946 = vmatprep.mubr.bf16.mxu0 0
        %2947 = vmatmul.mubr.bf16.gmra.mxu0 %v2871
        %v2948 = vpop.f32.mrf.mxu0
        %v2949 = vadd.f32 0.0, %v2948
        %v2950 = vpop.f32.mrf.mxu0
        %v2951 = vadd.f32 0.0, %v2950
        %v2952 = vpop.f32.mrf.mxu0
        %v2953 = vpop.f32.mrf.mxu0
        %2954 = vdwg.mxu0
        %v2959 = vcombine.low %v2908, %v2910
        %v2960 = vcombine.low %v2949, %v2951
        %v2962 = vunpack.c.l.s4 1966171168
        %v2963 = vunpack.c.0.s8 %v2962
        %v2964 = vlaneseq
        %v2965 = vshrl.u32 %v2964, 7
        %v2966 = vsub.s32 %v2963, %v2965
        %v2967 = vrot.slane %v2959, %v2966
        %v2969 = vunpack.c.l.s4 1966171168
        %v2970 = vunpack.c.0.s8 %v2969
        %v2971 = vlaneseq
        %v2972 = vshrl.u32 %v2971, 7
        %v2973 = vsub.s32 %v2970, %v2972
        %v2974 = vrot.slane %v2960, %v2973
        %v2975 = vcombine.low %v2967, %v2974
        %v2977 = vunpack.c.l.s4 1966171168
        %v2978 = vunpack.c.0.s8 %v2977
        %v2979 = vlaneseq
        %v2980 = vshrl.u32 %v2979, 7
        %v2981 = vsub.s32 %v2978, %v2980
        %v2982 = vrot.slane %v2975, %v2981
        %v2984 = vadd.f32 %v2770, %v2982
        %s2985 = scalar_lea.vmem [#allocation13], 256
        %v2986 = vld [vmem:[%s2985] sm:$0xff]
        %v2987 = vld [vmem:[%s2985 + $0x8] sm:$0xff]
        %v2988 = vld [vmem:[%s2985 + $0x10] sm:$0xff]
        %v2989 = vld [vmem:[%s2985 + $0x18] sm:$0xff]
        %v2990 = vld [vmem:[%s2985 + $0x20] sm:$0xff]
        %v2991 = vld [vmem:[%s2985 + $0x28] sm:$0xff]
        %v2992 = vld [vmem:[%s2985 + $0x30] sm:$0xff]
        %v2993 = vld [vmem:[%s2985 + $0x38] sm:$0xff]
        %v2994 = vld [vmem:[%s2985 + $0x40] sm:$0xff]
        %v2995 = vld [vmem:[%s2985 + $0x48] sm:$0xff]
        %v2996 = vld [vmem:[%s2985 + $0x50] sm:$0xff]
        %v2997 = vld [vmem:[%s2985 + $0x58] sm:$0xff]
        %v2998 = vld [vmem:[%s2985 + $0x60] sm:$0xff]
        %v2999 = vld [vmem:[%s2985 + $0x68] sm:$0xff]
        %v3000 = vld [vmem:[%s2985 + $0x70] sm:$0xff]
        %v3001 = vld [vmem:[%s2985 + $0x78] sm:$0xff]
        %v3003 = vrot.slane %v2557, 1
        %v3020 = vunpack.c.l.b16 %v2986
        %v3021 = vunpack.c.h.b16 %v2986
        %v3022 = vunpack.c.l.b16 %v2987
        %v3023 = vunpack.c.h.b16 %v2987
        %v3024 = vunpack.c.l.b16 %v2988
        %v3025 = vunpack.c.h.b16 %v2988
        %v3026 = vunpack.c.l.b16 %v2989
        %v3027 = vunpack.c.h.b16 %v2989
        %v3028 = vunpack.c.l.b16 %v2990
        %v3029 = vunpack.c.h.b16 %v2990
        %v3030 = vunpack.c.l.b16 %v2991
        %v3031 = vunpack.c.h.b16 %v2991
        %v3032 = vunpack.c.l.b16 %v2992
        %v3033 = vunpack.c.h.b16 %v2992
        %v3034 = vunpack.c.l.b16 %v2993
        %v3035 = vunpack.c.h.b16 %v2993
        %v3036 = vunpack.c.l.b16 %v2994
        %v3037 = vunpack.c.h.b16 %v2994
        %v3038 = vunpack.c.l.b16 %v2995
        %v3039 = vunpack.c.h.b16 %v2995
        %v3040 = vunpack.c.l.b16 %v2996
        %v3041 = vunpack.c.h.b16 %v2996
        %v3042 = vunpack.c.l.b16 %v2997
        %v3043 = vunpack.c.h.b16 %v2997
        %v3044 = vunpack.c.l.b16 %v2998
        %v3045 = vunpack.c.h.b16 %v2998
        %v3046 = vunpack.c.l.b16 %v2999
        %v3047 = vunpack.c.h.b16 %v2999
        %v3048 = vunpack.c.l.b16 %v3000
        %v3049 = vunpack.c.h.b16 %v3000
        %v3050 = vunpack.c.l.b16 %v3001
        %v3051 = vunpack.c.h.b16 %v3001
        %v3052 = vpack.c.b16 %v3024, %v3020
        %v3053 = vpack.c.b16 %v3025, %v3021
        %v3054 = vpack.c.b16 %v3026, %v3022
        %v3055 = vpack.c.b16 %v3027, %v3023
        %v3056 = vpack.c.b16 %v3032, %v3028
        %v3057 = vpack.c.b16 %v3033, %v3029
        %v3058 = vpack.c.b16 %v3034, %v3030
        %v3059 = vpack.c.b16 %v3035, %v3031
        %v3060 = vpack.c.b16 %v3040, %v3036
        %v3061 = vpack.c.b16 %v3041, %v3037
        %v3062 = vpack.c.b16 %v3042, %v3038
        %v3063 = vpack.c.b16 %v3043, %v3039
        %v3064 = vpack.c.b16 %v3048, %v3044
        %v3065 = vpack.c.b16 %v3049, %v3045
        %v3066 = vpack.c.b16 %v3050, %v3046
        %v3067 = vpack.c.b16 %v3051, %v3047
        %v3085 = vsel %vm2655, %v3003, 0
        %3087 = vmatprep.subr.bf16.mxu0 0
        %3088 = vmatpush1.bf16.msra.mxu0 0
        %3089 = vmatprep.subr.bf16.mxu0 0
        %3090 = vmatpush1.bf16.msra.mxu0 0
        %3091 = vmatprep.subr.bf16.mxu0 0
        %3092 = vmatpush1.bf16.msra.mxu0 0
        %3093 = vmatprep.subr.bf16.mxu0 0
        %3094 = vmatpush1.bf16.msra.mxu0 0
        %3095 = vmatprep.subr.bf16.mxu0 %v3065
        %3096 = vmatpush1.bf16.msra.mxu0 %v3064
        %3097 = vmatprep.subr.bf16.mxu0 %v3061
        %3098 = vmatpush1.bf16.msra.mxu0 %v3060
        %3099 = vmatprep.subr.bf16.mxu0 %v3057
        %3100 = vmatpush1.bf16.msra.mxu0 %v3056
        %3101 = vmatprep.subr.bf16.mxu0 %v3053
        %3102 = vmatpush1.bf16.msra.mxu0 %v3052
        %3103 = vmatprep.subr.bf16.mxu0 0
        %3104 = vmatpush2.bf16.msra.mxu0 0
        %3105 = vmatprep.subr.bf16.mxu0 0
        %3106 = vmatpush2.bf16.msra.mxu0 0
        %3107 = vmatprep.subr.bf16.mxu0 0
        %3108 = vmatpush2.bf16.msra.mxu0 0
        %3109 = vmatprep.subr.bf16.mxu0 0
        %3110 = vmatpush2.bf16.msra.mxu0 0
        %3111 = vmatprep.subr.bf16.mxu0 0
        %3112 = vmatpush2.bf16.msra.mxu0 0
        %3113 = vmatprep.subr.bf16.mxu0 0
        %3114 = vmatpush2.bf16.msra.mxu0 0
        %3115 = vmatprep.subr.bf16.mxu0 0
        %3116 = vmatpush2.bf16.msra.mxu0 0
        %3117 = vmatprep.subr.bf16.mxu0 0
        %3118 = vmatpush2.bf16.msra.mxu0 0
        %3119 = vmatprep.mubr.bf16.mxu0 0
        %3120 = vmatmul.mubr.bf16.gmra.mxu0 %v3085
        %v3121 = vpop.f32.mrf.mxu0
        %v3122 = vadd.f32 0.0, %v3121
        %v3123 = vpop.f32.mrf.mxu0
        %v3124 = vadd.f32 0.0, %v3123
        %v3125 = vpop.f32.mrf.mxu0
        %v3126 = vpop.f32.mrf.mxu0
        %3127 = vdwg.mxu0
        %3128 = vmatprep.subr.bf16.mxu0 0
        %3129 = vmatpush1.bf16.msra.mxu0 0
        %3130 = vmatprep.subr.bf16.mxu0 0
        %3131 = vmatpush1.bf16.msra.mxu0 0
        %3132 = vmatprep.subr.bf16.mxu0 0
        %3133 = vmatpush1.bf16.msra.mxu0 0
        %3134 = vmatprep.subr.bf16.mxu0 0
        %3135 = vmatpush1.bf16.msra.mxu0 0
        %3136 = vmatprep.subr.bf16.mxu0 %v3067
        %3137 = vmatpush1.bf16.msra.mxu0 %v3066
        %3138 = vmatprep.subr.bf16.mxu0 %v3063
        %3139 = vmatpush1.bf16.msra.mxu0 %v3062
        %3140 = vmatprep.subr.bf16.mxu0 %v3059
        %3141 = vmatpush1.bf16.msra.mxu0 %v3058
        %3142 = vmatprep.subr.bf16.mxu0 %v3055
        %3143 = vmatpush1.bf16.msra.mxu0 %v3054
        %3144 = vmatprep.subr.bf16.mxu0 0
        %3145 = vmatpush2.bf16.msra.mxu0 0
        %3146 = vmatprep.subr.bf16.mxu0 0
        %3147 = vmatpush2.bf16.msra.mxu0 0
        %3148 = vmatprep.subr.bf16.mxu0 0
        %3149 = vmatpush2.bf16.msra.mxu0 0
        %3150 = vmatprep.subr.bf16.mxu0 0
        %3151 = vmatpush2.bf16.msra.mxu0 0
        %3152 = vmatprep.subr.bf16.mxu0 0
        %3153 = vmatpush2.bf16.msra.mxu0 0
        %3154 = vmatprep.subr.bf16.mxu0 0
        %3155 = vmatpush2.bf16.msra.mxu0 0
        %3156 = vmatprep.subr.bf16.mxu0 0
        %3157 = vmatpush2.bf16.msra.mxu0 0
        %3158 = vmatprep.subr.bf16.mxu0 0
        %3159 = vmatpush2.bf16.msra.mxu0 0
        %3160 = vmatprep.mubr.bf16.mxu0 0
        %3161 = vmatmul.mubr.bf16.gmra.mxu0 %v3085
        %v3162 = vpop.f32.mrf.mxu0
        %v3163 = vadd.f32 0.0, %v3162
        %v3164 = vpop.f32.mrf.mxu0
        %v3165 = vadd.f32 0.0, %v3164
        %v3166 = vpop.f32.mrf.mxu0
        %v3167 = vpop.f32.mrf.mxu0
        %3168 = vdwg.mxu0
        %v3173 = vcombine.low %v3122, %v3124
        %v3174 = vcombine.low %v3163, %v3165
        %v3176 = vunpack.c.l.s4 1966171168
        %v3177 = vunpack.c.0.s8 %v3176
        %v3178 = vlaneseq
        %v3179 = vshrl.u32 %v3178, 7
        %v3180 = vsub.s32 %v3177, %v3179
        %v3181 = vrot.slane %v3173, %v3180
        %v3183 = vunpack.c.l.s4 1966171168
        %v3184 = vunpack.c.0.s8 %v3183
        %v3185 = vlaneseq
        %v3186 = vshrl.u32 %v3185, 7
        %v3187 = vsub.s32 %v3184, %v3186
        %v3188 = vrot.slane %v3174, %v3187
        %v3189 = vcombine.low %v3181, %v3188
        %v3191 = vunpack.c.l.s4 1966171168
        %v3192 = vunpack.c.0.s8 %v3191
        %v3193 = vlaneseq
        %v3194 = vshrl.u32 %v3193, 7
        %v3195 = vsub.s32 %v3192, %v3194
        %v3196 = vrot.slane %v3189, %v3195
        %v3198 = vadd.f32 %v2984, %v3196
        %s3199 = scalar_lea.vmem [#allocation13], 384
        %v3200 = vld [vmem:[%s3199] sm:$0xff]
        %v3201 = vld [vmem:[%s3199 + $0x8] sm:$0xff]
        %v3202 = vld [vmem:[%s3199 + $0x10] sm:$0xff]
        %v3203 = vld [vmem:[%s3199 + $0x18] sm:$0xff]
        %v3204 = vld [vmem:[%s3199 + $0x20] sm:$0xff]
        %v3205 = vld [vmem:[%s3199 + $0x28] sm:$0xff]
        %v3206 = vld [vmem:[%s3199 + $0x30] sm:$0xff]
        %v3207 = vld [vmem:[%s3199 + $0x38] sm:$0xff]
        %v3208 = vld [vmem:[%s3199 + $0x40] sm:$0xff]
        %v3209 = vld [vmem:[%s3199 + $0x48] sm:$0xff]
        %v3210 = vld [vmem:[%s3199 + $0x50] sm:$0xff]
        %v3211 = vld [vmem:[%s3199 + $0x58] sm:$0xff]
        %v3212 = vld [vmem:[%s3199 + $0x60] sm:$0xff]
        %v3213 = vld [vmem:[%s3199 + $0x68] sm:$0xff]
        %v3214 = vld [vmem:[%s3199 + $0x70] sm:$0xff]
        %v3215 = vld [vmem:[%s3199 + $0x78] sm:$0xff]
        %v3216 = vrot.slane %v2788, 1
        %v3233 = vunpack.c.l.b16 %v3200
        %v3234 = vunpack.c.h.b16 %v3200
        %v3235 = vunpack.c.l.b16 %v3201
        %v3236 = vunpack.c.h.b16 %v3201
        %v3237 = vunpack.c.l.b16 %v3202
        %v3238 = vunpack.c.h.b16 %v3202
        %v3239 = vunpack.c.l.b16 %v3203
        %v3240 = vunpack.c.h.b16 %v3203
        %v3241 = vunpack.c.l.b16 %v3204
        %v3242 = vunpack.c.h.b16 %v3204
        %v3243 = vunpack.c.l.b16 %v3205
        %v3244 = vunpack.c.h.b16 %v3205
        %v3245 = vunpack.c.l.b16 %v3206
        %v3246 = vunpack.c.h.b16 %v3206
        %v3247 = vunpack.c.l.b16 %v3207
        %v3248 = vunpack.c.h.b16 %v3207
        %v3249 = vunpack.c.l.b16 %v3208
        %v3250 = vunpack.c.h.b16 %v3208
        %v3251 = vunpack.c.l.b16 %v3209
        %v3252 = vunpack.c.h.b16 %v3209
        %v3253 = vunpack.c.l.b16 %v3210
        %v3254 = vunpack.c.h.b16 %v3210
        %v3255 = vunpack.c.l.b16 %v3211
        %v3256 = vunpack.c.h.b16 %v3211
        %v3257 = vunpack.c.l.b16 %v3212
        %v3258 = vunpack.c.h.b16 %v3212
        %v3259 = vunpack.c.l.b16 %v3213
        %v3260 = vunpack.c.h.b16 %v3213
        %v3261 = vunpack.c.l.b16 %v3214
        %v3262 = vunpack.c.h.b16 %v3214
        %v3263 = vunpack.c.l.b16 %v3215
        %v3264 = vunpack.c.h.b16 %v3215
        %v3265 = vpack.c.b16 %v3237, %v3233
        %v3266 = vpack.c.b16 %v3238, %v3234
        %v3267 = vpack.c.b16 %v3239, %v3235
        %v3268 = vpack.c.b16 %v3240, %v3236
        %v3269 = vpack.c.b16 %v3245, %v3241
        %v3270 = vpack.c.b16 %v3246, %v3242
        %v3271 = vpack.c.b16 %v3247, %v3243
        %v3272 = vpack.c.b16 %v3248, %v3244
        %v3273 = vpack.c.b16 %v3253, %v3249
        %v3274 = vpack.c.b16 %v3254, %v3250
        %v3275 = vpack.c.b16 %v3255, %v3251
        %v3276 = vpack.c.b16 %v3256, %v3252
        %v3277 = vpack.c.b16 %v3261, %v3257
        %v3278 = vpack.c.b16 %v3262, %v3258
        %v3279 = vpack.c.b16 %v3263, %v3259
        %v3280 = vpack.c.b16 %v3264, %v3260
        %v3298 = vsel %vm2655, %v3216, 0
        %3300 = vmatprep.subr.bf16.mxu0 0
        %3301 = vmatpush1.bf16.msra.mxu0 0
        %3302 = vmatprep.subr.bf16.mxu0 0
        %3303 = vmatpush1.bf16.msra.mxu0 0
        %3304 = vmatprep.subr.bf16.mxu0 0
        %3305 = vmatpush1.bf16.msra.mxu0 0
        %3306 = vmatprep.subr.bf16.mxu0 0
        %3307 = vmatpush1.bf16.msra.mxu0 0
        %3308 = vmatprep.subr.bf16.mxu0 %v3278
        %3309 = vmatpush1.bf16.msra.mxu0 %v3277
        %3310 = vmatprep.subr.bf16.mxu0 %v3274
        %3311 = vmatpush1.bf16.msra.mxu0 %v3273
        %3312 = vmatprep.subr.bf16.mxu0 %v3270
        %3313 = vmatpush1.bf16.msra.mxu0 %v3269
        %3314 = vmatprep.subr.bf16.mxu0 %v3266
        %3315 = vmatpush1.bf16.msra.mxu0 %v3265
        %3316 = vmatprep.subr.bf16.mxu0 0
        %3317 = vmatpush2.bf16.msra.mxu0 0
        %3318 = vmatprep.subr.bf16.mxu0 0
        %3319 = vmatpush2.bf16.msra.mxu0 0
        %3320 = vmatprep.subr.bf16.mxu0 0
        %3321 = vmatpush2.bf16.msra.mxu0 0
        %3322 = vmatprep.subr.bf16.mxu0 0
        %3323 = vmatpush2.bf16.msra.mxu0 0
        %3324 = vmatprep.subr.bf16.mxu0 0
        %3325 = vmatpush2.bf16.msra.mxu0 0
        %3326 = vmatprep.subr.bf16.mxu0 0
        %3327 = vmatpush2.bf16.msra.mxu0 0
        %3328 = vmatprep.subr.bf16.mxu0 0
        %3329 = vmatpush2.bf16.msra.mxu0 0
        %3330 = vmatprep.subr.bf16.mxu0 0
        %3331 = vmatpush2.bf16.msra.mxu0 0
        %3332 = vmatprep.mubr.bf16.mxu0 0
        %3333 = vmatmul.mubr.bf16.gmra.mxu0 %v3298
        %v3334 = vpop.f32.mrf.mxu0
        %v3335 = vadd.f32 0.0, %v3334
        %v3336 = vpop.f32.mrf.mxu0
        %v3337 = vadd.f32 0.0, %v3336
        %v3338 = vpop.f32.mrf.mxu0
        %v3339 = vpop.f32.mrf.mxu0
        %3340 = vdwg.mxu0
        %3341 = vmatprep.subr.bf16.mxu0 0
        %3342 = vmatpush1.bf16.msra.mxu0 0
        %3343 = vmatprep.subr.bf16.mxu0 0
        %3344 = vmatpush1.bf16.msra.mxu0 0
        %3345 = vmatprep.subr.bf16.mxu0 0
        %3346 = vmatpush1.bf16.msra.mxu0 0
        %3347 = vmatprep.subr.bf16.mxu0 0
        %3348 = vmatpush1.bf16.msra.mxu0 0
        %3349 = vmatprep.subr.bf16.mxu0 %v3280
        %3350 = vmatpush1.bf16.msra.mxu0 %v3279
        %3351 = vmatprep.subr.bf16.mxu0 %v3276
        %3352 = vmatpush1.bf16.msra.mxu0 %v3275
        %3353 = vmatprep.subr.bf16.mxu0 %v3272
        %3354 = vmatpush1.bf16.msra.mxu0 %v3271
        %3355 = vmatprep.subr.bf16.mxu0 %v3268
        %3356 = vmatpush1.bf16.msra.mxu0 %v3267
        %3357 = vmatprep.subr.bf16.mxu0 0
        %3358 = vmatpush2.bf16.msra.mxu0 0
        %3359 = vmatprep.subr.bf16.mxu0 0
        %3360 = vmatpush2.bf16.msra.mxu0 0
        %3361 = vmatprep.subr.bf16.mxu0 0
        %3362 = vmatpush2.bf16.msra.mxu0 0
        %3363 = vmatprep.subr.bf16.mxu0 0
        %3364 = vmatpush2.bf16.msra.mxu0 0
        %3365 = vmatprep.subr.bf16.mxu0 0
        %3366 = vmatpush2.bf16.msra.mxu0 0
        %3367 = vmatprep.subr.bf16.mxu0 0
        %3368 = vmatpush2.bf16.msra.mxu0 0
        %3369 = vmatprep.subr.bf16.mxu0 0
        %3370 = vmatpush2.bf16.msra.mxu0 0
        %3371 = vmatprep.subr.bf16.mxu0 0
        %3372 = vmatpush2.bf16.msra.mxu0 0
        %3373 = vmatprep.mubr.bf16.mxu0 0
        %3374 = vmatmul.mubr.bf16.gmra.mxu0 %v3298
        %v3375 = vpop.f32.mrf.mxu0
        %v3376 = vadd.f32 0.0, %v3375
        %v3377 = vpop.f32.mrf.mxu0
        %v3378 = vadd.f32 0.0, %v3377
        %v3379 = vpop.f32.mrf.mxu0
        %v3380 = vpop.f32.mrf.mxu0
        %3381 = vdwg.mxu0
        %v3386 = vcombine.low %v3335, %v3337
        %v3387 = vcombine.low %v3376, %v3378
        %v3389 = vunpack.c.l.s4 1966171168
        %v3390 = vunpack.c.0.s8 %v3389
        %v3391 = vlaneseq
        %v3392 = vshrl.u32 %v3391, 7
        %v3393 = vsub.s32 %v3390, %v3392
        %v3394 = vrot.slane %v3386, %v3393
        %v3396 = vunpack.c.l.s4 1966171168
        %v3397 = vunpack.c.0.s8 %v3396
        %v3398 = vlaneseq
        %v3399 = vshrl.u32 %v3398, 7
        %v3400 = vsub.s32 %v3397, %v3399
        %v3401 = vrot.slane %v3387, %v3400
        %v3402 = vcombine.low %v3394, %v3401
        %v3404 = vunpack.c.l.s4 1966171168
        %v3405 = vunpack.c.0.s8 %v3404
        %v3406 = vlaneseq
        %v3407 = vshrl.u32 %v3406, 7
        %v3408 = vsub.s32 %v3405, %v3407
        %v3409 = vrot.slane %v3402, %v3408
        %v3411 = vadd.f32 %v3198, %v3409
        %s3412 = scalar_lea.vmem [#allocation13], 512
        %v3413 = vld [vmem:[%s3412] sm:$0xff]
        %v3414 = vld [vmem:[%s3412 + $0x8] sm:$0xff]
        %v3415 = vld [vmem:[%s3412 + $0x10] sm:$0xff]
        %v3416 = vld [vmem:[%s3412 + $0x18] sm:$0xff]
        %v3417 = vld [vmem:[%s3412 + $0x20] sm:$0xff]
        %v3418 = vld [vmem:[%s3412 + $0x28] sm:$0xff]
        %v3419 = vld [vmem:[%s3412 + $0x30] sm:$0xff]
        %v3420 = vld [vmem:[%s3412 + $0x38] sm:$0xff]
        %v3421 = vld [vmem:[%s3412 + $0x40] sm:$0xff]
        %v3422 = vld [vmem:[%s3412 + $0x48] sm:$0xff]
        %v3423 = vld [vmem:[%s3412 + $0x50] sm:$0xff]
        %v3424 = vld [vmem:[%s3412 + $0x58] sm:$0xff]
        %v3425 = vld [vmem:[%s3412 + $0x60] sm:$0xff]
        %v3426 = vld [vmem:[%s3412 + $0x68] sm:$0xff]
        %v3427 = vld [vmem:[%s3412 + $0x70] sm:$0xff]
        %v3428 = vld [vmem:[%s3412 + $0x78] sm:$0xff]
        %v3429 = vrot.slane %v2557, 2
        %v3446 = vunpack.c.l.b16 %v3413
        %v3447 = vunpack.c.h.b16 %v3413
        %v3448 = vunpack.c.l.b16 %v3414
        %v3449 = vunpack.c.h.b16 %v3414
        %v3450 = vunpack.c.l.b16 %v3415
        %v3451 = vunpack.c.h.b16 %v3415
        %v3452 = vunpack.c.l.b16 %v3416
        %v3453 = vunpack.c.h.b16 %v3416
        %v3454 = vunpack.c.l.b16 %v3417
        %v3455 = vunpack.c.h.b16 %v3417
        %v3456 = vunpack.c.l.b16 %v3418
        %v3457 = vunpack.c.h.b16 %v3418
        %v3458 = vunpack.c.l.b16 %v3419
        %v3459 = vunpack.c.h.b16 %v3419
        %v3460 = vunpack.c.l.b16 %v3420
        %v3461 = vunpack.c.h.b16 %v3420
        %v3462 = vunpack.c.l.b16 %v3421
        %v3463 = vunpack.c.h.b16 %v3421
        %v3464 = vunpack.c.l.b16 %v3422
        %v3465 = vunpack.c.h.b16 %v3422
        %v3466 = vunpack.c.l.b16 %v3423
        %v3467 = vunpack.c.h.b16 %v3423
        %v3468 = vunpack.c.l.b16 %v3424
        %v3469 = vunpack.c.h.b16 %v3424
        %v3470 = vunpack.c.l.b16 %v3425
        %v3471 = vunpack.c.h.b16 %v3425
        %v3472 = vunpack.c.l.b16 %v3426
        %v3473 = vunpack.c.h.b16 %v3426
        %v3474 = vunpack.c.l.b16 %v3427
        %v3475 = vunpack.c.h.b16 %v3427
        %v3476 = vunpack.c.l.b16 %v3428
        %v3477 = vunpack.c.h.b16 %v3428
        %v3478 = vpack.c.b16 %v3450, %v3446
        %v3479 = vpack.c.b16 %v3451, %v3447
        %v3480 = vpack.c.b16 %v3452, %v3448
        %v3481 = vpack.c.b16 %v3453, %v3449
        %v3482 = vpack.c.b16 %v3458, %v3454
        %v3483 = vpack.c.b16 %v3459, %v3455
        %v3484 = vpack.c.b16 %v3460, %v3456
        %v3485 = vpack.c.b16 %v3461, %v3457
        %v3486 = vpack.c.b16 %v3466, %v3462
        %v3487 = vpack.c.b16 %v3467, %v3463
        %v3488 = vpack.c.b16 %v3468, %v3464
        %v3489 = vpack.c.b16 %v3469, %v3465
        %v3490 = vpack.c.b16 %v3474, %v3470
        %v3491 = vpack.c.b16 %v3475, %v3471
        %v3492 = vpack.c.b16 %v3476, %v3472
        %v3493 = vpack.c.b16 %v3477, %v3473
        %v3511 = vsel %vm2655, %v3429, 0
        %3513 = vmatprep.subr.bf16.mxu0 0
        %3514 = vmatpush1.bf16.msra.mxu0 0
        %3515 = vmatprep.subr.bf16.mxu0 0
        %3516 = vmatpush1.bf16.msra.mxu0 0
        %3517 = vmatprep.subr.bf16.mxu0 0
        %3518 = vmatpush1.bf16.msra.mxu0 0
        %3519 = vmatprep.subr.bf16.mxu0 0
        %3520 = vmatpush1.bf16.msra.mxu0 0
        %3521 = vmatprep.subr.bf16.mxu0 %v3491
        %3522 = vmatpush1.bf16.msra.mxu0 %v3490
        %3523 = vmatprep.subr.bf16.mxu0 %v3487
        %3524 = vmatpush1.bf16.msra.mxu0 %v3486
        %3525 = vmatprep.subr.bf16.mxu0 %v3483
        %3526 = vmatpush1.bf16.msra.mxu0 %v3482
        %3527 = vmatprep.subr.bf16.mxu0 %v3479
        %3528 = vmatpush1.bf16.msra.mxu0 %v3478
        %3529 = vmatprep.subr.bf16.mxu0 0
        %3530 = vmatpush2.bf16.msra.mxu0 0
        %3531 = vmatprep.subr.bf16.mxu0 0
        %3532 = vmatpush2.bf16.msra.mxu0 0
        %3533 = vmatprep.subr.bf16.mxu0 0
        %3534 = vmatpush2.bf16.msra.mxu0 0
        %3535 = vmatprep.subr.bf16.mxu0 0
        %3536 = vmatpush2.bf16.msra.mxu0 0
        %3537 = vmatprep.subr.bf16.mxu0 0
        %3538 = vmatpush2.bf16.msra.mxu0 0
        %3539 = vmatprep.subr.bf16.mxu0 0
        %3540 = vmatpush2.bf16.msra.mxu0 0
        %3541 = vmatprep.subr.bf16.mxu0 0
        %3542 = vmatpush2.bf16.msra.mxu0 0
        %3543 = vmatprep.subr.bf16.mxu0 0
        %3544 = vmatpush2.bf16.msra.mxu0 0
        %3545 = vmatprep.mubr.bf16.mxu0 0
        %3546 = vmatmul.mubr.bf16.gmra.mxu0 %v3511
        %v3547 = vpop.f32.mrf.mxu0
        %v3548 = vadd.f32 0.0, %v3547
        %v3549 = vpop.f32.mrf.mxu0
        %v3550 = vadd.f32 0.0, %v3549
        %v3551 = vpop.f32.mrf.mxu0
        %v3552 = vpop.f32.mrf.mxu0
        %3553 = vdwg.mxu0
        %3554 = vmatprep.subr.bf16.mxu0 0
        %3555 = vmatpush1.bf16.msra.mxu0 0
        %3556 = vmatprep.subr.bf16.mxu0 0
        %3557 = vmatpush1.bf16.msra.mxu0 0
        %3558 = vmatprep.subr.bf16.mxu0 0
        %3559 = vmatpush1.bf16.msra.mxu0 0
        %3560 = vmatprep.subr.bf16.mxu0 0
        %3561 = vmatpush1.bf16.msra.mxu0 0
        %3562 = vmatprep.subr.bf16.mxu0 %v3493
        %3563 = vmatpush1.bf16.msra.mxu0 %v3492
        %3564 = vmatprep.subr.bf16.mxu0 %v3489
        %3565 = vmatpush1.bf16.msra.mxu0 %v3488
        %3566 = vmatprep.subr.bf16.mxu0 %v3485
        %3567 = vmatpush1.bf16.msra.mxu0 %v3484
        %3568 = vmatprep.subr.bf16.mxu0 %v3481
        %3569 = vmatpush1.bf16.msra.mxu0 %v3480
        %3570 = vmatprep.subr.bf16.mxu0 0
        %3571 = vmatpush2.bf16.msra.mxu0 0
        %3572 = vmatprep.subr.bf16.mxu0 0
        %3573 = vmatpush2.bf16.msra.mxu0 0
        %3574 = vmatprep.subr.bf16.mxu0 0
        %3575 = vmatpush2.bf16.msra.mxu0 0
        %3576 = vmatprep.subr.bf16.mxu0 0
        %3577 = vmatpush2.bf16.msra.mxu0 0
        %3578 = vmatprep.subr.bf16.mxu0 0
        %3579 = vmatpush2.bf16.msra.mxu0 0
        %3580 = vmatprep.subr.bf16.mxu0 0
        %3581 = vmatpush2.bf16.msra.mxu0 0
        %3582 = vmatprep.subr.bf16.mxu0 0
        %3583 = vmatpush2.bf16.msra.mxu0 0
        %3584 = vmatprep.subr.bf16.mxu0 0
        %3585 = vmatpush2.bf16.msra.mxu0 0
        %3586 = vmatprep.mubr.bf16.mxu0 0
        %3587 = vmatmul.mubr.bf16.gmra.mxu0 %v3511
        %v3588 = vpop.f32.mrf.mxu0
        %v3589 = vadd.f32 0.0, %v3588
        %v3590 = vpop.f32.mrf.mxu0
        %v3591 = vadd.f32 0.0, %v3590
        %v3592 = vpop.f32.mrf.mxu0
        %v3593 = vpop.f32.mrf.mxu0
        %3594 = vdwg.mxu0
        %v3599 = vcombine.low %v3548, %v3550
        %v3600 = vcombine.low %v3589, %v3591
        %v3602 = vunpack.c.l.s4 1966171168
        %v3603 = vunpack.c.0.s8 %v3602
        %v3604 = vlaneseq
        %v3605 = vshrl.u32 %v3604, 7
        %v3606 = vsub.s32 %v3603, %v3605
        %v3607 = vrot.slane %v3599, %v3606
        %v3609 = vunpack.c.l.s4 1966171168
        %v3610 = vunpack.c.0.s8 %v3609
        %v3611 = vlaneseq
        %v3612 = vshrl.u32 %v3611, 7
        %v3613 = vsub.s32 %v3610, %v3612
        %v3614 = vrot.slane %v3600, %v3613
        %v3615 = vcombine.low %v3607, %v3614
        %v3617 = vunpack.c.l.s4 1966171168
        %v3618 = vunpack.c.0.s8 %v3617
        %v3619 = vlaneseq
        %v3620 = vshrl.u32 %v3619, 7
        %v3621 = vsub.s32 %v3618, %v3620
        %v3622 = vrot.slane %v3615, %v3621
        %v3624 = vadd.f32 %v3411, %v3622
        %s3625 = scalar_lea.vmem [#allocation13], 640
        %v3626 = vld [vmem:[%s3625] sm:$0xff]
        %v3627 = vld [vmem:[%s3625 + $0x8] sm:$0xff]
        %v3628 = vld [vmem:[%s3625 + $0x10] sm:$0xff]
        %v3629 = vld [vmem:[%s3625 + $0x18] sm:$0xff]
        %v3630 = vld [vmem:[%s3625 + $0x20] sm:$0xff]
        %v3631 = vld [vmem:[%s3625 + $0x28] sm:$0xff]
        %v3632 = vld [vmem:[%s3625 + $0x30] sm:$0xff]
        %v3633 = vld [vmem:[%s3625 + $0x38] sm:$0xff]
        %v3634 = vld [vmem:[%s3625 + $0x40] sm:$0xff]
        %v3635 = vld [vmem:[%s3625 + $0x48] sm:$0xff]
        %v3636 = vld [vmem:[%s3625 + $0x50] sm:$0xff]
        %v3637 = vld [vmem:[%s3625 + $0x58] sm:$0xff]
        %v3638 = vld [vmem:[%s3625 + $0x60] sm:$0xff]
        %v3639 = vld [vmem:[%s3625 + $0x68] sm:$0xff]
        %v3640 = vld [vmem:[%s3625 + $0x70] sm:$0xff]
        %v3641 = vld [vmem:[%s3625 + $0x78] sm:$0xff]
        %v3642 = vrot.slane %v2788, 2
        %v3659 = vunpack.c.l.b16 %v3626
        %v3660 = vunpack.c.h.b16 %v3626
        %v3661 = vunpack.c.l.b16 %v3627
        %v3662 = vunpack.c.h.b16 %v3627
        %v3663 = vunpack.c.l.b16 %v3628
        %v3664 = vunpack.c.h.b16 %v3628
        %v3665 = vunpack.c.l.b16 %v3629
        %v3666 = vunpack.c.h.b16 %v3629
        %v3667 = vunpack.c.l.b16 %v3630
        %v3668 = vunpack.c.h.b16 %v3630
        %v3669 = vunpack.c.l.b16 %v3631
        %v3670 = vunpack.c.h.b16 %v3631
        %v3671 = vunpack.c.l.b16 %v3632
        %v3672 = vunpack.c.h.b16 %v3632
        %v3673 = vunpack.c.l.b16 %v3633
        %v3674 = vunpack.c.h.b16 %v3633
        %v3675 = vunpack.c.l.b16 %v3634
        %v3676 = vunpack.c.h.b16 %v3634
        %v3677 = vunpack.c.l.b16 %v3635
        %v3678 = vunpack.c.h.b16 %v3635
        %v3679 = vunpack.c.l.b16 %v3636
        %v3680 = vunpack.c.h.b16 %v3636
        %v3681 = vunpack.c.l.b16 %v3637
        %v3682 = vunpack.c.h.b16 %v3637
        %v3683 = vunpack.c.l.b16 %v3638
        %v3684 = vunpack.c.h.b16 %v3638
        %v3685 = vunpack.c.l.b16 %v3639
        %v3686 = vunpack.c.h.b16 %v3639
        %v3687 = vunpack.c.l.b16 %v3640
        %v3688 = vunpack.c.h.b16 %v3640
        %v3689 = vunpack.c.l.b16 %v3641
        %v3690 = vunpack.c.h.b16 %v3641
        %v3691 = vpack.c.b16 %v3663, %v3659
        %v3692 = vpack.c.b16 %v3664, %v3660
        %v3693 = vpack.c.b16 %v3665, %v3661
        %v3694 = vpack.c.b16 %v3666, %v3662
        %v3695 = vpack.c.b16 %v3671, %v3667
        %v3696 = vpack.c.b16 %v3672, %v3668
        %v3697 = vpack.c.b16 %v3673, %v3669
        %v3698 = vpack.c.b16 %v3674, %v3670
        %v3699 = vpack.c.b16 %v3679, %v3675
        %v3700 = vpack.c.b16 %v3680, %v3676
        %v3701 = vpack.c.b16 %v3681, %v3677
        %v3702 = vpack.c.b16 %v3682, %v3678
        %v3703 = vpack.c.b16 %v3687, %v3683
        %v3704 = vpack.c.b16 %v3688, %v3684
        %v3705 = vpack.c.b16 %v3689, %v3685
        %v3706 = vpack.c.b16 %v3690, %v3686
        %v3724 = vsel %vm2655, %v3642, 0
        %3726 = vmatprep.subr.bf16.mxu0 0
        %3727 = vmatpush1.bf16.msra.mxu0 0
        %3728 = vmatprep.subr.bf16.mxu0 0
        %3729 = vmatpush1.bf16.msra.mxu0 0
        %3730 = vmatprep.subr.bf16.mxu0 0
        %3731 = vmatpush1.bf16.msra.mxu0 0
        %3732 = vmatprep.subr.bf16.mxu0 0
        %3733 = vmatpush1.bf16.msra.mxu0 0
        %3734 = vmatprep.subr.bf16.mxu0 %v3704
        %3735 = vmatpush1.bf16.msra.mxu0 %v3703
        %3736 = vmatprep.subr.bf16.mxu0 %v3700
        %3737 = vmatpush1.bf16.msra.mxu0 %v3699
        %3738 = vmatprep.subr.bf16.mxu0 %v3696
        %3739 = vmatpush1.bf16.msra.mxu0 %v3695
        %3740 = vmatprep.subr.bf16.mxu0 %v3692
        %3741 = vmatpush1.bf16.msra.mxu0 %v3691
        %3742 = vmatprep.subr.bf16.mxu0 0
        %3743 = vmatpush2.bf16.msra.mxu0 0
        %3744 = vmatprep.subr.bf16.mxu0 0
        %3745 = vmatpush2.bf16.msra.mxu0 0
        %3746 = vmatprep.subr.bf16.mxu0 0
        %3747 = vmatpush2.bf16.msra.mxu0 0
        %3748 = vmatprep.subr.bf16.mxu0 0
        %3749 = vmatpush2.bf16.msra.mxu0 0
        %3750 = vmatprep.subr.bf16.mxu0 0
        %3751 = vmatpush2.bf16.msra.mxu0 0
        %3752 = vmatprep.subr.bf16.mxu0 0
        %3753 = vmatpush2.bf16.msra.mxu0 0
        %3754 = vmatprep.subr.bf16.mxu0 0
        %3755 = vmatpush2.bf16.msra.mxu0 0
        %3756 = vmatprep.subr.bf16.mxu0 0
        %3757 = vmatpush2.bf16.msra.mxu0 0
        %3758 = vmatprep.mubr.bf16.mxu0 0
        %3759 = vmatmul.mubr.bf16.gmra.mxu0 %v3724
        %v3760 = vpop.f32.mrf.mxu0
        %v3761 = vadd.f32 0.0, %v3760
        %v3762 = vpop.f32.mrf.mxu0
        %v3763 = vadd.f32 0.0, %v3762
        %v3764 = vpop.f32.mrf.mxu0
        %v3765 = vpop.f32.mrf.mxu0
        %3766 = vdwg.mxu0
        %3767 = vmatprep.subr.bf16.mxu0 0
        %3768 = vmatpush1.bf16.msra.mxu0 0
        %3769 = vmatprep.subr.bf16.mxu0 0
        %3770 = vmatpush1.bf16.msra.mxu0 0
        %3771 = vmatprep.subr.bf16.mxu0 0
        %3772 = vmatpush1.bf16.msra.mxu0 0
        %3773 = vmatprep.subr.bf16.mxu0 0
        %3774 = vmatpush1.bf16.msra.mxu0 0
        %3775 = vmatprep.subr.bf16.mxu0 %v3706
        %3776 = vmatpush1.bf16.msra.mxu0 %v3705
        %3777 = vmatprep.subr.bf16.mxu0 %v3702
        %3778 = vmatpush1.bf16.msra.mxu0 %v3701
        %3779 = vmatprep.subr.bf16.mxu0 %v3698
        %3780 = vmatpush1.bf16.msra.mxu0 %v3697
        %3781 = vmatprep.subr.bf16.mxu0 %v3694
        %3782 = vmatpush1.bf16.msra.mxu0 %v3693
        %3783 = vmatprep.subr.bf16.mxu0 0
        %3784 = vmatpush2.bf16.msra.mxu0 0
        %3785 = vmatprep.subr.bf16.mxu0 0
        %3786 = vmatpush2.bf16.msra.mxu0 0
        %3787 = vmatprep.subr.bf16.mxu0 0
        %3788 = vmatpush2.bf16.msra.mxu0 0
        %3789 = vmatprep.subr.bf16.mxu0 0
        %3790 = vmatpush2.bf16.msra.mxu0 0
        %3791 = vmatprep.subr.bf16.mxu0 0
        %3792 = vmatpush2.bf16.msra.mxu0 0
        %3793 = vmatprep.subr.bf16.mxu0 0
        %3794 = vmatpush2.bf16.msra.mxu0 0
        %3795 = vmatprep.subr.bf16.mxu0 0
        %3796 = vmatpush2.bf16.msra.mxu0 0
        %3797 = vmatprep.subr.bf16.mxu0 0
        %3798 = vmatpush2.bf16.msra.mxu0 0
        %3799 = vmatprep.mubr.bf16.mxu0 0
        %3800 = vmatmul.mubr.bf16.gmra.mxu0 %v3724
        %v3801 = vpop.f32.mrf.mxu0
        %v3802 = vadd.f32 0.0, %v3801
        %v3803 = vpop.f32.mrf.mxu0
        %v3804 = vadd.f32 0.0, %v3803
        %v3805 = vpop.f32.mrf.mxu0
        %v3806 = vpop.f32.mrf.mxu0
        %3807 = vdwg.mxu0
        %v3812 = vcombine.low %v3761, %v3763
        %v3813 = vcombine.low %v3802, %v3804
        %v3815 = vunpack.c.l.s4 1966171168
        %v3816 = vunpack.c.0.s8 %v3815
        %v3817 = vlaneseq
        %v3818 = vshrl.u32 %v3817, 7
        %v3819 = vsub.s32 %v3816, %v3818
        %v3820 = vrot.slane %v3812, %v3819
        %v3822 = vunpack.c.l.s4 1966171168
        %v3823 = vunpack.c.0.s8 %v3822
        %v3824 = vlaneseq
        %v3825 = vshrl.u32 %v3824, 7
        %v3826 = vsub.s32 %v3823, %v3825
        %v3827 = vrot.slane %v3813, %v3826
        %v3828 = vcombine.low %v3820, %v3827
        %v3830 = vunpack.c.l.s4 1966171168
        %v3831 = vunpack.c.0.s8 %v3830
        %v3832 = vlaneseq
        %v3833 = vshrl.u32 %v3832, 7
        %v3834 = vsub.s32 %v3831, %v3833
        %v3835 = vrot.slane %v3828, %v3834
        %v3837 = vadd.f32 %v3624, %v3835
        %s3838 = scalar_lea.vmem [#allocation13], 768
        %v3839 = vld [vmem:[%s3838] sm:$0xff]
        %v3840 = vld [vmem:[%s3838 + $0x8] sm:$0xff]
        %v3841 = vld [vmem:[%s3838 + $0x10] sm:$0xff]
        %v3842 = vld [vmem:[%s3838 + $0x18] sm:$0xff]
        %v3843 = vld [vmem:[%s3838 + $0x20] sm:$0xff]
        %v3844 = vld [vmem:[%s3838 + $0x28] sm:$0xff]
        %v3845 = vld [vmem:[%s3838 + $0x30] sm:$0xff]
        %v3846 = vld [vmem:[%s3838 + $0x38] sm:$0xff]
        %v3847 = vld [vmem:[%s3838 + $0x40] sm:$0xff]
        %v3848 = vld [vmem:[%s3838 + $0x48] sm:$0xff]
        %v3849 = vld [vmem:[%s3838 + $0x50] sm:$0xff]
        %v3850 = vld [vmem:[%s3838 + $0x58] sm:$0xff]
        %v3851 = vld [vmem:[%s3838 + $0x60] sm:$0xff]
        %v3852 = vld [vmem:[%s3838 + $0x68] sm:$0xff]
        %v3853 = vld [vmem:[%s3838 + $0x70] sm:$0xff]
        %v3854 = vld [vmem:[%s3838 + $0x78] sm:$0xff]
        %v3855 = vrot.slane %v2557, 3
        %v3872 = vunpack.c.l.b16 %v3839
        %v3873 = vunpack.c.h.b16 %v3839
        %v3874 = vunpack.c.l.b16 %v3840
        %v3875 = vunpack.c.h.b16 %v3840
        %v3876 = vunpack.c.l.b16 %v3841
        %v3877 = vunpack.c.h.b16 %v3841
        %v3878 = vunpack.c.l.b16 %v3842
        %v3879 = vunpack.c.h.b16 %v3842
        %v3880 = vunpack.c.l.b16 %v3843
        %v3881 = vunpack.c.h.b16 %v3843
        %v3882 = vunpack.c.l.b16 %v3844
        %v3883 = vunpack.c.h.b16 %v3844
        %v3884 = vunpack.c.l.b16 %v3845
        %v3885 = vunpack.c.h.b16 %v3845
        %v3886 = vunpack.c.l.b16 %v3846
        %v3887 = vunpack.c.h.b16 %v3846
        %v3888 = vunpack.c.l.b16 %v3847
        %v3889 = vunpack.c.h.b16 %v3847
        %v3890 = vunpack.c.l.b16 %v3848
        %v3891 = vunpack.c.h.b16 %v3848
        %v3892 = vunpack.c.l.b16 %v3849
        %v3893 = vunpack.c.h.b16 %v3849
        %v3894 = vunpack.c.l.b16 %v3850
        %v3895 = vunpack.c.h.b16 %v3850
        %v3896 = vunpack.c.l.b16 %v3851
        %v3897 = vunpack.c.h.b16 %v3851
        %v3898 = vunpack.c.l.b16 %v3852
        %v3899 = vunpack.c.h.b16 %v3852
        %v3900 = vunpack.c.l.b16 %v3853
        %v3901 = vunpack.c.h.b16 %v3853
        %v3902 = vunpack.c.l.b16 %v3854
        %v3903 = vunpack.c.h.b16 %v3854
        %v3904 = vpack.c.b16 %v3876, %v3872
        %v3905 = vpack.c.b16 %v3877, %v3873
        %v3906 = vpack.c.b16 %v3878, %v3874
        %v3907 = vpack.c.b16 %v3879, %v3875
        %v3908 = vpack.c.b16 %v3884, %v3880
        %v3909 = vpack.c.b16 %v3885, %v3881
        %v3910 = vpack.c.b16 %v3886, %v3882
        %v3911 = vpack.c.b16 %v3887, %v3883
        %v3912 = vpack.c.b16 %v3892, %v3888
        %v3913 = vpack.c.b16 %v3893, %v3889
        %v3914 = vpack.c.b16 %v3894, %v3890
        %v3915 = vpack.c.b16 %v3895, %v3891
        %v3916 = vpack.c.b16 %v3900, %v3896
        %v3917 = vpack.c.b16 %v3901, %v3897
        %v3918 = vpack.c.b16 %v3902, %v3898
        %v3919 = vpack.c.b16 %v3903, %v3899
        %v3937 = vsel %vm2655, %v3855, 0
        %3939 = vmatprep.subr.bf16.mxu0 0
        %3940 = vmatpush1.bf16.msra.mxu0 0
        %3941 = vmatprep.subr.bf16.mxu0 0
        %3942 = vmatpush1.bf16.msra.mxu0 0
        %3943 = vmatprep.subr.bf16.mxu0 0
        %3944 = vmatpush1.bf16.msra.mxu0 0
        %3945 = vmatprep.subr.bf16.mxu0 0
        %3946 = vmatpush1.bf16.msra.mxu0 0
        %3947 = vmatprep.subr.bf16.mxu0 %v3917
        %3948 = vmatpush1.bf16.msra.mxu0 %v3916
        %3949 = vmatprep.subr.bf16.mxu0 %v3913
        %3950 = vmatpush1.bf16.msra.mxu0 %v3912
        %3951 = vmatprep.subr.bf16.mxu0 %v3909
        %3952 = vmatpush1.bf16.msra.mxu0 %v3908
        %3953 = vmatprep.subr.bf16.mxu0 %v3905
        %3954 = vmatpush1.bf16.msra.mxu0 %v3904
        %3955 = vmatprep.subr.bf16.mxu0 0
        %3956 = vmatpush2.bf16.msra.mxu0 0
        %3957 = vmatprep.subr.bf16.mxu0 0
        %3958 = vmatpush2.bf16.msra.mxu0 0
        %3959 = vmatprep.subr.bf16.mxu0 0
        %3960 = vmatpush2.bf16.msra.mxu0 0
        %3961 = vmatprep.subr.bf16.mxu0 0
        %3962 = vmatpush2.bf16.msra.mxu0 0
        %3963 = vmatprep.subr.bf16.mxu0 0
        %3964 = vmatpush2.bf16.msra.mxu0 0
        %3965 = vmatprep.subr.bf16.mxu0 0
        %3966 = vmatpush2.bf16.msra.mxu0 0
        %3967 = vmatprep.subr.bf16.mxu0 0
        %3968 = vmatpush2.bf16.msra.mxu0 0
        %3969 = vmatprep.subr.bf16.mxu0 0
        %3970 = vmatpush2.bf16.msra.mxu0 0
        %3971 = vmatprep.mubr.bf16.mxu0 0
        %3972 = vmatmul.mubr.bf16.gmra.mxu0 %v3937
        %v3973 = vpop.f32.mrf.mxu0
        %v3974 = vadd.f32 0.0, %v3973
        %v3975 = vpop.f32.mrf.mxu0
        %v3976 = vadd.f32 0.0, %v3975
        %v3977 = vpop.f32.mrf.mxu0
        %v3978 = vpop.f32.mrf.mxu0
        %3979 = vdwg.mxu0
        %3980 = vmatprep.subr.bf16.mxu0 0
        %3981 = vmatpush1.bf16.msra.mxu0 0
        %3982 = vmatprep.subr.bf16.mxu0 0
        %3983 = vmatpush1.bf16.msra.mxu0 0
        %3984 = vmatprep.subr.bf16.mxu0 0
        %3985 = vmatpush1.bf16.msra.mxu0 0
        %3986 = vmatprep.subr.bf16.mxu0 0
        %3987 = vmatpush1.bf16.msra.mxu0 0
        %3988 = vmatprep.subr.bf16.mxu0 %v3919
        %3989 = vmatpush1.bf16.msra.mxu0 %v3918
        %3990 = vmatprep.subr.bf16.mxu0 %v3915
        %3991 = vmatpush1.bf16.msra.mxu0 %v3914
        %3992 = vmatprep.subr.bf16.mxu0 %v3911
        %3993 = vmatpush1.bf16.msra.mxu0 %v3910
        %3994 = vmatprep.subr.bf16.mxu0 %v3907
        %3995 = vmatpush1.bf16.msra.mxu0 %v3906
        %3996 = vmatprep.subr.bf16.mxu0 0
        %3997 = vmatpush2.bf16.msra.mxu0 0
        %3998 = vmatprep.subr.bf16.mxu0 0
        %3999 = vmatpush2.bf16.msra.mxu0 0
        %4000 = vmatprep.subr.bf16.mxu0 0
        %4001 = vmatpush2.bf16.msra.mxu0 0
        %4002 = vmatprep.subr.bf16.mxu0 0
        %4003 = vmatpush2.bf16.msra.mxu0 0
        %4004 = vmatprep.subr.bf16.mxu0 0
        %4005 = vmatpush2.bf16.msra.mxu0 0
        %4006 = vmatprep.subr.bf16.mxu0 0
        %4007 = vmatpush2.bf16.msra.mxu0 0
        %4008 = vmatprep.subr.bf16.mxu0 0
        %4009 = vmatpush2.bf16.msra.mxu0 0
        %4010 = vmatprep.subr.bf16.mxu0 0
        %4011 = vmatpush2.bf16.msra.mxu0 0
        %4012 = vmatprep.mubr.bf16.mxu0 0
        %4013 = vmatmul.mubr.bf16.gmra.mxu0 %v3937
        %v4014 = vpop.f32.mrf.mxu0
        %v4015 = vadd.f32 0.0, %v4014
        %v4016 = vpop.f32.mrf.mxu0
        %v4017 = vadd.f32 0.0, %v4016
        %v4018 = vpop.f32.mrf.mxu0
        %v4019 = vpop.f32.mrf.mxu0
        %4020 = vdwg.mxu0
        %v4025 = vcombine.low %v3974, %v3976
        %v4026 = vcombine.low %v4015, %v4017
        %v4028 = vunpack.c.l.s4 1966171168
        %v4029 = vunpack.c.0.s8 %v4028
        %v4030 = vlaneseq
        %v4031 = vshrl.u32 %v4030, 7
        %v4032 = vsub.s32 %v4029, %v4031
        %v4033 = vrot.slane %v4025, %v4032
        %v4035 = vunpack.c.l.s4 1966171168
        %v4036 = vunpack.c.0.s8 %v4035
        %v4037 = vlaneseq
        %v4038 = vshrl.u32 %v4037, 7
        %v4039 = vsub.s32 %v4036, %v4038
        %v4040 = vrot.slane %v4026, %v4039
        %v4041 = vcombine.low %v4033, %v4040
        %v4043 = vunpack.c.l.s4 1966171168
        %v4044 = vunpack.c.0.s8 %v4043
        %v4045 = vlaneseq
        %v4046 = vshrl.u32 %v4045, 7
        %v4047 = vsub.s32 %v4044, %v4046
        %v4048 = vrot.slane %v4041, %v4047
        %v4050 = vadd.f32 %v3837, %v4048
        %s4051 = scalar_lea.vmem [#allocation13], 896
        %v4052 = vld [vmem:[%s4051] sm:$0xff]
        %v4053 = vld [vmem:[%s4051 + $0x8] sm:$0xff]
        %v4054 = vld [vmem:[%s4051 + $0x10] sm:$0xff]
        %v4055 = vld [vmem:[%s4051 + $0x18] sm:$0xff]
        %v4056 = vld [vmem:[%s4051 + $0x20] sm:$0xff]
        %v4057 = vld [vmem:[%s4051 + $0x28] sm:$0xff]
        %v4058 = vld [vmem:[%s4051 + $0x30] sm:$0xff]
        %v4059 = vld [vmem:[%s4051 + $0x38] sm:$0xff]
        %v4060 = vld [vmem:[%s4051 + $0x40] sm:$0xff]
        %v4061 = vld [vmem:[%s4051 + $0x48] sm:$0xff]
        %v4062 = vld [vmem:[%s4051 + $0x50] sm:$0xff]
        %v4063 = vld [vmem:[%s4051 + $0x58] sm:$0xff]
        %v4064 = vld [vmem:[%s4051 + $0x60] sm:$0xff]
        %v4065 = vld [vmem:[%s4051 + $0x68] sm:$0xff]
        %v4066 = vld [vmem:[%s4051 + $0x70] sm:$0xff]
        %v4067 = vld [vmem:[%s4051 + $0x78] sm:$0xff]
        %v4068 = vrot.slane %v2788, 3
        %v4085 = vunpack.c.l.b16 %v4052
        %v4086 = vunpack.c.h.b16 %v4052
        %v4087 = vunpack.c.l.b16 %v4053
        %v4088 = vunpack.c.h.b16 %v4053
        %v4089 = vunpack.c.l.b16 %v4054
        %v4090 = vunpack.c.h.b16 %v4054
        %v4091 = vunpack.c.l.b16 %v4055
        %v4092 = vunpack.c.h.b16 %v4055
        %v4093 = vunpack.c.l.b16 %v4056
        %v4094 = vunpack.c.h.b16 %v4056
        %v4095 = vunpack.c.l.b16 %v4057
        %v4096 = vunpack.c.h.b16 %v4057
        %v4097 = vunpack.c.l.b16 %v4058
        %v4098 = vunpack.c.h.b16 %v4058
        %v4099 = vunpack.c.l.b16 %v4059
        %v4100 = vunpack.c.h.b16 %v4059
        %v4101 = vunpack.c.l.b16 %v4060
        %v4102 = vunpack.c.h.b16 %v4060
        %v4103 = vunpack.c.l.b16 %v4061
        %v4104 = vunpack.c.h.b16 %v4061
        %v4105 = vunpack.c.l.b16 %v4062
        %v4106 = vunpack.c.h.b16 %v4062
        %v4107 = vunpack.c.l.b16 %v4063
        %v4108 = vunpack.c.h.b16 %v4063
        %v4109 = vunpack.c.l.b16 %v4064
        %v4110 = vunpack.c.h.b16 %v4064
        %v4111 = vunpack.c.l.b16 %v4065
        %v4112 = vunpack.c.h.b16 %v4065
        %v4113 = vunpack.c.l.b16 %v4066
        %v4114 = vunpack.c.h.b16 %v4066
        %v4115 = vunpack.c.l.b16 %v4067
        %v4116 = vunpack.c.h.b16 %v4067
        %v4117 = vpack.c.b16 %v4089, %v4085
        %v4118 = vpack.c.b16 %v4090, %v4086
        %v4119 = vpack.c.b16 %v4091, %v4087
        %v4120 = vpack.c.b16 %v4092, %v4088
        %v4121 = vpack.c.b16 %v4097, %v4093
        %v4122 = vpack.c.b16 %v4098, %v4094
        %v4123 = vpack.c.b16 %v4099, %v4095
        %v4124 = vpack.c.b16 %v4100, %v4096
        %v4125 = vpack.c.b16 %v4105, %v4101
        %v4126 = vpack.c.b16 %v4106, %v4102
        %v4127 = vpack.c.b16 %v4107, %v4103
        %v4128 = vpack.c.b16 %v4108, %v4104
        %v4129 = vpack.c.b16 %v4113, %v4109
        %v4130 = vpack.c.b16 %v4114, %v4110
        %v4131 = vpack.c.b16 %v4115, %v4111
        %v4132 = vpack.c.b16 %v4116, %v4112
        %v4150 = vsel %vm2655, %v4068, 0
        %4152 = vmatprep.subr.bf16.mxu0 0
        %4153 = vmatpush1.bf16.msra.mxu0 0
        %4154 = vmatprep.subr.bf16.mxu0 0
        %4155 = vmatpush1.bf16.msra.mxu0 0
        %4156 = vmatprep.subr.bf16.mxu0 0
        %4157 = vmatpush1.bf16.msra.mxu0 0
        %4158 = vmatprep.subr.bf16.mxu0 0
        %4159 = vmatpush1.bf16.msra.mxu0 0
        %4160 = vmatprep.subr.bf16.mxu0 %v4130
        %4161 = vmatpush1.bf16.msra.mxu0 %v4129
        %4162 = vmatprep.subr.bf16.mxu0 %v4126
        %4163 = vmatpush1.bf16.msra.mxu0 %v4125
        %4164 = vmatprep.subr.bf16.mxu0 %v4122
        %4165 = vmatpush1.bf16.msra.mxu0 %v4121
        %4166 = vmatprep.subr.bf16.mxu0 %v4118
        %4167 = vmatpush1.bf16.msra.mxu0 %v4117
        %4168 = vmatprep.subr.bf16.mxu0 0
        %4169 = vmatpush2.bf16.msra.mxu0 0
        %4170 = vmatprep.subr.bf16.mxu0 0
        %4171 = vmatpush2.bf16.msra.mxu0 0
        %4172 = vmatprep.subr.bf16.mxu0 0
        %4173 = vmatpush2.bf16.msra.mxu0 0
        %4174 = vmatprep.subr.bf16.mxu0 0
        %4175 = vmatpush2.bf16.msra.mxu0 0
        %4176 = vmatprep.subr.bf16.mxu0 0
        %4177 = vmatpush2.bf16.msra.mxu0 0
        %4178 = vmatprep.subr.bf16.mxu0 0
        %4179 = vmatpush2.bf16.msra.mxu0 0
        %4180 = vmatprep.subr.bf16.mxu0 0
        %4181 = vmatpush2.bf16.msra.mxu0 0
        %4182 = vmatprep.subr.bf16.mxu0 0
        %4183 = vmatpush2.bf16.msra.mxu0 0
        %4184 = vmatprep.mubr.bf16.mxu0 0
        %4185 = vmatmul.mubr.bf16.gmra.mxu0 %v4150
        %v4186 = vpop.f32.mrf.mxu0
        %v4187 = vadd.f32 0.0, %v4186
        %v4188 = vpop.f32.mrf.mxu0
        %v4189 = vadd.f32 0.0, %v4188
        %v4190 = vpop.f32.mrf.mxu0
        %v4191 = vpop.f32.mrf.mxu0
        %4192 = vdwg.mxu0
        %4193 = vmatprep.subr.bf16.mxu0 0
        %4194 = vmatpush1.bf16.msra.mxu0 0
        %4195 = vmatprep.subr.bf16.mxu0 0
        %4196 = vmatpush1.bf16.msra.mxu0 0
        %4197 = vmatprep.subr.bf16.mxu0 0
        %4198 = vmatpush1.bf16.msra.mxu0 0
        %4199 = vmatprep.subr.bf16.mxu0 0
        %4200 = vmatpush1.bf16.msra.mxu0 0
        %4201 = vmatprep.subr.bf16.mxu0 %v4132
        %4202 = vmatpush1.bf16.msra.mxu0 %v4131
        %4203 = vmatprep.subr.bf16.mxu0 %v4128
        %4204 = vmatpush1.bf16.msra.mxu0 %v4127
        %4205 = vmatprep.subr.bf16.mxu0 %v4124
        %4206 = vmatpush1.bf16.msra.mxu0 %v4123
        %4207 = vmatprep.subr.bf16.mxu0 %v4120
        %4208 = vmatpush1.bf16.msra.mxu0 %v4119
        %4209 = vmatprep.subr.bf16.mxu0 0
        %4210 = vmatpush2.bf16.msra.mxu0 0
        %4211 = vmatprep.subr.bf16.mxu0 0
        %4212 = vmatpush2.bf16.msra.mxu0 0
        %4213 = vmatprep.subr.bf16.mxu0 0
        %4214 = vmatpush2.bf16.msra.mxu0 0
        %4215 = vmatprep.subr.bf16.mxu0 0
        %4216 = vmatpush2.bf16.msra.mxu0 0
        %4217 = vmatprep.subr.bf16.mxu0 0
        %4218 = vmatpush2.bf16.msra.mxu0 0
        %4219 = vmatprep.subr.bf16.mxu0 0
        %4220 = vmatpush2.bf16.msra.mxu0 0
        %4221 = vmatprep.subr.bf16.mxu0 0
        %4222 = vmatpush2.bf16.msra.mxu0 0
        %4223 = vmatprep.subr.bf16.mxu0 0
        %4224 = vmatpush2.bf16.msra.mxu0 0
        %4225 = vmatprep.mubr.bf16.mxu0 0
        %4226 = vmatmul.mubr.bf16.gmra.mxu0 %v4150
        %v4227 = vpop.f32.mrf.mxu0
        %v4228 = vadd.f32 0.0, %v4227
        %v4229 = vpop.f32.mrf.mxu0
        %v4230 = vadd.f32 0.0, %v4229
        %v4231 = vpop.f32.mrf.mxu0
        %v4232 = vpop.f32.mrf.mxu0
        %4233 = vdwg.mxu0
        %v4238 = vcombine.low %v4187, %v4189
        %v4239 = vcombine.low %v4228, %v4230
        %v4241 = vunpack.c.l.s4 1966171168
        %v4242 = vunpack.c.0.s8 %v4241
        %v4243 = vlaneseq
        %v4244 = vshrl.u32 %v4243, 7
        %v4245 = vsub.s32 %v4242, %v4244
        %v4246 = vrot.slane %v4238, %v4245
        %v4248 = vunpack.c.l.s4 1966171168
        %v4249 = vunpack.c.0.s8 %v4248
        %v4250 = vlaneseq
        %v4251 = vshrl.u32 %v4250, 7
        %v4252 = vsub.s32 %v4249, %v4251
        %v4253 = vrot.slane %v4239, %v4252
        %v4254 = vcombine.low %v4246, %v4253
        %v4256 = vunpack.c.l.s4 1966171168
        %v4257 = vunpack.c.0.s8 %v4256
        %v4258 = vlaneseq
        %v4259 = vshrl.u32 %v4258, 7
        %v4260 = vsub.s32 %v4257, %v4259
        %v4261 = vrot.slane %v4254, %v4260
        %v4263 = vadd.f32 %v4050, %v4261
        %v4264 = vmax.f32 %v4263, 0.0
        %v4266 = vlaneseq
        %v4267 = vshrl.u32 %v4266, 7
        %v4268 = vsub.s32 0, %v4267
        %v4269 = vrot.slane %v4264, %v4268
        %v4270 = vlaneseq
        %v4271 = vshrl.u32 %v4270, 7
        %v4272 = vsub.s32 1, %v4271
        %v4273 = vrot.slane %v4264, %v4272
        %v4274 = vlaneseq
        %v4275 = vshrl.u32 %v4274, 7
        %v4276 = vsub.s32 2, %v4275
        %v4277 = vrot.slane %v4264, %v4276
        %v4278 = vlaneseq
        %v4279 = vshrl.u32 %v4278, 7
        %v4280 = vsub.s32 3, %v4279
        %v4281 = vrot.slane %v4264, %v4280
        %v4286 = vpack.c.bf16 %v4269, %v4269
        %v4287 = vpack.c.bf16 %v4273, %v4273
        %v4288 = vpack.c.bf16 %v4277, %v4277
        %v4289 = vpack.c.bf16 %v4281, %v4281
        %v4290 = vld [vmem:[#allocation14] sm:$0xff]
        %v4291 = vld [vmem:[#allocation14 + $0x8] sm:$0xff]
        %v4292 = vld [vmem:[#allocation14 + $0x10] sm:$0xff]
        %v4293 = vld [vmem:[#allocation14 + $0x18] sm:$0xff]
        %v4294 = vld [vmem:[#allocation14 + $0x20] sm:$0xff]
        %v4295 = vld [vmem:[#allocation14 + $0x28] sm:$0xff]
        %v4296 = vld [vmem:[#allocation14 + $0x30] sm:$0xff]
        %v4297 = vld [vmem:[#allocation14 + $0x38] sm:$0xff]
        %v4298 = vld [vmem:[#allocation14 + $0x40] sm:$0xff]
        %v4299 = vld [vmem:[#allocation14 + $0x48] sm:$0xff]
        %v4300 = vld [vmem:[#allocation14 + $0x50] sm:$0xff]
        %v4301 = vld [vmem:[#allocation14 + $0x58] sm:$0xff]
        %v4302 = vld [vmem:[#allocation14 + $0x60] sm:$0xff]
        %v4303 = vld [vmem:[#allocation14 + $0x68] sm:$0xff]
        %v4304 = vld [vmem:[#allocation14 + $0x70] sm:$0xff]
        %v4305 = vld [vmem:[#allocation14 + $0x78] sm:$0xff]
        %v4306 = vld [vmem:[#allocation14 + $0x80] sm:$0xff]
        %v4307 = vld [vmem:[#allocation14 + $0x88] sm:$0xff]
        %v4308 = vld [vmem:[#allocation14 + $0x90] sm:$0xff]
        %v4309 = vld [vmem:[#allocation14 + $0x98] sm:$0xff]
        %v4310 = vld [vmem:[#allocation14 + $0xa0] sm:$0xff]
        %v4311 = vld [vmem:[#allocation14 + $0xa8] sm:$0xff]
        %v4312 = vld [vmem:[#allocation14 + $0xb0] sm:$0xff]
        %v4313 = vld [vmem:[#allocation14 + $0xb8] sm:$0xff]
        %v4314 = vld [vmem:[#allocation14 + $0xc0] sm:$0xff]
        %v4315 = vld [vmem:[#allocation14 + $0xc8] sm:$0xff]
        %v4316 = vld [vmem:[#allocation14 + $0xd0] sm:$0xff]
        %v4317 = vld [vmem:[#allocation14 + $0xd8] sm:$0xff]
        %v4318 = vld [vmem:[#allocation14 + $0xe0] sm:$0xff]
        %v4319 = vld [vmem:[#allocation14 + $0xe8] sm:$0xff]
        %v4320 = vld [vmem:[#allocation14 + $0xf0] sm:$0xff]
        %v4321 = vld [vmem:[#allocation14 + $0xf8] sm:$0xff]
        %v4322 = vld [vmem:[#allocation14 + $0x100] sm:$0xff]
        %v4323 = vld [vmem:[#allocation14 + $0x108] sm:$0xff]
        %v4324 = vld [vmem:[#allocation14 + $0x110] sm:$0xff]
        %v4325 = vld [vmem:[#allocation14 + $0x118] sm:$0xff]
        %v4326 = vld [vmem:[#allocation14 + $0x120] sm:$0xff]
        %v4327 = vld [vmem:[#allocation14 + $0x128] sm:$0xff]
        %v4328 = vld [vmem:[#allocation14 + $0x130] sm:$0xff]
        %v4329 = vld [vmem:[#allocation14 + $0x138] sm:$0xff]
        %v4330 = vld [vmem:[#allocation14 + $0x140] sm:$0xff]
        %v4331 = vld [vmem:[#allocation14 + $0x148] sm:$0xff]
        %v4332 = vld [vmem:[#allocation14 + $0x150] sm:$0xff]
        %v4333 = vld [vmem:[#allocation14 + $0x158] sm:$0xff]
        %v4334 = vld [vmem:[#allocation14 + $0x160] sm:$0xff]
        %v4335 = vld [vmem:[#allocation14 + $0x168] sm:$0xff]
        %v4336 = vld [vmem:[#allocation14 + $0x170] sm:$0xff]
        %v4337 = vld [vmem:[#allocation14 + $0x178] sm:$0xff]
        %v4338 = vld [vmem:[#allocation14 + $0x180] sm:$0xff]
        %v4339 = vld [vmem:[#allocation14 + $0x188] sm:$0xff]
        %v4340 = vld [vmem:[#allocation14 + $0x190] sm:$0xff]
        %v4341 = vld [vmem:[#allocation14 + $0x198] sm:$0xff]
        %v4342 = vld [vmem:[#allocation14 + $0x1a0] sm:$0xff]
        %v4343 = vld [vmem:[#allocation14 + $0x1a8] sm:$0xff]
        %v4344 = vld [vmem:[#allocation14 + $0x1b0] sm:$0xff]
        %v4345 = vld [vmem:[#allocation14 + $0x1b8] sm:$0xff]
        %v4346 = vld [vmem:[#allocation14 + $0x1c0] sm:$0xff]
        %v4347 = vld [vmem:[#allocation14 + $0x1c8] sm:$0xff]
        %v4348 = vld [vmem:[#allocation14 + $0x1d0] sm:$0xff]
        %v4349 = vld [vmem:[#allocation14 + $0x1d8] sm:$0xff]
        %v4350 = vld [vmem:[#allocation14 + $0x1e0] sm:$0xff]
        %v4351 = vld [vmem:[#allocation14 + $0x1e8] sm:$0xff]
        %v4352 = vld [vmem:[#allocation14 + $0x1f0] sm:$0xff]
        %v4353 = vld [vmem:[#allocation14 + $0x1f8] sm:$0xff]
        %v4354 = vld [vmem:[#allocation14 + $0x200] sm:$0xff]
        %v4355 = vld [vmem:[#allocation14 + $0x208] sm:$0xff]
        %v4356 = vld [vmem:[#allocation14 + $0x210] sm:$0xff]
        %v4357 = vld [vmem:[#allocation14 + $0x218] sm:$0xff]
        %v4358 = vld [vmem:[#allocation14 + $0x220] sm:$0xff]
        %v4359 = vld [vmem:[#allocation14 + $0x228] sm:$0xff]
        %v4360 = vld [vmem:[#allocation14 + $0x230] sm:$0xff]
        %v4361 = vld [vmem:[#allocation14 + $0x238] sm:$0xff]
        %v4362 = vld [vmem:[#allocation14 + $0x240] sm:$0xff]
        %v4363 = vld [vmem:[#allocation14 + $0x248] sm:$0xff]
        %v4364 = vld [vmem:[#allocation14 + $0x250] sm:$0xff]
        %v4365 = vld [vmem:[#allocation14 + $0x258] sm:$0xff]
        %v4366 = vld [vmem:[#allocation14 + $0x260] sm:$0xff]
        %v4367 = vld [vmem:[#allocation14 + $0x268] sm:$0xff]
        %v4368 = vld [vmem:[#allocation14 + $0x270] sm:$0xff]
        %v4369 = vld [vmem:[#allocation14 + $0x278] sm:$0xff]
        %v4370 = vld [vmem:[#allocation14 + $0x280] sm:$0xff]
        %v4371 = vld [vmem:[#allocation14 + $0x288] sm:$0xff]
        %v4372 = vld [vmem:[#allocation14 + $0x290] sm:$0xff]
        %v4373 = vld [vmem:[#allocation14 + $0x298] sm:$0xff]
        %v4374 = vld [vmem:[#allocation14 + $0x2a0] sm:$0xff]
        %v4375 = vld [vmem:[#allocation14 + $0x2a8] sm:$0xff]
        %v4376 = vld [vmem:[#allocation14 + $0x2b0] sm:$0xff]
        %v4377 = vld [vmem:[#allocation14 + $0x2b8] sm:$0xff]
        %v4378 = vld [vmem:[#allocation14 + $0x2c0] sm:$0xff]
        %v4379 = vld [vmem:[#allocation14 + $0x2c8] sm:$0xff]
        %v4380 = vld [vmem:[#allocation14 + $0x2d0] sm:$0xff]
        %v4381 = vld [vmem:[#allocation14 + $0x2d8] sm:$0xff]
        %v4382 = vld [vmem:[#allocation14 + $0x2e0] sm:$0xff]
        %v4383 = vld [vmem:[#allocation14 + $0x2e8] sm:$0xff]
        %v4384 = vld [vmem:[#allocation14 + $0x2f0] sm:$0xff]
        %v4385 = vld [vmem:[#allocation14 + $0x2f8] sm:$0xff]
        %v4386 = vld [vmem:[#allocation14 + $0x300] sm:$0xff]
        %v4387 = vld [vmem:[#allocation14 + $0x308] sm:$0xff]
        %v4388 = vld [vmem:[#allocation14 + $0x310] sm:$0xff]
        %v4389 = vld [vmem:[#allocation14 + $0x318] sm:$0xff]
        %v4390 = vld [vmem:[#allocation14 + $0x320] sm:$0xff]
        %v4391 = vld [vmem:[#allocation14 + $0x328] sm:$0xff]
        %v4392 = vld [vmem:[#allocation14 + $0x330] sm:$0xff]
        %v4393 = vld [vmem:[#allocation14 + $0x338] sm:$0xff]
        %v4394 = vld [vmem:[#allocation14 + $0x340] sm:$0xff]
        %v4395 = vld [vmem:[#allocation14 + $0x348] sm:$0xff]
        %v4396 = vld [vmem:[#allocation14 + $0x350] sm:$0xff]
        %v4397 = vld [vmem:[#allocation14 + $0x358] sm:$0xff]
        %v4398 = vld [vmem:[#allocation14 + $0x360] sm:$0xff]
        %v4399 = vld [vmem:[#allocation14 + $0x368] sm:$0xff]
        %v4400 = vld [vmem:[#allocation14 + $0x370] sm:$0xff]
        %v4401 = vld [vmem:[#allocation14 + $0x378] sm:$0xff]
        %v4402 = vld [vmem:[#allocation14 + $0x380] sm:$0xff]
        %v4403 = vld [vmem:[#allocation14 + $0x388] sm:$0xff]
        %v4404 = vld [vmem:[#allocation14 + $0x390] sm:$0xff]
        %v4405 = vld [vmem:[#allocation14 + $0x398] sm:$0xff]
        %v4406 = vld [vmem:[#allocation14 + $0x3a0] sm:$0xff]
        %v4407 = vld [vmem:[#allocation14 + $0x3a8] sm:$0xff]
        %v4408 = vld [vmem:[#allocation14 + $0x3b0] sm:$0xff]
        %v4409 = vld [vmem:[#allocation14 + $0x3b8] sm:$0xff]
        %v4410 = vld [vmem:[#allocation14 + $0x3c0] sm:$0xff]
        %v4411 = vld [vmem:[#allocation14 + $0x3c8] sm:$0xff]
        %v4412 = vld [vmem:[#allocation14 + $0x3d0] sm:$0xff]
        %v4413 = vld [vmem:[#allocation14 + $0x3d8] sm:$0xff]
        %v4414 = vld [vmem:[#allocation14 + $0x3e0] sm:$0xff]
        %v4415 = vld [vmem:[#allocation14 + $0x3e8] sm:$0xff]
        %v4416 = vld [vmem:[#allocation14 + $0x3f0] sm:$0xff]
        %v4417 = vld [vmem:[#allocation14 + $0x3f8] sm:$0xff]
        %v4418 = vld [vmem:[#allocation16] sm:$0xf]
        %v4547 = vunpack.c.l.b16 %v4290
        %v4548 = vunpack.c.h.b16 %v4290
        %v4549 = vunpack.c.l.b16 %v4291
        %v4550 = vunpack.c.h.b16 %v4291
        %v4551 = vunpack.c.l.b16 %v4292
        %v4552 = vunpack.c.h.b16 %v4292
        %v4553 = vunpack.c.l.b16 %v4293
        %v4554 = vunpack.c.h.b16 %v4293
        %v4555 = vunpack.c.l.b16 %v4294
        %v4556 = vunpack.c.h.b16 %v4294
        %v4557 = vunpack.c.l.b16 %v4295
        %v4558 = vunpack.c.h.b16 %v4295
        %v4559 = vunpack.c.l.b16 %v4296
        %v4560 = vunpack.c.h.b16 %v4296
        %v4561 = vunpack.c.l.b16 %v4297
        %v4562 = vunpack.c.h.b16 %v4297
        %v4563 = vunpack.c.l.b16 %v4298
        %v4564 = vunpack.c.h.b16 %v4298
        %v4565 = vunpack.c.l.b16 %v4299
        %v4566 = vunpack.c.h.b16 %v4299
        %v4567 = vunpack.c.l.b16 %v4300
        %v4568 = vunpack.c.h.b16 %v4300
        %v4569 = vunpack.c.l.b16 %v4301
        %v4570 = vunpack.c.h.b16 %v4301
        %v4571 = vunpack.c.l.b16 %v4302
        %v4572 = vunpack.c.h.b16 %v4302
        %v4573 = vunpack.c.l.b16 %v4303
        %v4574 = vunpack.c.h.b16 %v4303
        %v4575 = vunpack.c.l.b16 %v4304
        %v4576 = vunpack.c.h.b16 %v4304
        %v4577 = vunpack.c.l.b16 %v4305
        %v4578 = vunpack.c.h.b16 %v4305
        %v4579 = vunpack.c.l.b16 %v4306
        %v4580 = vunpack.c.h.b16 %v4306
        %v4581 = vunpack.c.l.b16 %v4307
        %v4582 = vunpack.c.h.b16 %v4307
        %v4583 = vunpack.c.l.b16 %v4308
        %v4584 = vunpack.c.h.b16 %v4308
        %v4585 = vunpack.c.l.b16 %v4309
        %v4586 = vunpack.c.h.b16 %v4309
        %v4587 = vunpack.c.l.b16 %v4310
        %v4588 = vunpack.c.h.b16 %v4310
        %v4589 = vunpack.c.l.b16 %v4311
        %v4590 = vunpack.c.h.b16 %v4311
        %v4591 = vunpack.c.l.b16 %v4312
        %v4592 = vunpack.c.h.b16 %v4312
        %v4593 = vunpack.c.l.b16 %v4313
        %v4594 = vunpack.c.h.b16 %v4313
        %v4595 = vunpack.c.l.b16 %v4314
        %v4596 = vunpack.c.h.b16 %v4314
        %v4597 = vunpack.c.l.b16 %v4315
        %v4598 = vunpack.c.h.b16 %v4315
        %v4599 = vunpack.c.l.b16 %v4316
        %v4600 = vunpack.c.h.b16 %v4316
        %v4601 = vunpack.c.l.b16 %v4317
        %v4602 = vunpack.c.h.b16 %v4317
        %v4603 = vunpack.c.l.b16 %v4318
        %v4604 = vunpack.c.h.b16 %v4318
        %v4605 = vunpack.c.l.b16 %v4319
        %v4606 = vunpack.c.h.b16 %v4319
        %v4607 = vunpack.c.l.b16 %v4320
        %v4608 = vunpack.c.h.b16 %v4320
        %v4609 = vunpack.c.l.b16 %v4321
        %v4610 = vunpack.c.h.b16 %v4321
        %v4611 = vunpack.c.l.b16 %v4322
        %v4612 = vunpack.c.h.b16 %v4322
        %v4613 = vunpack.c.l.b16 %v4323
        %v4614 = vunpack.c.h.b16 %v4323
        %v4615 = vunpack.c.l.b16 %v4324
        %v4616 = vunpack.c.h.b16 %v4324
        %v4617 = vunpack.c.l.b16 %v4325
        %v4618 = vunpack.c.h.b16 %v4325
        %v4619 = vunpack.c.l.b16 %v4326
        %v4620 = vunpack.c.h.b16 %v4326
        %v4621 = vunpack.c.l.b16 %v4327
        %v4622 = vunpack.c.h.b16 %v4327
        %v4623 = vunpack.c.l.b16 %v4328
        %v4624 = vunpack.c.h.b16 %v4328
        %v4625 = vunpack.c.l.b16 %v4329
        %v4626 = vunpack.c.h.b16 %v4329
        %v4627 = vunpack.c.l.b16 %v4330
        %v4628 = vunpack.c.h.b16 %v4330
        %v4629 = vunpack.c.l.b16 %v4331
        %v4630 = vunpack.c.h.b16 %v4331
        %v4631 = vunpack.c.l.b16 %v4332
        %v4632 = vunpack.c.h.b16 %v4332
        %v4633 = vunpack.c.l.b16 %v4333
        %v4634 = vunpack.c.h.b16 %v4333
        %v4635 = vunpack.c.l.b16 %v4334
        %v4636 = vunpack.c.h.b16 %v4334
        %v4637 = vunpack.c.l.b16 %v4335
        %v4638 = vunpack.c.h.b16 %v4335
        %v4639 = vunpack.c.l.b16 %v4336
        %v4640 = vunpack.c.h.b16 %v4336
        %v4641 = vunpack.c.l.b16 %v4337
        %v4642 = vunpack.c.h.b16 %v4337
        %v4643 = vunpack.c.l.b16 %v4338
        %v4644 = vunpack.c.h.b16 %v4338
        %v4645 = vunpack.c.l.b16 %v4339
        %v4646 = vunpack.c.h.b16 %v4339
        %v4647 = vunpack.c.l.b16 %v4340
        %v4648 = vunpack.c.h.b16 %v4340
        %v4649 = vunpack.c.l.b16 %v4341
        %v4650 = vunpack.c.h.b16 %v4341
        %v4651 = vunpack.c.l.b16 %v4342
        %v4652 = vunpack.c.h.b16 %v4342
        %v4653 = vunpack.c.l.b16 %v4343
        %v4654 = vunpack.c.h.b16 %v4343
        %v4655 = vunpack.c.l.b16 %v4344
        %v4656 = vunpack.c.h.b16 %v4344
        %v4657 = vunpack.c.l.b16 %v4345
        %v4658 = vunpack.c.h.b16 %v4345
        %v4659 = vunpack.c.l.b16 %v4346
        %v4660 = vunpack.c.h.b16 %v4346
        %v4661 = vunpack.c.l.b16 %v4347
        %v4662 = vunpack.c.h.b16 %v4347
        %v4663 = vunpack.c.l.b16 %v4348
        %v4664 = vunpack.c.h.b16 %v4348
        %v4665 = vunpack.c.l.b16 %v4349
        %v4666 = vunpack.c.h.b16 %v4349
        %v4667 = vunpack.c.l.b16 %v4350
        %v4668 = vunpack.c.h.b16 %v4350
        %v4669 = vunpack.c.l.b16 %v4351
        %v4670 = vunpack.c.h.b16 %v4351
        %v4671 = vunpack.c.l.b16 %v4352
        %v4672 = vunpack.c.h.b16 %v4352
        %v4673 = vunpack.c.l.b16 %v4353
        %v4674 = vunpack.c.h.b16 %v4353
        %v4675 = vunpack.c.l.b16 %v4354
        %v4676 = vunpack.c.h.b16 %v4354
        %v4677 = vunpack.c.l.b16 %v4355
        %v4678 = vunpack.c.h.b16 %v4355
        %v4679 = vunpack.c.l.b16 %v4356
        %v4680 = vunpack.c.h.b16 %v4356
        %v4681 = vunpack.c.l.b16 %v4357
        %v4682 = vunpack.c.h.b16 %v4357
        %v4683 = vunpack.c.l.b16 %v4358
        %v4684 = vunpack.c.h.b16 %v4358
        %v4685 = vunpack.c.l.b16 %v4359
        %v4686 = vunpack.c.h.b16 %v4359
        %v4687 = vunpack.c.l.b16 %v4360
        %v4688 = vunpack.c.h.b16 %v4360
        %v4689 = vunpack.c.l.b16 %v4361
        %v4690 = vunpack.c.h.b16 %v4361
        %v4691 = vunpack.c.l.b16 %v4362
        %v4692 = vunpack.c.h.b16 %v4362
        %v4693 = vunpack.c.l.b16 %v4363
        %v4694 = vunpack.c.h.b16 %v4363
        %v4695 = vunpack.c.l.b16 %v4364
        %v4696 = vunpack.c.h.b16 %v4364
        %v4697 = vunpack.c.l.b16 %v4365
        %v4698 = vunpack.c.h.b16 %v4365
        %v4699 = vunpack.c.l.b16 %v4366
        %v4700 = vunpack.c.h.b16 %v4366
        %v4701 = vunpack.c.l.b16 %v4367
        %v4702 = vunpack.c.h.b16 %v4367
        %v4703 = vunpack.c.l.b16 %v4368
        %v4704 = vunpack.c.h.b16 %v4368
        %v4705 = vunpack.c.l.b16 %v4369
        %v4706 = vunpack.c.h.b16 %v4369
        %v4707 = vunpack.c.l.b16 %v4370
        %v4708 = vunpack.c.h.b16 %v4370
        %v4709 = vunpack.c.l.b16 %v4371
        %v4710 = vunpack.c.h.b16 %v4371
        %v4711 = vunpack.c.l.b16 %v4372
        %v4712 = vunpack.c.h.b16 %v4372
        %v4713 = vunpack.c.l.b16 %v4373
        %v4714 = vunpack.c.h.b16 %v4373
        %v4715 = vunpack.c.l.b16 %v4374
        %v4716 = vunpack.c.h.b16 %v4374
        %v4717 = vunpack.c.l.b16 %v4375
        %v4718 = vunpack.c.h.b16 %v4375
        %v4719 = vunpack.c.l.b16 %v4376
        %v4720 = vunpack.c.h.b16 %v4376
        %v4721 = vunpack.c.l.b16 %v4377
        %v4722 = vunpack.c.h.b16 %v4377
        %v4723 = vunpack.c.l.b16 %v4378
        %v4724 = vunpack.c.h.b16 %v4378
        %v4725 = vunpack.c.l.b16 %v4379
        %v4726 = vunpack.c.h.b16 %v4379
        %v4727 = vunpack.c.l.b16 %v4380
        %v4728 = vunpack.c.h.b16 %v4380
        %v4729 = vunpack.c.l.b16 %v4381
        %v4730 = vunpack.c.h.b16 %v4381
        %v4731 = vunpack.c.l.b16 %v4382
        %v4732 = vunpack.c.h.b16 %v4382
        %v4733 = vunpack.c.l.b16 %v4383
        %v4734 = vunpack.c.h.b16 %v4383
        %v4735 = vunpack.c.l.b16 %v4384
        %v4736 = vunpack.c.h.b16 %v4384
        %v4737 = vunpack.c.l.b16 %v4385
        %v4738 = vunpack.c.h.b16 %v4385
        %v4739 = vunpack.c.l.b16 %v4386
        %v4740 = vunpack.c.h.b16 %v4386
        %v4741 = vunpack.c.l.b16 %v4387
        %v4742 = vunpack.c.h.b16 %v4387
        %v4743 = vunpack.c.l.b16 %v4388
        %v4744 = vunpack.c.h.b16 %v4388
        %v4745 = vunpack.c.l.b16 %v4389
        %v4746 = vunpack.c.h.b16 %v4389
        %v4747 = vunpack.c.l.b16 %v4390
        %v4748 = vunpack.c.h.b16 %v4390
        %v4749 = vunpack.c.l.b16 %v4391
        %v4750 = vunpack.c.h.b16 %v4391
        %v4751 = vunpack.c.l.b16 %v4392
        %v4752 = vunpack.c.h.b16 %v4392
        %v4753 = vunpack.c.l.b16 %v4393
        %v4754 = vunpack.c.h.b16 %v4393
        %v4755 = vunpack.c.l.b16 %v4394
        %v4756 = vunpack.c.h.b16 %v4394
        %v4757 = vunpack.c.l.b16 %v4395
        %v4758 = vunpack.c.h.b16 %v4395
        %v4759 = vunpack.c.l.b16 %v4396
        %v4760 = vunpack.c.h.b16 %v4396
        %v4761 = vunpack.c.l.b16 %v4397
        %v4762 = vunpack.c.h.b16 %v4397
        %v4763 = vunpack.c.l.b16 %v4398
        %v4764 = vunpack.c.h.b16 %v4398
        %v4765 = vunpack.c.l.b16 %v4399
        %v4766 = vunpack.c.h.b16 %v4399
        %v4767 = vunpack.c.l.b16 %v4400
        %v4768 = vunpack.c.h.b16 %v4400
        %v4769 = vunpack.c.l.b16 %v4401
        %v4770 = vunpack.c.h.b16 %v4401
        %v4771 = vunpack.c.l.b16 %v4402
        %v4772 = vunpack.c.h.b16 %v4402
        %v4773 = vunpack.c.l.b16 %v4403
        %v4774 = vunpack.c.h.b16 %v4403
        %v4775 = vunpack.c.l.b16 %v4404
        %v4776 = vunpack.c.h.b16 %v4404
        %v4777 = vunpack.c.l.b16 %v4405
        %v4778 = vunpack.c.h.b16 %v4405
        %v4779 = vunpack.c.l.b16 %v4406
        %v4780 = vunpack.c.h.b16 %v4406
        %v4781 = vunpack.c.l.b16 %v4407
        %v4782 = vunpack.c.h.b16 %v4407
        %v4783 = vunpack.c.l.b16 %v4408
        %v4784 = vunpack.c.h.b16 %v4408
        %v4785 = vunpack.c.l.b16 %v4409
        %v4786 = vunpack.c.h.b16 %v4409
        %v4787 = vunpack.c.l.b16 %v4410
        %v4788 = vunpack.c.h.b16 %v4410
        %v4789 = vunpack.c.l.b16 %v4411
        %v4790 = vunpack.c.h.b16 %v4411
        %v4791 = vunpack.c.l.b16 %v4412
        %v4792 = vunpack.c.h.b16 %v4412
        %v4793 = vunpack.c.l.b16 %v4413
        %v4794 = vunpack.c.h.b16 %v4413
        %v4795 = vunpack.c.l.b16 %v4414
        %v4796 = vunpack.c.h.b16 %v4414
        %v4797 = vunpack.c.l.b16 %v4415
        %v4798 = vunpack.c.h.b16 %v4415
        %v4799 = vunpack.c.l.b16 %v4416
        %v4800 = vunpack.c.h.b16 %v4416
        %v4801 = vunpack.c.l.b16 %v4417
        %v4802 = vunpack.c.h.b16 %v4417
        %v4803 = vpack.c.b16 %v4551, %v4547
        %v4804 = vpack.c.b16 %v4552, %v4548
        %v4805 = vpack.c.b16 %v4553, %v4549
        %v4806 = vpack.c.b16 %v4554, %v4550
        %v4807 = vpack.c.b16 %v4559, %v4555
        %v4808 = vpack.c.b16 %v4560, %v4556
        %v4809 = vpack.c.b16 %v4561, %v4557
        %v4810 = vpack.c.b16 %v4562, %v4558
        %v4811 = vpack.c.b16 %v4567, %v4563
        %v4812 = vpack.c.b16 %v4568, %v4564
        %v4813 = vpack.c.b16 %v4569, %v4565
        %v4814 = vpack.c.b16 %v4570, %v4566
        %v4815 = vpack.c.b16 %v4575, %v4571
        %v4816 = vpack.c.b16 %v4576, %v4572
        %v4817 = vpack.c.b16 %v4577, %v4573
        %v4818 = vpack.c.b16 %v4578, %v4574
        %v4819 = vpack.c.b16 %v4583, %v4579
        %v4820 = vpack.c.b16 %v4584, %v4580
        %v4821 = vpack.c.b16 %v4585, %v4581
        %v4822 = vpack.c.b16 %v4586, %v4582
        %v4823 = vpack.c.b16 %v4591, %v4587
        %v4824 = vpack.c.b16 %v4592, %v4588
        %v4825 = vpack.c.b16 %v4593, %v4589
        %v4826 = vpack.c.b16 %v4594, %v4590
        %v4827 = vpack.c.b16 %v4599, %v4595
        %v4828 = vpack.c.b16 %v4600, %v4596
        %v4829 = vpack.c.b16 %v4601, %v4597
        %v4830 = vpack.c.b16 %v4602, %v4598
        %v4831 = vpack.c.b16 %v4607, %v4603
        %v4832 = vpack.c.b16 %v4608, %v4604
        %v4833 = vpack.c.b16 %v4609, %v4605
        %v4834 = vpack.c.b16 %v4610, %v4606
        %v4835 = vpack.c.b16 %v4615, %v4611
        %v4836 = vpack.c.b16 %v4616, %v4612
        %v4837 = vpack.c.b16 %v4617, %v4613
        %v4838 = vpack.c.b16 %v4618, %v4614
        %v4839 = vpack.c.b16 %v4623, %v4619
        %v4840 = vpack.c.b16 %v4624, %v4620
        %v4841 = vpack.c.b16 %v4625, %v4621
        %v4842 = vpack.c.b16 %v4626, %v4622
        %v4843 = vpack.c.b16 %v4631, %v4627
        %v4844 = vpack.c.b16 %v4632, %v4628
        %v4845 = vpack.c.b16 %v4633, %v4629
        %v4846 = vpack.c.b16 %v4634, %v4630
        %v4847 = vpack.c.b16 %v4639, %v4635
        %v4848 = vpack.c.b16 %v4640, %v4636
        %v4849 = vpack.c.b16 %v4641, %v4637
        %v4850 = vpack.c.b16 %v4642, %v4638
        %v4851 = vpack.c.b16 %v4647, %v4643
        %v4852 = vpack.c.b16 %v4648, %v4644
        %v4853 = vpack.c.b16 %v4649, %v4645
        %v4854 = vpack.c.b16 %v4650, %v4646
        %v4855 = vpack.c.b16 %v4655, %v4651
        %v4856 = vpack.c.b16 %v4656, %v4652
        %v4857 = vpack.c.b16 %v4657, %v4653
        %v4858 = vpack.c.b16 %v4658, %v4654
        %v4859 = vpack.c.b16 %v4663, %v4659
        %v4860 = vpack.c.b16 %v4664, %v4660
        %v4861 = vpack.c.b16 %v4665, %v4661
        %v4862 = vpack.c.b16 %v4666, %v4662
        %v4863 = vpack.c.b16 %v4671, %v4667
        %v4864 = vpack.c.b16 %v4672, %v4668
        %v4865 = vpack.c.b16 %v4673, %v4669
        %v4866 = vpack.c.b16 %v4674, %v4670
        %v4867 = vpack.c.b16 %v4679, %v4675
        %v4868 = vpack.c.b16 %v4680, %v4676
        %v4869 = vpack.c.b16 %v4681, %v4677
        %v4870 = vpack.c.b16 %v4682, %v4678
        %v4871 = vpack.c.b16 %v4687, %v4683
        %v4872 = vpack.c.b16 %v4688, %v4684
        %v4873 = vpack.c.b16 %v4689, %v4685
        %v4874 = vpack.c.b16 %v4690, %v4686
        %v4875 = vpack.c.b16 %v4695, %v4691
        %v4876 = vpack.c.b16 %v4696, %v4692
        %v4877 = vpack.c.b16 %v4697, %v4693
        %v4878 = vpack.c.b16 %v4698, %v4694
        %v4879 = vpack.c.b16 %v4703, %v4699
        %v4880 = vpack.c.b16 %v4704, %v4700
        %v4881 = vpack.c.b16 %v4705, %v4701
        %v4882 = vpack.c.b16 %v4706, %v4702
        %v4883 = vpack.c.b16 %v4711, %v4707
        %v4884 = vpack.c.b16 %v4712, %v4708
        %v4885 = vpack.c.b16 %v4713, %v4709
        %v4886 = vpack.c.b16 %v4714, %v4710
        %v4887 = vpack.c.b16 %v4719, %v4715
        %v4888 = vpack.c.b16 %v4720, %v4716
        %v4889 = vpack.c.b16 %v4721, %v4717
        %v4890 = vpack.c.b16 %v4722, %v4718
        %v4891 = vpack.c.b16 %v4727, %v4723
        %v4892 = vpack.c.b16 %v4728, %v4724
        %v4893 = vpack.c.b16 %v4729, %v4725
        %v4894 = vpack.c.b16 %v4730, %v4726
        %v4895 = vpack.c.b16 %v4735, %v4731
        %v4896 = vpack.c.b16 %v4736, %v4732
        %v4897 = vpack.c.b16 %v4737, %v4733
        %v4898 = vpack.c.b16 %v4738, %v4734
        %v4899 = vpack.c.b16 %v4743, %v4739
        %v4900 = vpack.c.b16 %v4744, %v4740
        %v4901 = vpack.c.b16 %v4745, %v4741
        %v4902 = vpack.c.b16 %v4746, %v4742
        %v4903 = vpack.c.b16 %v4751, %v4747
        %v4904 = vpack.c.b16 %v4752, %v4748
        %v4905 = vpack.c.b16 %v4753, %v4749
        %v4906 = vpack.c.b16 %v4754, %v4750
        %v4907 = vpack.c.b16 %v4759, %v4755
        %v4908 = vpack.c.b16 %v4760, %v4756
        %v4909 = vpack.c.b16 %v4761, %v4757
        %v4910 = vpack.c.b16 %v4762, %v4758
        %v4911 = vpack.c.b16 %v4767, %v4763
        %v4912 = vpack.c.b16 %v4768, %v4764
        %v4913 = vpack.c.b16 %v4769, %v4765
        %v4914 = vpack.c.b16 %v4770, %v4766
        %v4915 = vpack.c.b16 %v4775, %v4771
        %v4916 = vpack.c.b16 %v4776, %v4772
        %v4917 = vpack.c.b16 %v4777, %v4773
        %v4918 = vpack.c.b16 %v4778, %v4774
        %v4919 = vpack.c.b16 %v4783, %v4779
        %v4920 = vpack.c.b16 %v4784, %v4780
        %v4921 = vpack.c.b16 %v4785, %v4781
        %v4922 = vpack.c.b16 %v4786, %v4782
        %v4923 = vpack.c.b16 %v4791, %v4787
        %v4924 = vpack.c.b16 %v4792, %v4788
        %v4925 = vpack.c.b16 %v4793, %v4789
        %v4926 = vpack.c.b16 %v4794, %v4790
        %v4927 = vpack.c.b16 %v4799, %v4795
        %v4928 = vpack.c.b16 %v4800, %v4796
        %v4929 = vpack.c.b16 %v4801, %v4797
        %v4930 = vpack.c.b16 %v4802, %v4798
        %v5060 = vlaneseq
        %v5061 = vshrl.u32 %v5060, 7
        %v5062 = vsub.s32 0, %v5061
        %v5063 = vrot.slane %v4418, %v5062
        %v5064 = vlaneseq
        %v5065 = vshrl.u32 %v5064, 7
        %v5066 = vsub.s32 1, %v5065
        %v5067 = vrot.slane %v4418, %v5066
        %v5068 = vlaneseq
        %v5069 = vshrl.u32 %v5068, 7
        %v5070 = vsub.s32 2, %v5069
        %v5071 = vrot.slane %v4418, %v5070
        %v5072 = vlaneseq
        %v5073 = vshrl.u32 %v5072, 7
        %v5074 = vsub.s32 3, %v5073
        %v5075 = vrot.slane %v4418, %v5074
        %5080 = vmatprep.subr.bf16.mxu0 %v4832
        %5081 = vmatpush1.bf16.msra.mxu0 %v4831
        %5082 = vmatprep.subr.bf16.mxu0 %v4828
        %5083 = vmatpush1.bf16.msra.mxu0 %v4827
        %5084 = vmatprep.subr.bf16.mxu0 %v4824
        %5085 = vmatpush1.bf16.msra.mxu0 %v4823
        %5086 = vmatprep.subr.bf16.mxu0 %v4820
        %5087 = vmatpush1.bf16.msra.mxu0 %v4819
        %5088 = vmatprep.subr.bf16.mxu0 %v4816
        %5089 = vmatpush1.bf16.msra.mxu0 %v4815
        %5090 = vmatprep.subr.bf16.mxu0 %v4812
        %5091 = vmatpush1.bf16.msra.mxu0 %v4811
        %5092 = vmatprep.subr.bf16.mxu0 %v4808
        %5093 = vmatpush1.bf16.msra.mxu0 %v4807
        %5094 = vmatprep.subr.bf16.mxu0 %v4804
        %5095 = vmatpush1.bf16.msra.mxu0 %v4803
        %5096 = vmatprep.subr.bf16.mxu0 %v4864
        %5097 = vmatpush2.bf16.msra.mxu0 %v4863
        %5098 = vmatprep.subr.bf16.mxu0 %v4860
        %5099 = vmatpush2.bf16.msra.mxu0 %v4859
        %5100 = vmatprep.subr.bf16.mxu0 %v4856
        %5101 = vmatpush2.bf16.msra.mxu0 %v4855
        %5102 = vmatprep.subr.bf16.mxu0 %v4852
        %5103 = vmatpush2.bf16.msra.mxu0 %v4851
        %5104 = vmatprep.subr.bf16.mxu0 %v4848
        %5105 = vmatpush2.bf16.msra.mxu0 %v4847
        %5106 = vmatprep.subr.bf16.mxu0 %v4844
        %5107 = vmatpush2.bf16.msra.mxu0 %v4843
        %5108 = vmatprep.subr.bf16.mxu0 %v4840
        %5109 = vmatpush2.bf16.msra.mxu0 %v4839
        %5110 = vmatprep.subr.bf16.mxu0 %v4836
        %5111 = vmatpush2.bf16.msra.mxu0 %v4835
        %5112 = vmatprep.mubr.bf16.mxu0 %v4287
        %5113 = vmatmul.mubr.bf16.gmra.mxu0 %v4286
        %v5114 = vpop.f32.mrf.mxu0
        %v5115 = vadd.f32 %v5063, %v5114
        %v5116 = vpop.f32.mrf.mxu0
        %v5117 = vadd.f32 %v5067, %v5116
        %v5118 = vpop.f32.mrf.mxu0
        %v5119 = vpop.f32.mrf.mxu0
        %5120 = vdwg.mxu0
        %5121 = vmatprep.subr.bf16.mxu0 %v4896
        %5122 = vmatpush1.bf16.msra.mxu0 %v4895
        %5123 = vmatprep.subr.bf16.mxu0 %v4892
        %5124 = vmatpush1.bf16.msra.mxu0 %v4891
        %5125 = vmatprep.subr.bf16.mxu0 %v4888
        %5126 = vmatpush1.bf16.msra.mxu0 %v4887
        %5127 = vmatprep.subr.bf16.mxu0 %v4884
        %5128 = vmatpush1.bf16.msra.mxu0 %v4883
        %5129 = vmatprep.subr.bf16.mxu0 %v4880
        %5130 = vmatpush1.bf16.msra.mxu0 %v4879
        %5131 = vmatprep.subr.bf16.mxu0 %v4876
        %5132 = vmatpush1.bf16.msra.mxu0 %v4875
        %5133 = vmatprep.subr.bf16.mxu0 %v4872
        %5134 = vmatpush1.bf16.msra.mxu0 %v4871
        %5135 = vmatprep.subr.bf16.mxu0 %v4868
        %5136 = vmatpush1.bf16.msra.mxu0 %v4867
        %5137 = vmatprep.subr.bf16.mxu0 %v4928
        %5138 = vmatpush2.bf16.msra.mxu0 %v4927
        %5139 = vmatprep.subr.bf16.mxu0 %v4924
        %5140 = vmatpush2.bf16.msra.mxu0 %v4923
        %5141 = vmatprep.subr.bf16.mxu0 %v4920
        %5142 = vmatpush2.bf16.msra.mxu0 %v4919
        %5143 = vmatprep.subr.bf16.mxu0 %v4916
        %5144 = vmatpush2.bf16.msra.mxu0 %v4915
        %5145 = vmatprep.subr.bf16.mxu0 %v4912
        %5146 = vmatpush2.bf16.msra.mxu0 %v4911
        %5147 = vmatprep.subr.bf16.mxu0 %v4908
        %5148 = vmatpush2.bf16.msra.mxu0 %v4907
        %5149 = vmatprep.subr.bf16.mxu0 %v4904
        %5150 = vmatpush2.bf16.msra.mxu0 %v4903
        %5151 = vmatprep.subr.bf16.mxu0 %v4900
        %5152 = vmatpush2.bf16.msra.mxu0 %v4899
        %5153 = vmatprep.mubr.bf16.mxu0 %v4289
        %5154 = vmatmul.mubr.bf16.gmra.mxu0 %v4288
        %v5155 = vpop.f32.mrf.mxu0
        %v5156 = vadd.f32 %v5115, %v5155
        %v5157 = vpop.f32.mrf.mxu0
        %v5158 = vadd.f32 %v5117, %v5157
        %v5159 = vpop.f32.mrf.mxu0
        %v5160 = vpop.f32.mrf.mxu0
        %5161 = vdwg.mxu0
        %5162 = vmatprep.subr.bf16.mxu0 %v4834
        %5163 = vmatpush1.bf16.msra.mxu0 %v4833
        %5164 = vmatprep.subr.bf16.mxu0 %v4830
        %5165 = vmatpush1.bf16.msra.mxu0 %v4829
        %5166 = vmatprep.subr.bf16.mxu0 %v4826
        %5167 = vmatpush1.bf16.msra.mxu0 %v4825
        %5168 = vmatprep.subr.bf16.mxu0 %v4822
        %5169 = vmatpush1.bf16.msra.mxu0 %v4821
        %5170 = vmatprep.subr.bf16.mxu0 %v4818
        %5171 = vmatpush1.bf16.msra.mxu0 %v4817
        %5172 = vmatprep.subr.bf16.mxu0 %v4814
        %5173 = vmatpush1.bf16.msra.mxu0 %v4813
        %5174 = vmatprep.subr.bf16.mxu0 %v4810
        %5175 = vmatpush1.bf16.msra.mxu0 %v4809
        %5176 = vmatprep.subr.bf16.mxu0 %v4806
        %5177 = vmatpush1.bf16.msra.mxu0 %v4805
        %5178 = vmatprep.subr.bf16.mxu0 %v4866
        %5179 = vmatpush2.bf16.msra.mxu0 %v4865
        %5180 = vmatprep.subr.bf16.mxu0 %v4862
        %5181 = vmatpush2.bf16.msra.mxu0 %v4861
        %5182 = vmatprep.subr.bf16.mxu0 %v4858
        %5183 = vmatpush2.bf16.msra.mxu0 %v4857
        %5184 = vmatprep.subr.bf16.mxu0 %v4854
        %5185 = vmatpush2.bf16.msra.mxu0 %v4853
        %5186 = vmatprep.subr.bf16.mxu0 %v4850
        %5187 = vmatpush2.bf16.msra.mxu0 %v4849
        %5188 = vmatprep.subr.bf16.mxu0 %v4846
        %5189 = vmatpush2.bf16.msra.mxu0 %v4845
        %5190 = vmatprep.subr.bf16.mxu0 %v4842
        %5191 = vmatpush2.bf16.msra.mxu0 %v4841
        %5192 = vmatprep.subr.bf16.mxu0 %v4838
        %5193 = vmatpush2.bf16.msra.mxu0 %v4837
        %5194 = vmatprep.mubr.bf16.mxu0 %v4287
        %5195 = vmatmul.mubr.bf16.gmra.mxu0 %v4286
        %v5196 = vpop.f32.mrf.mxu0
        %v5197 = vadd.f32 %v5071, %v5196
        %v5198 = vpop.f32.mrf.mxu0
        %v5199 = vadd.f32 %v5075, %v5198
        %v5200 = vpop.f32.mrf.mxu0
        %v5201 = vpop.f32.mrf.mxu0
        %5202 = vdwg.mxu0
        %5203 = vmatprep.subr.bf16.mxu0 %v4898
        %5204 = vmatpush1.bf16.msra.mxu0 %v4897
        %5205 = vmatprep.subr.bf16.mxu0 %v4894
        %5206 = vmatpush1.bf16.msra.mxu0 %v4893
        %5207 = vmatprep.subr.bf16.mxu0 %v4890
        %5208 = vmatpush1.bf16.msra.mxu0 %v4889
        %5209 = vmatprep.subr.bf16.mxu0 %v4886
        %5210 = vmatpush1.bf16.msra.mxu0 %v4885
        %5211 = vmatprep.subr.bf16.mxu0 %v4882
        %5212 = vmatpush1.bf16.msra.mxu0 %v4881
        %5213 = vmatprep.subr.bf16.mxu0 %v4878
        %5214 = vmatpush1.bf16.msra.mxu0 %v4877
        %5215 = vmatprep.subr.bf16.mxu0 %v4874
        %5216 = vmatpush1.bf16.msra.mxu0 %v4873
        %5217 = vmatprep.subr.bf16.mxu0 %v4870
        %5218 = vmatpush1.bf16.msra.mxu0 %v4869
        %5219 = vmatprep.subr.bf16.mxu0 %v4930
        %5220 = vmatpush2.bf16.msra.mxu0 %v4929
        %5221 = vmatprep.subr.bf16.mxu0 %v4926
        %5222 = vmatpush2.bf16.msra.mxu0 %v4925
        %5223 = vmatprep.subr.bf16.mxu0 %v4922
        %5224 = vmatpush2.bf16.msra.mxu0 %v4921
        %5225 = vmatprep.subr.bf16.mxu0 %v4918
        %5226 = vmatpush2.bf16.msra.mxu0 %v4917
        %5227 = vmatprep.subr.bf16.mxu0 %v4914
        %5228 = vmatpush2.bf16.msra.mxu0 %v4913
        %5229 = vmatprep.subr.bf16.mxu0 %v4910
        %5230 = vmatpush2.bf16.msra.mxu0 %v4909
        %5231 = vmatprep.subr.bf16.mxu0 %v4906
        %5232 = vmatpush2.bf16.msra.mxu0 %v4905
        %5233 = vmatprep.subr.bf16.mxu0 %v4902
        %5234 = vmatpush2.bf16.msra.mxu0 %v4901
        %5235 = vmatprep.mubr.bf16.mxu0 %v4289
        %5236 = vmatmul.mubr.bf16.gmra.mxu0 %v4288
        %v5237 = vpop.f32.mrf.mxu0
        %v5238 = vadd.f32 %v5197, %v5237
        %v5239 = vpop.f32.mrf.mxu0
        %v5240 = vadd.f32 %v5199, %v5239
        %v5241 = vpop.f32.mrf.mxu0
        %v5242 = vpop.f32.mrf.mxu0
        %5243 = vdwg.mxu0
        %v5244 = vmax.f32 %v5156, 0.0
        %v5245 = vmax.f32 %v5158, 0.0
        %v5246 = vmax.f32 %v5238, 0.0
        %v5247 = vmax.f32 %v5240, 0.0
        %v5248 = vpack.c.bf16 %v5244, %v5244
        %v5249 = vpack.c.bf16 %v5245, %v5245
        %v5250 = vpack.c.bf16 %v5246, %v5246
        %v5251 = vpack.c.bf16 %v5247, %v5247
        %v5252 = vld [vmem:[%s19] sm:$0xf]
        %v5253 = vld [vmem:[%s19 + $0x4] sm:$0xf]
        %v5254 = vld [vmem:[%s19 + $0x8] sm:$0xf]
        %v5255 = vld [vmem:[%s19 + $0xc] sm:$0xf]
        %v5256 = vld [vmem:[%s19 + $0x10] sm:$0xf]
        %v5257 = vld [vmem:[%s19 + $0x14] sm:$0xf]
        %v5258 = vld [vmem:[%s19 + $0x18] sm:$0xf]
        %v5259 = vld [vmem:[%s19 + $0x1c] sm:$0xf]
        %v5260 = vld [vmem:[%s19 + $0x20] sm:$0xf]
        %v5261 = vld [vmem:[%s19 + $0x24] sm:$0xf]
        %v5262 = vld [vmem:[%s19 + $0x28] sm:$0xf]
        %v5263 = vld [vmem:[%s19 + $0x2c] sm:$0xf]
        %v5264 = vld [vmem:[%s19 + $0x30] sm:$0xf]
        %v5265 = vld [vmem:[%s19 + $0x34] sm:$0xf]
        %v5266 = vld [vmem:[%s19 + $0x38] sm:$0xf]
        %v5267 = vld [vmem:[%s19 + $0x3c] sm:$0xf]
        %v5268 = vld [vmem:[%s19 + $0x40] sm:$0xf]
        %v5269 = vld [vmem:[%s19 + $0x44] sm:$0xf]
        %v5270 = vld [vmem:[%s19 + $0x48] sm:$0xf]
        %v5271 = vld [vmem:[%s19 + $0x4c] sm:$0xf]
        %v5272 = vld [vmem:[%s19 + $0x50] sm:$0xf]
        %v5273 = vld [vmem:[%s19 + $0x54] sm:$0xf]
        %v5274 = vld [vmem:[%s19 + $0x58] sm:$0xf]
        %v5275 = vld [vmem:[%s19 + $0x5c] sm:$0xf]
        %v5276 = vld [vmem:[%s19 + $0x60] sm:$0xf]
        %v5277 = vld [vmem:[%s19 + $0x64] sm:$0xf]
        %v5278 = vld [vmem:[%s19 + $0x68] sm:$0xf]
        %v5279 = vld [vmem:[%s19 + $0x6c] sm:$0xf]
        %v5280 = vld [vmem:[%s19 + $0x70] sm:$0xf]
        %v5281 = vld [vmem:[%s19 + $0x74] sm:$0xf]
        %v5282 = vld [vmem:[%s19 + $0x78] sm:$0xf]
        %v5283 = vld [vmem:[%s19 + $0x7c] sm:$0xf]
        %v5284 = vld [vmem:[%s19 + $0x80] sm:$0xf]
        %v5285 = vld [vmem:[%s19 + $0x84] sm:$0xf]
        %v5286 = vld [vmem:[%s19 + $0x88] sm:$0xf]
        %v5287 = vld [vmem:[%s19 + $0x8c] sm:$0xf]
        %v5288 = vld [vmem:[%s19 + $0x90] sm:$0xf]
        %v5289 = vld [vmem:[%s19 + $0x94] sm:$0xf]
        %v5290 = vld [vmem:[%s19 + $0x98] sm:$0xf]
        %v5291 = vld [vmem:[%s19 + $0x9c] sm:$0xf]
        %v5292 = vld [vmem:[%s19 + $0xa0] sm:$0xf]
        %v5293 = vld [vmem:[%s19 + $0xa4] sm:$0xf]
        %v5294 = vld [vmem:[%s19 + $0xa8] sm:$0xf]
        %v5295 = vld [vmem:[%s19 + $0xac] sm:$0xf]
        %v5296 = vld [vmem:[%s19 + $0xb0] sm:$0xf]
        %v5297 = vld [vmem:[%s19 + $0xb4] sm:$0xf]
        %v5298 = vld [vmem:[%s19 + $0xb8] sm:$0xf]
        %v5299 = vld [vmem:[%s19 + $0xbc] sm:$0xf]
        %v5300 = vld [vmem:[%s19 + $0xc0] sm:$0xf]
        %v5301 = vld [vmem:[%s19 + $0xc4] sm:$0xf]
        %v5302 = vld [vmem:[%s19 + $0xc8] sm:$0xf]
        %v5303 = vld [vmem:[%s19 + $0xcc] sm:$0xf]
        %v5304 = vld [vmem:[%s19 + $0xd0] sm:$0xf]
        %v5305 = vld [vmem:[%s19 + $0xd4] sm:$0xf]
        %v5306 = vld [vmem:[%s19 + $0xd8] sm:$0xf]
        %v5307 = vld [vmem:[%s19 + $0xdc] sm:$0xf]
        %v5308 = vld [vmem:[%s19 + $0xe0] sm:$0xf]
        %v5309 = vld [vmem:[%s19 + $0xe4] sm:$0xf]
        %v5310 = vld [vmem:[%s19 + $0xe8] sm:$0xf]
        %v5311 = vld [vmem:[%s19 + $0xec] sm:$0xf]
        %v5312 = vld [vmem:[%s19 + $0xf0] sm:$0xf]
        %v5313 = vld [vmem:[%s19 + $0xf4] sm:$0xf]
        %v5314 = vld [vmem:[%s19 + $0xf8] sm:$0xf]
        %v5315 = vld [vmem:[%s19 + $0xfc] sm:$0xf]
        %v5316 = vld [vmem:[#allocation17] sm:$0x1]
        %v5381 = vunpack.c.l.b16 %v5252
        %v5382 = vunpack.c.l.b16 %v5253
        %v5383 = vunpack.c.l.b16 %v5254
        %v5384 = vunpack.c.l.b16 %v5255
        %v5385 = vunpack.c.l.b16 %v5256
        %v5386 = vunpack.c.l.b16 %v5257
        %v5387 = vunpack.c.l.b16 %v5258
        %v5388 = vunpack.c.l.b16 %v5259
        %v5389 = vunpack.c.l.b16 %v5260
        %v5390 = vunpack.c.l.b16 %v5261
        %v5391 = vunpack.c.l.b16 %v5262
        %v5392 = vunpack.c.l.b16 %v5263
        %v5393 = vunpack.c.l.b16 %v5264
        %v5394 = vunpack.c.l.b16 %v5265
        %v5395 = vunpack.c.l.b16 %v5266
        %v5396 = vunpack.c.l.b16 %v5267
        %v5397 = vunpack.c.l.b16 %v5268
        %v5398 = vunpack.c.l.b16 %v5269
        %v5399 = vunpack.c.l.b16 %v5270
        %v5400 = vunpack.c.l.b16 %v5271
        %v5401 = vunpack.c.l.b16 %v5272
        %v5402 = vunpack.c.l.b16 %v5273
        %v5403 = vunpack.c.l.b16 %v5274
        %v5404 = vunpack.c.l.b16 %v5275
        %v5405 = vunpack.c.l.b16 %v5276
        %v5406 = vunpack.c.l.b16 %v5277
        %v5407 = vunpack.c.l.b16 %v5278
        %v5408 = vunpack.c.l.b16 %v5279
        %v5409 = vunpack.c.l.b16 %v5280
        %v5410 = vunpack.c.l.b16 %v5281
        %v5411 = vunpack.c.l.b16 %v5282
        %v5412 = vunpack.c.l.b16 %v5283
        %v5413 = vunpack.c.l.b16 %v5284
        %v5414 = vunpack.c.l.b16 %v5285
        %v5415 = vunpack.c.l.b16 %v5286
        %v5416 = vunpack.c.l.b16 %v5287
        %v5417 = vunpack.c.l.b16 %v5288
        %v5418 = vunpack.c.l.b16 %v5289
        %v5419 = vunpack.c.l.b16 %v5290
        %v5420 = vunpack.c.l.b16 %v5291
        %v5421 = vunpack.c.l.b16 %v5292
        %v5422 = vunpack.c.l.b16 %v5293
        %v5423 = vunpack.c.l.b16 %v5294
        %v5424 = vunpack.c.l.b16 %v5295
        %v5425 = vunpack.c.l.b16 %v5296
        %v5426 = vunpack.c.l.b16 %v5297
        %v5427 = vunpack.c.l.b16 %v5298
        %v5428 = vunpack.c.l.b16 %v5299
        %v5429 = vunpack.c.l.b16 %v5300
        %v5430 = vunpack.c.l.b16 %v5301
        %v5431 = vunpack.c.l.b16 %v5302
        %v5432 = vunpack.c.l.b16 %v5303
        %v5433 = vunpack.c.l.b16 %v5304
        %v5434 = vunpack.c.l.b16 %v5305
        %v5435 = vunpack.c.l.b16 %v5306
        %v5436 = vunpack.c.l.b16 %v5307
        %v5437 = vunpack.c.l.b16 %v5308
        %v5438 = vunpack.c.l.b16 %v5309
        %v5439 = vunpack.c.l.b16 %v5310
        %v5440 = vunpack.c.l.b16 %v5311
        %v5441 = vunpack.c.l.b16 %v5312
        %v5442 = vunpack.c.l.b16 %v5313
        %v5443 = vunpack.c.l.b16 %v5314
        %v5444 = vunpack.c.l.b16 %v5315
        %v5445 = vpack.c.b16 %v5382, %v5381
        %v5446 = vpack.c.b16 %v5384, %v5383
        %v5447 = vpack.c.b16 %v5386, %v5385
        %v5448 = vpack.c.b16 %v5388, %v5387
        %v5449 = vpack.c.b16 %v5390, %v5389
        %v5450 = vpack.c.b16 %v5392, %v5391
        %v5451 = vpack.c.b16 %v5394, %v5393
        %v5452 = vpack.c.b16 %v5396, %v5395
        %v5453 = vpack.c.b16 %v5398, %v5397
        %v5454 = vpack.c.b16 %v5400, %v5399
        %v5455 = vpack.c.b16 %v5402, %v5401
        %v5456 = vpack.c.b16 %v5404, %v5403
        %v5457 = vpack.c.b16 %v5406, %v5405
        %v5458 = vpack.c.b16 %v5408, %v5407
        %v5459 = vpack.c.b16 %v5410, %v5409
        %v5460 = vpack.c.b16 %v5412, %v5411
        %v5461 = vpack.c.b16 %v5414, %v5413
        %v5462 = vpack.c.b16 %v5416, %v5415
        %v5463 = vpack.c.b16 %v5418, %v5417
        %v5464 = vpack.c.b16 %v5420, %v5419
        %v5465 = vpack.c.b16 %v5422, %v5421
        %v5466 = vpack.c.b16 %v5424, %v5423
        %v5467 = vpack.c.b16 %v5426, %v5425
        %v5468 = vpack.c.b16 %v5428, %v5427
        %v5469 = vpack.c.b16 %v5430, %v5429
        %v5470 = vpack.c.b16 %v5432, %v5431
        %v5471 = vpack.c.b16 %v5434, %v5433
        %v5472 = vpack.c.b16 %v5436, %v5435
        %v5473 = vpack.c.b16 %v5438, %v5437
        %v5474 = vpack.c.b16 %v5440, %v5439
        %v5475 = vpack.c.b16 %v5442, %v5441
        %v5476 = vpack.c.b16 %v5444, %v5443
        %5509 = vmatprep.subr.bf16.mxu0 0
        %5510 = vmatpush1.bf16.msra.mxu0 %v5452
        %5511 = vmatprep.subr.bf16.mxu0 0
        %5512 = vmatpush1.bf16.msra.mxu0 %v5451
        %5513 = vmatprep.subr.bf16.mxu0 0
        %5514 = vmatpush1.bf16.msra.mxu0 %v5450
        %5515 = vmatprep.subr.bf16.mxu0 0
        %5516 = vmatpush1.bf16.msra.mxu0 %v5449
        %5517 = vmatprep.subr.bf16.mxu0 0
        %5518 = vmatpush1.bf16.msra.mxu0 %v5448
        %5519 = vmatprep.subr.bf16.mxu0 0
        %5520 = vmatpush1.bf16.msra.mxu0 %v5447
        %5521 = vmatprep.subr.bf16.mxu0 0
        %5522 = vmatpush1.bf16.msra.mxu0 %v5446
        %5523 = vmatprep.subr.bf16.mxu0 0
        %5524 = vmatpush1.bf16.msra.mxu0 %v5445
        %5525 = vmatprep.subr.bf16.mxu0 0
        %5526 = vmatpush2.bf16.msra.mxu0 %v5460
        %5527 = vmatprep.subr.bf16.mxu0 0
        %5528 = vmatpush2.bf16.msra.mxu0 %v5459
        %5529 = vmatprep.subr.bf16.mxu0 0
        %5530 = vmatpush2.bf16.msra.mxu0 %v5458
        %5531 = vmatprep.subr.bf16.mxu0 0
        %5532 = vmatpush2.bf16.msra.mxu0 %v5457
        %5533 = vmatprep.subr.bf16.mxu0 0
        %5534 = vmatpush2.bf16.msra.mxu0 %v5456
        %5535 = vmatprep.subr.bf16.mxu0 0
        %5536 = vmatpush2.bf16.msra.mxu0 %v5455
        %5537 = vmatprep.subr.bf16.mxu0 0
        %5538 = vmatpush2.bf16.msra.mxu0 %v5454
        %5539 = vmatprep.subr.bf16.mxu0 0
        %5540 = vmatpush2.bf16.msra.mxu0 %v5453
        %5541 = vmatprep.mubr.bf16.mxu0 %v5249
        %5542 = vmatmul.mubr.bf16.gmra.mxu0 %v5248
        %v5543 = vpop.f32.mrf.mxu0
        %v5544 = vadd.f32 %v5316, %v5543
        %v5545 = vpop.f32.mrf.mxu0
        %v5546 = vpop.f32.mrf.mxu0
        %v5547 = vpop.f32.mrf.mxu0
        %5548 = vdwg.mxu0
        %5549 = vmatprep.subr.bf16.mxu0 0
        %5550 = vmatpush1.bf16.msra.mxu0 %v5468
        %5551 = vmatprep.subr.bf16.mxu0 0
        %5552 = vmatpush1.bf16.msra.mxu0 %v5467
        %5553 = vmatprep.subr.bf16.mxu0 0
        %5554 = vmatpush1.bf16.msra.mxu0 %v5466
        %5555 = vmatprep.subr.bf16.mxu0 0
        %5556 = vmatpush1.bf16.msra.mxu0 %v5465
        %5557 = vmatprep.subr.bf16.mxu0 0
        %5558 = vmatpush1.bf16.msra.mxu0 %v5464
        %5559 = vmatprep.subr.bf16.mxu0 0
        %5560 = vmatpush1.bf16.msra.mxu0 %v5463
        %5561 = vmatprep.subr.bf16.mxu0 0
        %5562 = vmatpush1.bf16.msra.mxu0 %v5462
        %5563 = vmatprep.subr.bf16.mxu0 0
        %5564 = vmatpush1.bf16.msra.mxu0 %v5461
        %5565 = vmatprep.subr.bf16.mxu0 0
        %5566 = vmatpush2.bf16.msra.mxu0 %v5476
        %5567 = vmatprep.subr.bf16.mxu0 0
        %5568 = vmatpush2.bf16.msra.mxu0 %v5475
        %5569 = vmatprep.subr.bf16.mxu0 0
        %5570 = vmatpush2.bf16.msra.mxu0 %v5474
        %5571 = vmatprep.subr.bf16.mxu0 0
        %5572 = vmatpush2.bf16.msra.mxu0 %v5473
        %5573 = vmatprep.subr.bf16.mxu0 0
        %5574 = vmatpush2.bf16.msra.mxu0 %v5472
        %5575 = vmatprep.subr.bf16.mxu0 0
        %5576 = vmatpush2.bf16.msra.mxu0 %v5471
        %5577 = vmatprep.subr.bf16.mxu0 0
        %5578 = vmatpush2.bf16.msra.mxu0 %v5470
        %5579 = vmatprep.subr.bf16.mxu0 0
        %5580 = vmatpush2.bf16.msra.mxu0 %v5469
        %5581 = vmatprep.mubr.bf16.mxu0 %v5251
        %5582 = vmatmul.mubr.bf16.gmra.mxu0 %v5250
        %v5583 = vpop.f32.mrf.mxu0
        %v5584 = vadd.f32 %v5544, %v5583
        %v5585 = vpop.f32.mrf.mxu0
        %v5586 = vpop.f32.mrf.mxu0
        %v5587 = vpop.f32.mrf.mxu0
        %5588 = vdwg.mxu0
        %5589 = vst [vmem:[%s769] sm:$0x1] %v5584
        %s5590 = sand.u32 %s496, 1
        %s5591 = scalar_lea.sflag [#allocation7], %s5590
        %s5592 = sand.u32 %s496, 1
        %s5593 = scalar_lea.vmem [#allocation19], %s5592
        // Predicated region
        $region137: #{vgg_forward.1} parent=103 // pred_check
          %p5594 = pneg %p506
        $region138: #{vgg_forward.1} parent=103 // pred_check_branch
          %5596 = sbr.rel (%p5594) target = $region140
        $region139: #{vgg_forward.1} parent=103 // pred_region
          %s5598 = ssub.s32 16, 16
          %5599 = vsyncadd %s5591, %s5598
          %s5600 = smul.addr %s42, 16
          %s5601 = scalar_lea.hbm %s21, %s5600
          %s5603 = sshll.u32 %s5593, 4
          %s5604 = int_to_ptr.vmem [resolvable:$true] %s5603
          %5606 = dma.vmem_to_hbm [thread:$0]  %s5604, 16, %s5601, %s5591
        $region140: #{vgg_forward.1} parent=103 // pred_fallthru
          _
      $region104: #{vgg_forward.1} parent=5 // pred_fallthru
        _
      %p5607 = scmp.le.s32.totalorder 2, %s37
      // Predicated region
      $region141: #{vgg_forward.1} parent=5 // pred_check
        %p5608 = pneg %p5607
      $region142: #{vgg_forward.1} parent=5 // pred_check_branch
        %5610 = sbr.rel (%p5608) target = $region144
      $region143: #{vgg_forward.1} parent=5 // pred_region
        %s5611 = ssub.s32 %s37, 2
        // Predicated region
        $region145: #{vgg_forward.1} parent=143 // pred_check
          %p5612 = pneg %p512
        $region146: #{vgg_forward.1} parent=143 // pred_check_branch
          %5614 = sbr.rel (%p5612) target = $region148
        $region147: #{vgg_forward.1} parent=143 // pred_region
          %s5615 = sand.u32 %s497, 1
          %s5616 = scalar_lea.sflag [#allocation7], %s5615
          %s5617 = sand.u32 %s497, 1
          %s5618 = scalar_lea.vmem [#allocation19], %s5617
          %5619 = dma.done %s5616, 16
        $region148: #{vgg_forward.1} parent=143 // pred_fallthru
          _
      $region144: #{vgg_forward.1} parent=5 // pred_fallthru
        _
    $region6: #{vgg_forward.1} parent=1 // loop_footer
      %s41 = sadd.s32 1, %s37
    $region7: #{vgg_forward.1} parent=1 // loop_footer_branch
      %36 = sbr.rel target = $region3
    $region8: #{vgg_forward.1} parent=1 // loop_exit
      _
    %5620 = vsyncpa [#allocation6], 1
    %s5621 = scalar_lea.sflag [#allocation6], 1
    %5622 = vsyncpa %s5621, 1
    %5623 = vsyncpa [#allocation9], 1
    %5624 = vsyncpa [#allocation12], 1
    %5625 = vsyncpa [#allocation15], 1
    %5626 = vsyncpa [#allocation18], 1
    %5627 = vsyncpa [#allocation7], 1
    %s5628 = scalar_lea.sflag [#allocation7], 1
    %5629 = vsyncpa %s5628, 1

</llo_original>
